<compile_context>
chip_gen: v7x
topology: tpu7x:2x2x1
jax: 0.10.0
libtpu: 0.0.40
codegen_flags: <defaults>
</compile_context>

<pallas_src>
import functools

import numpy as np
import jax
import jax.numpy as jnp
from jax import lax
from jax.experimental import pallas as pl
from jax.experimental.pallas import tpu as pltpu

# ----------------------------------------------------------------------------
# Scaled-down config (same construction algorithm as the PyTorch module)
# ----------------------------------------------------------------------------
GT_MAX_LGT = 40
GT_MIN_LGT = 6
N_CLASSES = GT_MAX_LGT - GT_MIN_LGT + 1   # 35
PROT_TGT_LEN = 64                         # original: 20000
EMB_DIM = 32                              # original: 500
LDIM = 32                                 # original: 500
LMETADIM = 16                             # original: 100
CL_DIM = 16                               # original: 100
BATCH = 2

N_FC_HIDDEN = 8
N_MASS_HIDDEN = 4
N_COMB_HIDDEN = 4
HEAD_PAD = 128                            # lane-dense stride per head in output slab


def build_conv_plan(prot_len, emb_dim, n_classes, kernel=12, pool=2):
    """Replicates the conv/pool sizing loop of the PyTorch __init__."""
    plan, converter = [], None
    curr = float(prot_len)
    in_c = 1
    while curr != 1:
        next_kernel = max(1, min(kernel, curr - 2))
        next_pool = min(curr - next_kernel + 1, pool)
        while (curr - next_kernel + 1) % next_pool != 0:
            if next_kernel == 1:
                next_pool = curr - next_kernel + 1
                break
            next_kernel -= 1
            next_pool = min(curr - next_kernel + 1, pool)
        new_curr = (curr - next_kernel + 1) / next_pool
        next_pool = int(next_pool)
        next_kernel = int(next_kernel)
        out_c = emb_dim if new_curr > 1 else n_classes
        plan.append(dict(in_c=in_c, out_c=out_c, k=next_kernel, pool=next_pool))
        if new_curr == 1:
            # converter: Conv(in_c -> emb_dim, k), AvgPool(pool), ReLU
            converter = dict(in_c=in_c, out_c=emb_dim, k=next_kernel, pool=next_pool)
        in_c = out_c
        curr = new_curr
    return plan, converter


CONV_PLAN, CONV_CONVERTER = build_conv_plan(PROT_TGT_LEN, EMB_DIM, N_CLASSES)


# ----------------------------------------------------------------------------
# The single fused Pallas kernel
# ----------------------------------------------------------------------------
def _relu(x):
    return jnp.maximum(x, 0.0)


def _log_softmax(x):
    m = jnp.max(x, axis=-1, keepdims=True)
    z = x - m
    return z - jnp.log(jnp.sum(jnp.exp(z), axis=-1, keepdims=True))


def fused_forward_kernel(*refs, conv_plan, conv_converter):
    out_ref = refs[-1]
    it = iter(refs[:-1])

    def take_pairs(n):
        return [(next(it), next(it)) for _ in range(n)]

    spec_ref = next(it)
    mass_ref = next(it)
    fc_hidden = take_pairs(N_FC_HIDDEN)
    fc_out = take_pairs(1)[0]
    conv_wb = take_pairs(len(conv_plan))
    converter_wb = take_pairs(1)[0]
    mass_hidden = take_pairs(N_MASS_HIDDEN)
    mass_out = take_pairs(1)[0]
    comb_hidden = take_pairs(N_COMB_HIDDEN)
    comb_out = take_pairs(1)[0]

    spec = spec_ref[...]          # (B, PROT_TGT_LEN)
    massv = mass_ref[...]         # (B, 1)

    def linear(x, wb):
        w_ref, b_ref = wb         # w: (Din, Dout), b: (1, Dout)
        return lax.dot_general(x, w_ref[...], (((1,), (0,)), ((), ())),
                               preferred_element_type=jnp.float32) + b_ref[...]

    def conv_pool(x, wb, k, pool, relu_before_pool, relu_after_pool):
        # x: (B, L) for Cin == 1, else (B, L, Cin) channels-last.
        # w: (K*Cin, Cout) pre-transposed (tap-major, then channel); b: (1, Cout)
        w_ref, b_ref = wb
        if x.ndim == 2:
            b_, l_ = x.shape
            cin = 1
            lout = l_ - k + 1
            cols = [x[:, j:j + lout] for j in range(k)]
            patches = jnp.stack(cols, axis=-1)                 # (B, Lout, K)
        else:
            b_, l_, cin = x.shape
            lout = l_ - k + 1
            cols = [x[:, j:j + lout, :] for j in range(k)]
            patches = jnp.concatenate(cols, axis=-1)           # (B, Lout, K*Cin)
        patches = patches.reshape(b_ * lout, k * cin)
        y = lax.dot_general(patches, w_ref[...], (((1,), (0,)), ((), ())),
                            preferred_element_type=jnp.float32) + b_ref[...]
        if relu_before_pool:                                   # Conv, ReLU, AvgPool
            y = _relu(y)
        cout = y.shape[-1]
        lp = lout // pool
        y3 = y.reshape(b_ * lp, pool, cout)                    # VPU pooling
        pooled = y3[:, 0, :]
        for q in range(1, pool):
            pooled = pooled + y3[:, q, :]
        pooled = pooled * (1.0 / pool)
        if relu_after_pool:                                    # converter: ReLU last
            pooled = _relu(pooled)
        return pooled.reshape(b_, lp, cout)

    def mean_over_length(x):
        # x: (B, Lp, C) channels-last  ==  .mean(dim=-1) on NCW in the reference
        lp = x.shape[1]
        acc = x[:, 0, :]
        for q in range(1, lp):
            acc = acc + x[:, q, :]
        return acc * (1.0 / lp)

    # ---- fully-connected branch ----
    h = spec
    for wb in fc_hidden:
        h = _relu(linear(h, wb))
    pre_fc = h
    fc_head = _log_softmax(linear(pre_fc, fc_out))

    # ---- conv tower (convs[:-3] -> pre_conv; final Conv + AvgPool + out_nl) ----
    x = spec                                   # first conv has Cin == 1
    for stage, wb in zip(conv_plan[:-1], conv_wb[:-1]):
        x = conv_pool(x, wb, stage["k"], stage["pool"],
                      relu_before_pool=True, relu_after_pool=False)
    pre_conv = x                               # (B, L_pre, EMB_DIM)

    last = conv_plan[-1]
    y = conv_pool(pre_conv, conv_wb[-1], last["k"], last["pool"],
                  relu_before_pool=False, relu_after_pool=False)
    conv_head = _log_softmax(mean_over_length(y))

    # ---- mass branch ----
    m = massv
    for wb in mass_hidden:
        m = _relu(linear(m, wb))
    pre_mass = m
    mass_head = _log_softmax(linear(pre_mass, mass_out))

    # ---- converter (Conv -> AvgPool -> ReLU) + combiner ----
    cc = conv_pool(pre_conv, converter_wb,
                   conv_converter["k"], conv_converter["pool"],
                   relu_before_pool=False, relu_after_pool=True)
    converted = mean_over_length(cc)

    comb = jnp.concatenate([pre_fc, converted, pre_mass], axis=1)
    for wb in comb_hidden:
        comb = _relu(linear(comb, wb))
    pred_head = _log_softmax(linear(comb, comb_out))

    # ---- single lane-dense output slab: each 35-wide head padded to 128 ----
    bsz = spec.shape[0]
    pad = jnp.zeros((bsz, HEAD_PAD - N_CLASSES), jnp.float32)
    out_ref[...] = jnp.concatenate(
        [fc_head, pad, conv_head, pad, mass_head, pad, pred_head, pad], axis=-1)


# ----------------------------------------------------------------------------
# Parameter init (deterministic; weights stored in kernel-friendly layouts)
# ----------------------------------------------------------------------------
def init_linear(key, fan_in, fan_out):
    kw, kb = jax.random.split(key)
    bound = 1.0 / np.sqrt(fan_in)
    w = jax.random.uniform(kw, (fan_in, fan_out), jnp.float32, -bound, bound)
    b = jax.random.uniform(kb, (1, fan_out), jnp.float32, -bound, bound)
    return w, b


def init_conv(key, in_c, out_c, k):
    kw, kb = jax.random.split(key)
    bound = 1.0 / np.sqrt(in_c * k)
    w = jax.random.uniform(kw, (out_c, in_c, k), jnp.float32, -bound, bound)
    # (Cout, Cin, K) -> (K*Cin, Cout), row index = tap*Cin + channel (im2col order)
    wt = jnp.transpose(w, (2, 1, 0)).reshape(k * in_c, out_c)
    b = jax.random.uniform(kb, (1, out_c), jnp.float32, -bound, bound)
    return wt, b


def init_params(key):
    keys = iter(jax.random.split(key, 64))
    params = {}
    fc_dims = [PROT_TGT_LEN] + [LDIM] * N_FC_HIDDEN
    params["fc_hidden"] = [init_linear(next(keys), fc_dims[i], fc_dims[i + 1])
                           for i in range(N_FC_HIDDEN)]
    params["fc_out"] = init_linear(next(keys), LDIM, N_CLASSES)
    params["conv"] = [init_conv(next(keys), s["in_c"], s["out_c"], s["k"])
                      for s in CONV_PLAN]
    params["converter"] = init_conv(next(keys), CONV_CONVERTER["in_c"],
                                    CONV_CONVERTER["out_c"], CONV_CONVERTER["k"])
    mass_dims = [1] + [LMETADIM] * N_MASS_HIDDEN
    params["mass_hidden"] = [init_linear(next(keys), mass_dims[i], mass_dims[i + 1])
                             for i in range(N_MASS_HIDDEN)]
    params["mass_out"] = init_linear(next(keys), LMETADIM, N_CLASSES)
    comb_dims = [LMETADIM + LDIM + EMB_DIM] + [CL_DIM] * N_COMB_HIDDEN
    params["comb_hidden"] = [init_linear(next(keys), comb_dims[i], comb_dims[i + 1])
                             for i in range(N_COMB_HIDDEN)]
    params["comb_out"] = init_linear(next(keys), CL_DIM, N_CLASSES)
    return params


def _flatten_params(params):
    flat = []
    for w, b in params["fc_hidden"]:
        flat += [w, b]
    flat += list(params["fc_out"])
    for w, b in params["conv"]:
        flat += [w, b]
    flat += list(params["converter"])
    for w, b in params["mass_hidden"]:
        flat += [w, b]
    flat += list(params["mass_out"])
    for w, b in params["comb_hidden"]:
        flat += [w, b]
    flat += list(params["comb_out"])
    return flat


# ----------------------------------------------------------------------------
# Forward pass: one pallas_call, whole arrays as single VMEM blocks (no grid)
# ----------------------------------------------------------------------------
_VMEM_SPEC = pl.BlockSpec(memory_space=pltpu.MemorySpace.VMEM)


def model_forward(params, spec, mass):
    bsz = spec.shape[0]
    flat = [spec, mass] + _flatten_params(params)
    slab = pl.pallas_call(
        functools.partial(fused_forward_kernel,
                          conv_plan=CONV_PLAN, conv_converter=CONV_CONVERTER),
        out_shape=jax.ShapeDtypeStruct((bsz, 4 * HEAD_PAD), jnp.float32),
        in_specs=[_VMEM_SPEC] * len(flat),
        out_specs=_VMEM_SPEC,
    )(*flat)
    heads = ("fc", "conv", "mass", "pred")
    return {name: slab[:, i * HEAD_PAD: i * HEAD_PAD + N_CLASSES]
            for i, name in enumerate(heads)}


# ----------------------------------------------------------------------------
# Pure-JAX reference (mirrors the PyTorch forward) for correctness checking
# ----------------------------------------------------------------------------
def reference_forward(params, spec, mass):
    def linear(x, wb):
        w, b = wb
        return x @ w + b

    def conv_pool(x_ncw, wb, k, pool, relu_before, relu_after):
        wt, b = wb
        cout = wt.shape[1]
        cin = wt.shape[0] // k
        w = jnp.transpose(wt.reshape(k, cin, cout), (2, 1, 0))   # (Cout, Cin, K)
        y = lax.conv_general_dilated(x_ncw, w, (1,), "VALID",
                                     dimension_numbers=("NCH", "OIH", "NCH"))
        y = y + b.reshape(1, cout, 1)
        if relu_before:
            y = jax.nn.relu(y)
        bb, cc, ll = y.shape
        y = y.reshape(bb, cc, ll // pool, pool).mean(-1)
        if relu_after:
            y = jax.nn.relu(y)
        return y

    h = spec
    for wb in params["fc_hidden"]:
        h = jax.nn.relu(linear(h, wb))
    pre_fc = h
    fc = jax.nn.log_softmax(linear(pre_fc, params["fc_out"]), axis=-1)

    x = spec.reshape(spec.shape[0], 1, -1)
    for stage, wb in zip(CONV_PLAN[:-1], params["conv"][:-1]):
        x = conv_pool(x, wb, stage["k"], stage["pool"], True, False)
    pre_conv = x
    last = CONV_PLAN[-1]
    y = conv_pool(pre_conv, params["conv"][-1], last["k"], last["pool"], False, False)
    conv_head = jax.nn.log_softmax(y.mean(-1), axis=-1)

    m = mass
    for wb in params["mass_hidden"]:
        m = jax.nn.relu(linear(m, wb))
    pre_mass = m
    mass_head = jax.nn.log_softmax(linear(pre_mass, params["mass_out"]), axis=-1)

    cc = conv_pool(pre_conv, params["converter"],
                   CONV_CONVERTER["k"], CONV_CONVERTER["pool"], False, True)
    converted = cc.mean(-1)
    comb = jnp.concatenate([pre_fc, converted, pre_mass], axis=1)
    for wb in params["comb_hidden"]:
        comb = jax.nn.relu(linear(comb, wb))
    pred = jax.nn.log_softmax(linear(comb, params["comb_out"]), axis=-1)
    return {"fc": fc, "conv": conv_head, "mass": mass_head, "pred": pred}


# ----------------------------------------------------------------------------
if __name__ == "__main__":
    key = jax.random.PRNGKey(0)
    kp, ks, km = jax.random.split(key, 3)
    params = init_params(kp)
    spec = jax.random.normal(ks, (BATCH, PROT_TGT_LEN), jnp.float32)
    mass = jax.random.uniform(km, (BATCH, 1), jnp.float32)

    fwd = jax.jit(model_forward)
    out = fwd(params, spec, mass)
    jax.block_until_ready(out)

    for name in ("fc", "conv", "mass", "pred"):
        assert out[name].shape == (BATCH, N_CLASSES)
        # log-softmax rows should sum to ~1 in probability space
        assert np.allclose(np.exp(np.asarray(out[name])).sum(-1), 1.0, atol=1e-4)

    # Cross-check against the pure-JAX reference implementation
    ref = reference_forward(params, spec, mass)
    for name in ("fc", "conv", "mass", "pred"):
        assert np.allclose(np.asarray(out[name]), np.asarray(ref[name]),
                           atol=1e-4, rtol=1e-4), f"mismatch in head {name}"

    print("KERNEL_OK")
</pallas_src>

<mosaic_0001>
module attributes {stable_mosaic.version = 11 : i64} {
  func.func @fused_forward_kernel(%arg0: memref<2x64xf32, #tpu.memory_space<vmem>>, %arg1: memref<2x1xf32, #tpu.memory_space<vmem>>, %arg2: memref<64x32xf32, #tpu.memory_space<vmem>>, %arg3: memref<1x32xf32, #tpu.memory_space<vmem>>, %arg4: memref<32x32xf32, #tpu.memory_space<vmem>>, %arg5: memref<1x32xf32, #tpu.memory_space<vmem>>, %arg6: memref<32x32xf32, #tpu.memory_space<vmem>>, %arg7: memref<1x32xf32, #tpu.memory_space<vmem>>, %arg8: memref<32x32xf32, #tpu.memory_space<vmem>>, %arg9: memref<1x32xf32, #tpu.memory_space<vmem>>, %arg10: memref<32x32xf32, #tpu.memory_space<vmem>>, %arg11: memref<1x32xf32, #tpu.memory_space<vmem>>, %arg12: memref<32x32xf32, #tpu.memory_space<vmem>>, %arg13: memref<1x32xf32, #tpu.memory_space<vmem>>, %arg14: memref<32x32xf32, #tpu.memory_space<vmem>>, %arg15: memref<1x32xf32, #tpu.memory_space<vmem>>, %arg16: memref<32x32xf32, #tpu.memory_space<vmem>>, %arg17: memref<1x32xf32, #tpu.memory_space<vmem>>, %arg18: memref<32x35xf32, #tpu.memory_space<vmem>>, %arg19: memref<1x35xf32, #tpu.memory_space<vmem>>, %arg20: memref<11x32xf32, #tpu.memory_space<vmem>>, %arg21: memref<1x32xf32, #tpu.memory_space<vmem>>, %arg22: memref<384x32xf32, #tpu.memory_space<vmem>>, %arg23: memref<1x32xf32, #tpu.memory_space<vmem>>, %arg24: memref<160x32xf32, #tpu.memory_space<vmem>>, %arg25: memref<1x32xf32, #tpu.memory_space<vmem>>, %arg26: memref<32x35xf32, #tpu.memory_space<vmem>>, %arg27: memref<1x35xf32, #tpu.memory_space<vmem>>, %arg28: memref<32x32xf32, #tpu.memory_space<vmem>>, %arg29: memref<1x32xf32, #tpu.memory_space<vmem>>, %arg30: memref<1x16xf32, #tpu.memory_space<vmem>>, %arg31: memref<1x16xf32, #tpu.memory_space<vmem>>, %arg32: memref<16x16xf32, #tpu.memory_space<vmem>>, %arg33: memref<1x16xf32, #tpu.memory_space<vmem>>, %arg34: memref<16x16xf32, #tpu.memory_space<vmem>>, %arg35: memref<1x16xf32, #tpu.memory_space<vmem>>, %arg36: memref<16x16xf32, #tpu.memory_space<vmem>>, %arg37: memref<1x16xf32, #tpu.memory_space<vmem>>, %arg38: memref<16x35xf32, #tpu.memory_space<vmem>>, %arg39: memref<1x35xf32, #tpu.memory_space<vmem>>, %arg40: memref<80x16xf32, #tpu.memory_space<vmem>>, %arg41: memref<1x16xf32, #tpu.memory_space<vmem>>, %arg42: memref<16x16xf32, #tpu.memory_space<vmem>>, %arg43: memref<1x16xf32, #tpu.memory_space<vmem>>, %arg44: memref<16x16xf32, #tpu.memory_space<vmem>>, %arg45: memref<1x16xf32, #tpu.memory_space<vmem>>, %arg46: memref<16x16xf32, #tpu.memory_space<vmem>>, %arg47: memref<1x16xf32, #tpu.memory_space<vmem>>, %arg48: memref<16x35xf32, #tpu.memory_space<vmem>>, %arg49: memref<1x35xf32, #tpu.memory_space<vmem>>, %arg50: memref<2x512xf32, #tpu.memory_space<vmem>>) attributes {dimension_semantics = [], scalar_prefetch = 0 : i64, scratch_operands = 0 : i64, tpu.core_type = #tpu.core_type<tc>} {
    %c0 = arith.constant 0 : index
    %c0_0 = arith.constant 0 : index
    %0 = vector.load %arg0[%c0, %c0_0] : memref<2x64xf32, #tpu.memory_space<vmem>>, vector<2x64xf32>
    %c0_1 = arith.constant 0 : index
    %c0_2 = arith.constant 0 : index
    %1 = vector.load %arg1[%c0_1, %c0_2] : memref<2x1xf32, #tpu.memory_space<vmem>>, vector<2x1xf32>
    %c0_3 = arith.constant 0 : index
    %c0_4 = arith.constant 0 : index
    %2 = vector.load %arg2[%c0_3, %c0_4] : memref<64x32xf32, #tpu.memory_space<vmem>>, vector<64x32xf32>
    %cst = arith.constant dense<0.000000e+00> : vector<2x32xf32>
    %3 = tpu.matmul %0, %2, %cst {dimension_numbers = #tpu.dot_dimension_numbers<[1], [0], [0], [1], [0, 0, 1, 1], [], []>} : vector<2x64xf32>, vector<64x32xf32>, vector<2x32xf32> -> vector<2x32xf32>
    %c0_5 = arith.constant 0 : index
    %c0_6 = arith.constant 0 : index
    %4 = vector.load %arg3[%c0_5, %c0_6] : memref<1x32xf32, #tpu.memory_space<vmem>>, vector<1x32xf32>
    %5 = vector.broadcast %4 : vector<1x32xf32> to vector<2x32xf32>
    %6 = arith.addf %3, %5 : vector<2x32xf32>
    %cst_7 = arith.constant 0.000000e+00 : f32
    %7 = vector.broadcast %cst_7 : f32 to vector<2x32xf32>
    %8 = arith.maximumf %6, %7 : vector<2x32xf32>
    %c0_8 = arith.constant 0 : index
    %c0_9 = arith.constant 0 : index
    %9 = vector.load %arg4[%c0_8, %c0_9] : memref<32x32xf32, #tpu.memory_space<vmem>>, vector<32x32xf32>
    %cst_10 = arith.constant dense<0.000000e+00> : vector<2x32xf32>
    %10 = tpu.matmul %8, %9, %cst_10 {dimension_numbers = #tpu.dot_dimension_numbers<[1], [0], [0], [1], [0, 0, 1, 1], [], []>} : vector<2x32xf32>, vector<32x32xf32>, vector<2x32xf32> -> vector<2x32xf32>
    %c0_11 = arith.constant 0 : index
    %c0_12 = arith.constant 0 : index
    %11 = vector.load %arg5[%c0_11, %c0_12] : memref<1x32xf32, #tpu.memory_space<vmem>>, vector<1x32xf32>
    %12 = vector.broadcast %11 : vector<1x32xf32> to vector<2x32xf32>
    %13 = arith.addf %10, %12 : vector<2x32xf32>
    %cst_13 = arith.constant 0.000000e+00 : f32
    %14 = vector.broadcast %cst_13 : f32 to vector<2x32xf32>
    %15 = arith.maximumf %13, %14 : vector<2x32xf32>
    %c0_14 = arith.constant 0 : index
    %c0_15 = arith.constant 0 : index
    %16 = vector.load %arg6[%c0_14, %c0_15] : memref<32x32xf32, #tpu.memory_space<vmem>>, vector<32x32xf32>
    %cst_16 = arith.constant dense<0.000000e+00> : vector<2x32xf32>
    %17 = tpu.matmul %15, %16, %cst_16 {dimension_numbers = #tpu.dot_dimension_numbers<[1], [0], [0], [1], [0, 0, 1, 1], [], []>} : vector<2x32xf32>, vector<32x32xf32>, vector<2x32xf32> -> vector<2x32xf32>
    %c0_17 = arith.constant 0 : index
    %c0_18 = arith.constant 0 : index
    %18 = vector.load %arg7[%c0_17, %c0_18] : memref<1x32xf32, #tpu.memory_space<vmem>>, vector<1x32xf32>
    %19 = vector.broadcast %18 : vector<1x32xf32> to vector<2x32xf32>
    %20 = arith.addf %17, %19 : vector<2x32xf32>
    %cst_19 = arith.constant 0.000000e+00 : f32
    %21 = vector.broadcast %cst_19 : f32 to vector<2x32xf32>
    %22 = arith.maximumf %20, %21 : vector<2x32xf32>
    %c0_20 = arith.constant 0 : index
    %c0_21 = arith.constant 0 : index
    %23 = vector.load %arg8[%c0_20, %c0_21] : memref<32x32xf32, #tpu.memory_space<vmem>>, vector<32x32xf32>
    %cst_22 = arith.constant dense<0.000000e+00> : vector<2x32xf32>
    %24 = tpu.matmul %22, %23, %cst_22 {dimension_numbers = #tpu.dot_dimension_numbers<[1], [0], [0], [1], [0, 0, 1, 1], [], []>} : vector<2x32xf32>, vector<32x32xf32>, vector<2x32xf32> -> vector<2x32xf32>
    %c0_23 = arith.constant 0 : index
    %c0_24 = arith.constant 0 : index
    %25 = vector.load %arg9[%c0_23, %c0_24] : memref<1x32xf32, #tpu.memory_space<vmem>>, vector<1x32xf32>
    %26 = vector.broadcast %25 : vector<1x32xf32> to vector<2x32xf32>
    %27 = arith.addf %24, %26 : vector<2x32xf32>
    %cst_25 = arith.constant 0.000000e+00 : f32
    %28 = vector.broadcast %cst_25 : f32 to vector<2x32xf32>
    %29 = arith.maximumf %27, %28 : vector<2x32xf32>
    %c0_26 = arith.constant 0 : index
    %c0_27 = arith.constant 0 : index
    %30 = vector.load %arg10[%c0_26, %c0_27] : memref<32x32xf32, #tpu.memory_space<vmem>>, vector<32x32xf32>
    %cst_28 = arith.constant dense<0.000000e+00> : vector<2x32xf32>
    %31 = tpu.matmul %29, %30, %cst_28 {dimension_numbers = #tpu.dot_dimension_numbers<[1], [0], [0], [1], [0, 0, 1, 1], [], []>} : vector<2x32xf32>, vector<32x32xf32>, vector<2x32xf32> -> vector<2x32xf32>
    %c0_29 = arith.constant 0 : index
    %c0_30 = arith.constant 0 : index
    %32 = vector.load %arg11[%c0_29, %c0_30] : memref<1x32xf32, #tpu.memory_space<vmem>>, vector<1x32xf32>
    %33 = vector.broadcast %32 : vector<1x32xf32> to vector<2x32xf32>
    %34 = arith.addf %31, %33 : vector<2x32xf32>
    %cst_31 = arith.constant 0.000000e+00 : f32
    %35 = vector.broadcast %cst_31 : f32 to vector<2x32xf32>
    %36 = arith.maximumf %34, %35 : vector<2x32xf32>
    %c0_32 = arith.constant 0 : index
    %c0_33 = arith.constant 0 : index
    %37 = vector.load %arg12[%c0_32, %c0_33] : memref<32x32xf32, #tpu.memory_space<vmem>>, vector<32x32xf32>
    %cst_34 = arith.constant dense<0.000000e+00> : vector<2x32xf32>
    %38 = tpu.matmul %36, %37, %cst_34 {dimension_numbers = #tpu.dot_dimension_numbers<[1], [0], [0], [1], [0, 0, 1, 1], [], []>} : vector<2x32xf32>, vector<32x32xf32>, vector<2x32xf32> -> vector<2x32xf32>
    %c0_35 = arith.constant 0 : index
    %c0_36 = arith.constant 0 : index
    %39 = vector.load %arg13[%c0_35, %c0_36] : memref<1x32xf32, #tpu.memory_space<vmem>>, vector<1x32xf32>
    %40 = vector.broadcast %39 : vector<1x32xf32> to vector<2x32xf32>
    %41 = arith.addf %38, %40 : vector<2x32xf32>
    %cst_37 = arith.constant 0.000000e+00 : f32
    %42 = vector.broadcast %cst_37 : f32 to vector<2x32xf32>
    %43 = arith.maximumf %41, %42 : vector<2x32xf32>
    %c0_38 = arith.constant 0 : index
    %c0_39 = arith.constant 0 : index
    %44 = vector.load %arg14[%c0_38, %c0_39] : memref<32x32xf32, #tpu.memory_space<vmem>>, vector<32x32xf32>
    %cst_40 = arith.constant dense<0.000000e+00> : vector<2x32xf32>
    %45 = tpu.matmul %43, %44, %cst_40 {dimension_numbers = #tpu.dot_dimension_numbers<[1], [0], [0], [1], [0, 0, 1, 1], [], []>} : vector<2x32xf32>, vector<32x32xf32>, vector<2x32xf32> -> vector<2x32xf32>
    %c0_41 = arith.constant 0 : index
    %c0_42 = arith.constant 0 : index
    %46 = vector.load %arg15[%c0_41, %c0_42] : memref<1x32xf32, #tpu.memory_space<vmem>>, vector<1x32xf32>
    %47 = vector.broadcast %46 : vector<1x32xf32> to vector<2x32xf32>
    %48 = arith.addf %45, %47 : vector<2x32xf32>
    %cst_43 = arith.constant 0.000000e+00 : f32
    %49 = vector.broadcast %cst_43 : f32 to vector<2x32xf32>
    %50 = arith.maximumf %48, %49 : vector<2x32xf32>
    %c0_44 = arith.constant 0 : index
    %c0_45 = arith.constant 0 : index
    %51 = vector.load %arg16[%c0_44, %c0_45] : memref<32x32xf32, #tpu.memory_space<vmem>>, vector<32x32xf32>
    %cst_46 = arith.constant dense<0.000000e+00> : vector<2x32xf32>
    %52 = tpu.matmul %50, %51, %cst_46 {dimension_numbers = #tpu.dot_dimension_numbers<[1], [0], [0], [1], [0, 0, 1, 1], [], []>} : vector<2x32xf32>, vector<32x32xf32>, vector<2x32xf32> -> vector<2x32xf32>
    %c0_47 = arith.constant 0 : index
    %c0_48 = arith.constant 0 : index
    %53 = vector.load %arg17[%c0_47, %c0_48] : memref<1x32xf32, #tpu.memory_space<vmem>>, vector<1x32xf32>
    %54 = vector.broadcast %53 : vector<1x32xf32> to vector<2x32xf32>
    %55 = arith.addf %52, %54 : vector<2x32xf32>
    %cst_49 = arith.constant 0.000000e+00 : f32
    %56 = vector.broadcast %cst_49 : f32 to vector<2x32xf32>
    %57 = arith.maximumf %55, %56 : vector<2x32xf32>
    %c0_50 = arith.constant 0 : index
    %c0_51 = arith.constant 0 : index
    %58 = vector.load %arg18[%c0_50, %c0_51] : memref<32x35xf32, #tpu.memory_space<vmem>>, vector<32x35xf32>
    %cst_52 = arith.constant dense<0.000000e+00> : vector<2x35xf32>
    %59 = tpu.matmul %57, %58, %cst_52 {dimension_numbers = #tpu.dot_dimension_numbers<[1], [0], [0], [1], [0, 0, 1, 1], [], []>} : vector<2x32xf32>, vector<32x35xf32>, vector<2x35xf32> -> vector<2x35xf32>
    %c0_53 = arith.constant 0 : index
    %c0_54 = arith.constant 0 : index
    %60 = vector.load %arg19[%c0_53, %c0_54] : memref<1x35xf32, #tpu.memory_space<vmem>>, vector<1x35xf32>
    %61 = vector.broadcast %60 : vector<1x35xf32> to vector<2x35xf32>
    %62 = arith.addf %59, %61 : vector<2x35xf32>
    %cst_55 = arith.constant dense<0xFF800000> : vector<2xf32>
    %63 = vector.multi_reduction <maximumf>, %62, %cst_55 [1] : vector<2x35xf32> to vector<2xf32>
    %64 = vector.shape_cast %63 : vector<2xf32> to vector<2x1xf32>
    %65 = vector.broadcast %64 : vector<2x1xf32> to vector<2x35xf32>
    %66 = arith.subf %62, %65 : vector<2x35xf32>
    %67 = math.exp %66 : vector<2x35xf32>
    %cst_56 = arith.constant dense<0.000000e+00> : vector<2xf32>
    %68 = vector.multi_reduction <add>, %67, %cst_56 [1] : vector<2x35xf32> to vector<2xf32>
    %69 = vector.shape_cast %68 : vector<2xf32> to vector<2x1xf32>
    %70 = math.log %69 : vector<2x1xf32>
    %71 = vector.broadcast %70 : vector<2x1xf32> to vector<2x35xf32>
    %72 = arith.subf %66, %71 : vector<2x35xf32>
    %73 = vector.extract_strided_slice %0 {offsets = [0, 0], sizes = [2, 54], strides = [1, 1]} : vector<2x64xf32> to vector<2x54xf32>
    %74 = vector.extract_strided_slice %0 {offsets = [0, 1], sizes = [2, 54], strides = [1, 1]} : vector<2x64xf32> to vector<2x54xf32>
    %75 = vector.extract_strided_slice %0 {offsets = [0, 2], sizes = [2, 54], strides = [1, 1]} : vector<2x64xf32> to vector<2x54xf32>
    %76 = vector.extract_strided_slice %0 {offsets = [0, 3], sizes = [2, 54], strides = [1, 1]} : vector<2x64xf32> to vector<2x54xf32>
    %77 = vector.extract_strided_slice %0 {offsets = [0, 4], sizes = [2, 54], strides = [1, 1]} : vector<2x64xf32> to vector<2x54xf32>
    %78 = vector.extract_strided_slice %0 {offsets = [0, 5], sizes = [2, 54], strides = [1, 1]} : vector<2x64xf32> to vector<2x54xf32>
    %79 = vector.extract_strided_slice %0 {offsets = [0, 6], sizes = [2, 54], strides = [1, 1]} : vector<2x64xf32> to vector<2x54xf32>
    %80 = vector.extract_strided_slice %0 {offsets = [0, 7], sizes = [2, 54], strides = [1, 1]} : vector<2x64xf32> to vector<2x54xf32>
    %81 = vector.extract_strided_slice %0 {offsets = [0, 8], sizes = [2, 54], strides = [1, 1]} : vector<2x64xf32> to vector<2x54xf32>
    %82 = vector.extract_strided_slice %0 {offsets = [0, 9], sizes = [2, 54], strides = [1, 1]} : vector<2x64xf32> to vector<2x54xf32>
    %83 = vector.extract_strided_slice %0 {offsets = [0, 10], sizes = [2, 54], strides = [1, 1]} : vector<2x64xf32> to vector<2x54xf32>
    %84 = vector.shape_cast %73 : vector<2x54xf32> to vector<2x54x1xf32>
    %85 = vector.shape_cast %74 : vector<2x54xf32> to vector<2x54x1xf32>
    %86 = vector.shape_cast %75 : vector<2x54xf32> to vector<2x54x1xf32>
    %87 = vector.shape_cast %76 : vector<2x54xf32> to vector<2x54x1xf32>
    %88 = vector.shape_cast %77 : vector<2x54xf32> to vector<2x54x1xf32>
    %89 = vector.shape_cast %78 : vector<2x54xf32> to vector<2x54x1xf32>
    %90 = vector.shape_cast %79 : vector<2x54xf32> to vector<2x54x1xf32>
    %91 = vector.shape_cast %80 : vector<2x54xf32> to vector<2x54x1xf32>
    %92 = vector.shape_cast %81 : vector<2x54xf32> to vector<2x54x1xf32>
    %93 = vector.shape_cast %82 : vector<2x54xf32> to vector<2x54x1xf32>
    %94 = vector.shape_cast %83 : vector<2x54xf32> to vector<2x54x1xf32>
    %95 = tpu.concatenate %84, %85, %86, %87, %88, %89, %90, %91, %92, %93, %94 in 2 : vector<2x54x1xf32>, vector<2x54x1xf32>, vector<2x54x1xf32>, vector<2x54x1xf32>, vector<2x54x1xf32>, vector<2x54x1xf32>, vector<2x54x1xf32>, vector<2x54x1xf32>, vector<2x54x1xf32>, vector<2x54x1xf32>, vector<2x54x1xf32> -> vector<2x54x11xf32>
    %96 = vector.shape_cast %95 : vector<2x54x11xf32> to vector<108x11xf32>
    %c0_57 = arith.constant 0 : index
    %c0_58 = arith.constant 0 : index
    %97 = vector.load %arg20[%c0_57, %c0_58] : memref<11x32xf32, #tpu.memory_space<vmem>>, vector<11x32xf32>
    %cst_59 = arith.constant dense<0.000000e+00> : vector<108x32xf32>
    %98 = tpu.matmul %96, %97, %cst_59 {dimension_numbers = #tpu.dot_dimension_numbers<[1], [0], [0], [1], [0, 0, 1, 1], [], []>} : vector<108x11xf32>, vector<11x32xf32>, vector<108x32xf32> -> vector<108x32xf32>
    %c0_60 = arith.constant 0 : index
    %c0_61 = arith.constant 0 : index
    %99 = vector.load %arg21[%c0_60, %c0_61] : memref<1x32xf32, #tpu.memory_space<vmem>>, vector<1x32xf32>
    %100 = vector.broadcast %99 : vector<1x32xf32> to vector<108x32xf32>
    %101 = arith.addf %98, %100 : vector<108x32xf32>
    %cst_62 = arith.constant 0.000000e+00 : f32
    %102 = vector.broadcast %cst_62 : f32 to vector<108x32xf32>
    %103 = arith.maximumf %101, %102 : vector<108x32xf32>
    %104 = vector.shape_cast %103 : vector<108x32xf32> to vector<54x2x32xf32>
    %105 = vector.extract_strided_slice %104 {offsets = [0, 0, 0], sizes = [54, 1, 32], strides = [1, 1, 1]} : vector<54x2x32xf32> to vector<54x1x32xf32>
    %106 = vector.shape_cast %105 : vector<54x1x32xf32> to vector<54x32xf32>
    %107 = vector.extract_strided_slice %104 {offsets = [0, 1, 0], sizes = [54, 1, 32], strides = [1, 1, 1]} : vector<54x2x32xf32> to vector<54x1x32xf32>
    %108 = vector.shape_cast %107 : vector<54x1x32xf32> to vector<54x32xf32>
    %109 = arith.addf %106, %108 : vector<54x32xf32>
    %cst_63 = arith.constant 5.000000e-01 : f32
    %110 = vector.broadcast %cst_63 : f32 to vector<54x32xf32>
    %111 = arith.mulf %109, %110 : vector<54x32xf32>
    %112 = vector.shape_cast %111 : vector<54x32xf32> to vector<2x27x32xf32>
    %113 = vector.extract_strided_slice %112 {offsets = [0, 0, 0], sizes = [2, 16, 32], strides = [1, 1, 1]} : vector<2x27x32xf32> to vector<2x16x32xf32>
    %114 = vector.extract_strided_slice %112 {offsets = [0, 1, 0], sizes = [2, 16, 32], strides = [1, 1, 1]} : vector<2x27x32xf32> to vector<2x16x32xf32>
    %115 = vector.extract_strided_slice %112 {offsets = [0, 2, 0], sizes = [2, 16, 32], strides = [1, 1, 1]} : vector<2x27x32xf32> to vector<2x16x32xf32>
    %116 = vector.extract_strided_slice %112 {offsets = [0, 3, 0], sizes = [2, 16, 32], strides = [1, 1, 1]} : vector<2x27x32xf32> to vector<2x16x32xf32>
    %117 = vector.extract_strided_slice %112 {offsets = [0, 4, 0], sizes = [2, 16, 32], strides = [1, 1, 1]} : vector<2x27x32xf32> to vector<2x16x32xf32>
    %118 = vector.extract_strided_slice %112 {offsets = [0, 5, 0], sizes = [2, 16, 32], strides = [1, 1, 1]} : vector<2x27x32xf32> to vector<2x16x32xf32>
    %119 = vector.extract_strided_slice %112 {offsets = [0, 6, 0], sizes = [2, 16, 32], strides = [1, 1, 1]} : vector<2x27x32xf32> to vector<2x16x32xf32>
    %120 = vector.extract_strided_slice %112 {offsets = [0, 7, 0], sizes = [2, 16, 32], strides = [1, 1, 1]} : vector<2x27x32xf32> to vector<2x16x32xf32>
    %121 = vector.extract_strided_slice %112 {offsets = [0, 8, 0], sizes = [2, 16, 32], strides = [1, 1, 1]} : vector<2x27x32xf32> to vector<2x16x32xf32>
    %122 = vector.extract_strided_slice %112 {offsets = [0, 9, 0], sizes = [2, 16, 32], strides = [1, 1, 1]} : vector<2x27x32xf32> to vector<2x16x32xf32>
    %123 = vector.extract_strided_slice %112 {offsets = [0, 10, 0], sizes = [2, 16, 32], strides = [1, 1, 1]} : vector<2x27x32xf32> to vector<2x16x32xf32>
    %124 = vector.extract_strided_slice %112 {offsets = [0, 11, 0], sizes = [2, 16, 32], strides = [1, 1, 1]} : vector<2x27x32xf32> to vector<2x16x32xf32>
    %125 = tpu.concatenate %113, %114, %115, %116, %117, %118, %119, %120, %121, %122, %123, %124 in 2 : vector<2x16x32xf32>, vector<2x16x32xf32>, vector<2x16x32xf32>, vector<2x16x32xf32>, vector<2x16x32xf32>, vector<2x16x32xf32>, vector<2x16x32xf32>, vector<2x16x32xf32>, vector<2x16x32xf32>, vector<2x16x32xf32>, vector<2x16x32xf32>, vector<2x16x32xf32> -> vector<2x16x384xf32>
    %126 = vector.shape_cast %125 : vector<2x16x384xf32> to vector<32x384xf32>
    %c0_64 = arith.constant 0 : index
    %c0_65 = arith.constant 0 : index
    %127 = vector.load %arg22[%c0_64, %c0_65] : memref<384x32xf32, #tpu.memory_space<vmem>>, vector<384x32xf32>
    %cst_66 = arith.constant dense<0.000000e+00> : vector<32x32xf32>
    %128 = tpu.matmul %126, %127, %cst_66 {dimension_numbers = #tpu.dot_dimension_numbers<[1], [0], [0], [1], [0, 0, 1, 1], [], []>} : vector<32x384xf32>, vector<384x32xf32>, vector<32x32xf32> -> vector<32x32xf32>
    %c0_67 = arith.constant 0 : index
    %c0_68 = arith.constant 0 : index
    %129 = vector.load %arg23[%c0_67, %c0_68] : memref<1x32xf32, #tpu.memory_space<vmem>>, vector<1x32xf32>
    %130 = vector.broadcast %129 : vector<1x32xf32> to vector<32x32xf32>
    %131 = arith.addf %128, %130 : vector<32x32xf32>
    %cst_69 = arith.constant 0.000000e+00 : f32
    %132 = vector.broadcast %cst_69 : f32 to vector<32x32xf32>
    %133 = arith.maximumf %131, %132 : vector<32x32xf32>
    %134 = vector.shape_cast %133 : vector<32x32xf32> to vector<16x2x32xf32>
    %135 = vector.extract_strided_slice %134 {offsets = [0, 0, 0], sizes = [16, 1, 32], strides = [1, 1, 1]} : vector<16x2x32xf32> to vector<16x1x32xf32>
    %136 = vector.shape_cast %135 : vector<16x1x32xf32> to vector<16x32xf32>
    %137 = vector.extract_strided_slice %134 {offsets = [0, 1, 0], sizes = [16, 1, 32], strides = [1, 1, 1]} : vector<16x2x32xf32> to vector<16x1x32xf32>
    %138 = vector.shape_cast %137 : vector<16x1x32xf32> to vector<16x32xf32>
    %139 = arith.addf %136, %138 : vector<16x32xf32>
    %cst_70 = arith.constant 5.000000e-01 : f32
    %140 = vector.broadcast %cst_70 : f32 to vector<16x32xf32>
    %141 = arith.mulf %139, %140 : vector<16x32xf32>
    %142 = vector.shape_cast %141 : vector<16x32xf32> to vector<2x8x32xf32>
    %143 = vector.extract_strided_slice %142 {offsets = [0, 0, 0], sizes = [2, 4, 32], strides = [1, 1, 1]} : vector<2x8x32xf32> to vector<2x4x32xf32>
    %144 = vector.extract_strided_slice %142 {offsets = [0, 1, 0], sizes = [2, 4, 32], strides = [1, 1, 1]} : vector<2x8x32xf32> to vector<2x4x32xf32>
    %145 = vector.extract_strided_slice %142 {offsets = [0, 2, 0], sizes = [2, 4, 32], strides = [1, 1, 1]} : vector<2x8x32xf32> to vector<2x4x32xf32>
    %146 = vector.extract_strided_slice %142 {offsets = [0, 3, 0], sizes = [2, 4, 32], strides = [1, 1, 1]} : vector<2x8x32xf32> to vector<2x4x32xf32>
    %147 = vector.extract_strided_slice %142 {offsets = [0, 4, 0], sizes = [2, 4, 32], strides = [1, 1, 1]} : vector<2x8x32xf32> to vector<2x4x32xf32>
    %148 = tpu.concatenate %143, %144, %145, %146, %147 in 2 : vector<2x4x32xf32>, vector<2x4x32xf32>, vector<2x4x32xf32>, vector<2x4x32xf32>, vector<2x4x32xf32> -> vector<2x4x160xf32>
    %149 = vector.shape_cast %148 : vector<2x4x160xf32> to vector<8x160xf32>
    %c0_71 = arith.constant 0 : index
    %c0_72 = arith.constant 0 : index
    %150 = vector.load %arg24[%c0_71, %c0_72] : memref<160x32xf32, #tpu.memory_space<vmem>>, vector<160x32xf32>
    %cst_73 = arith.constant dense<0.000000e+00> : vector<8x32xf32>
    %151 = tpu.matmul %149, %150, %cst_73 {dimension_numbers = #tpu.dot_dimension_numbers<[1], [0], [0], [1], [0, 0, 1, 1], [], []>} : vector<8x160xf32>, vector<160x32xf32>, vector<8x32xf32> -> vector<8x32xf32>
    %c0_74 = arith.constant 0 : index
    %c0_75 = arith.constant 0 : index
    %152 = vector.load %arg25[%c0_74, %c0_75] : memref<1x32xf32, #tpu.memory_space<vmem>>, vector<1x32xf32>
    %153 = vector.broadcast %152 : vector<1x32xf32> to vector<8x32xf32>
    %154 = arith.addf %151, %153 : vector<8x32xf32>
    %cst_76 = arith.constant 0.000000e+00 : f32
    %155 = vector.broadcast %cst_76 : f32 to vector<8x32xf32>
    %156 = arith.maximumf %154, %155 : vector<8x32xf32>
    %157 = vector.shape_cast %156 : vector<8x32xf32> to vector<4x2x32xf32>
    %158 = vector.extract_strided_slice %157 {offsets = [0, 0, 0], sizes = [4, 1, 32], strides = [1, 1, 1]} : vector<4x2x32xf32> to vector<4x1x32xf32>
    %159 = vector.shape_cast %158 : vector<4x1x32xf32> to vector<4x32xf32>
    %160 = vector.extract_strided_slice %157 {offsets = [0, 1, 0], sizes = [4, 1, 32], strides = [1, 1, 1]} : vector<4x2x32xf32> to vector<4x1x32xf32>
    %161 = vector.shape_cast %160 : vector<4x1x32xf32> to vector<4x32xf32>
    %162 = arith.addf %159, %161 : vector<4x32xf32>
    %cst_77 = arith.constant 5.000000e-01 : f32
    %163 = vector.broadcast %cst_77 : f32 to vector<4x32xf32>
    %164 = arith.mulf %162, %163 : vector<4x32xf32>
    %165 = vector.shape_cast %164 : vector<4x32xf32> to vector<2x2x32xf32>
    %166 = vector.shape_cast %165 : vector<2x2x32xf32> to vector<4x32xf32>
    %c0_78 = arith.constant 0 : index
    %c0_79 = arith.constant 0 : index
    %167 = vector.load %arg26[%c0_78, %c0_79] : memref<32x35xf32, #tpu.memory_space<vmem>>, vector<32x35xf32>
    %cst_80 = arith.constant dense<0.000000e+00> : vector<4x35xf32>
    %168 = tpu.matmul %166, %167, %cst_80 {dimension_numbers = #tpu.dot_dimension_numbers<[1], [0], [0], [1], [0, 0, 1, 1], [], []>} : vector<4x32xf32>, vector<32x35xf32>, vector<4x35xf32> -> vector<4x35xf32>
    %c0_81 = arith.constant 0 : index
    %c0_82 = arith.constant 0 : index
    %169 = vector.load %arg27[%c0_81, %c0_82] : memref<1x35xf32, #tpu.memory_space<vmem>>, vector<1x35xf32>
    %170 = vector.broadcast %169 : vector<1x35xf32> to vector<4x35xf32>
    %171 = arith.addf %168, %170 : vector<4x35xf32>
    %172 = vector.shape_cast %171 : vector<4x35xf32> to vector<2x2x35xf32>
    %173 = vector.extract_strided_slice %172 {offsets = [0, 0, 0], sizes = [2, 1, 35], strides = [1, 1, 1]} : vector<2x2x35xf32> to vector<2x1x35xf32>
    %174 = vector.shape_cast %173 : vector<2x1x35xf32> to vector<2x35xf32>
    %175 = vector.extract_strided_slice %172 {offsets = [0, 1, 0], sizes = [2, 1, 35], strides = [1, 1, 1]} : vector<2x2x35xf32> to vector<2x1x35xf32>
    %176 = vector.shape_cast %175 : vector<2x1x35xf32> to vector<2x35xf32>
    %177 = arith.addf %174, %176 : vector<2x35xf32>
    %cst_83 = arith.constant 5.000000e-01 : f32
    %178 = vector.broadcast %cst_83 : f32 to vector<2x35xf32>
    %179 = arith.mulf %177, %178 : vector<2x35xf32>
    %180 = vector.shape_cast %179 : vector<2x35xf32> to vector<2x1x35xf32>
    %181 = vector.shape_cast %180 : vector<2x1x35xf32> to vector<2x35xf32>
    %cst_84 = arith.constant 1.000000e+00 : f32
    %182 = vector.broadcast %cst_84 : f32 to vector<2x35xf32>
    %183 = arith.mulf %181, %182 : vector<2x35xf32>
    %cst_85 = arith.constant dense<0xFF800000> : vector<2xf32>
    %184 = vector.multi_reduction <maximumf>, %183, %cst_85 [1] : vector<2x35xf32> to vector<2xf32>
    %185 = vector.shape_cast %184 : vector<2xf32> to vector<2x1xf32>
    %186 = vector.broadcast %185 : vector<2x1xf32> to vector<2x35xf32>
    %187 = arith.subf %183, %186 : vector<2x35xf32>
    %188 = math.exp %187 : vector<2x35xf32>
    %cst_86 = arith.constant dense<0.000000e+00> : vector<2xf32>
    %189 = vector.multi_reduction <add>, %188, %cst_86 [1] : vector<2x35xf32> to vector<2xf32>
    %190 = vector.shape_cast %189 : vector<2xf32> to vector<2x1xf32>
    %191 = math.log %190 : vector<2x1xf32>
    %192 = vector.broadcast %191 : vector<2x1xf32> to vector<2x35xf32>
    %193 = arith.subf %187, %192 : vector<2x35xf32>
    %c0_87 = arith.constant 0 : index
    %c0_88 = arith.constant 0 : index
    %194 = vector.load %arg30[%c0_87, %c0_88] : memref<1x16xf32, #tpu.memory_space<vmem>>, vector<1x16xf32>
    %cst_89 = arith.constant dense<0.000000e+00> : vector<2x16xf32>
    %195 = tpu.matmul %1, %194, %cst_89 {dimension_numbers = #tpu.dot_dimension_numbers<[1], [0], [0], [1], [0, 0, 1, 1], [], []>} : vector<2x1xf32>, vector<1x16xf32>, vector<2x16xf32> -> vector<2x16xf32>
    %c0_90 = arith.constant 0 : index
    %c0_91 = arith.constant 0 : index
    %196 = vector.load %arg31[%c0_90, %c0_91] : memref<1x16xf32, #tpu.memory_space<vmem>>, vector<1x16xf32>
    %197 = vector.broadcast %196 : vector<1x16xf32> to vector<2x16xf32>
    %198 = arith.addf %195, %197 : vector<2x16xf32>
    %cst_92 = arith.constant 0.000000e+00 : f32
    %199 = vector.broadcast %cst_92 : f32 to vector<2x16xf32>
    %200 = arith.maximumf %198, %199 : vector<2x16xf32>
    %c0_93 = arith.constant 0 : index
    %c0_94 = arith.constant 0 : index
    %201 = vector.load %arg32[%c0_93, %c0_94] : memref<16x16xf32, #tpu.memory_space<vmem>>, vector<16x16xf32>
    %cst_95 = arith.constant dense<0.000000e+00> : vector<2x16xf32>
    %202 = tpu.matmul %200, %201, %cst_95 {dimension_numbers = #tpu.dot_dimension_numbers<[1], [0], [0], [1], [0, 0, 1, 1], [], []>} : vector<2x16xf32>, vector<16x16xf32>, vector<2x16xf32> -> vector<2x16xf32>
    %c0_96 = arith.constant 0 : index
    %c0_97 = arith.constant 0 : index
    %203 = vector.load %arg33[%c0_96, %c0_97] : memref<1x16xf32, #tpu.memory_space<vmem>>, vector<1x16xf32>
    %204 = vector.broadcast %203 : vector<1x16xf32> to vector<2x16xf32>
    %205 = arith.addf %202, %204 : vector<2x16xf32>
    %cst_98 = arith.constant 0.000000e+00 : f32
    %206 = vector.broadcast %cst_98 : f32 to vector<2x16xf32>
    %207 = arith.maximumf %205, %206 : vector<2x16xf32>
    %c0_99 = arith.constant 0 : index
    %c0_100 = arith.constant 0 : index
    %208 = vector.load %arg34[%c0_99, %c0_100] : memref<16x16xf32, #tpu.memory_space<vmem>>, vector<16x16xf32>
    %cst_101 = arith.constant dense<0.000000e+00> : vector<2x16xf32>
    %209 = tpu.matmul %207, %208, %cst_101 {dimension_numbers = #tpu.dot_dimension_numbers<[1], [0], [0], [1], [0, 0, 1, 1], [], []>} : vector<2x16xf32>, vector<16x16xf32>, vector<2x16xf32> -> vector<2x16xf32>
    %c0_102 = arith.constant 0 : index
    %c0_103 = arith.constant 0 : index
    %210 = vector.load %arg35[%c0_102, %c0_103] : memref<1x16xf32, #tpu.memory_space<vmem>>, vector<1x16xf32>
    %211 = vector.broadcast %210 : vector<1x16xf32> to vector<2x16xf32>
    %212 = arith.addf %209, %211 : vector<2x16xf32>
    %cst_104 = arith.constant 0.000000e+00 : f32
    %213 = vector.broadcast %cst_104 : f32 to vector<2x16xf32>
    %214 = arith.maximumf %212, %213 : vector<2x16xf32>
    %c0_105 = arith.constant 0 : index
    %c0_106 = arith.constant 0 : index
    %215 = vector.load %arg36[%c0_105, %c0_106] : memref<16x16xf32, #tpu.memory_space<vmem>>, vector<16x16xf32>
    %cst_107 = arith.constant dense<0.000000e+00> : vector<2x16xf32>
    %216 = tpu.matmul %214, %215, %cst_107 {dimension_numbers = #tpu.dot_dimension_numbers<[1], [0], [0], [1], [0, 0, 1, 1], [], []>} : vector<2x16xf32>, vector<16x16xf32>, vector<2x16xf32> -> vector<2x16xf32>
    %c0_108 = arith.constant 0 : index
    %c0_109 = arith.constant 0 : index
    %217 = vector.load %arg37[%c0_108, %c0_109] : memref<1x16xf32, #tpu.memory_space<vmem>>, vector<1x16xf32>
    %218 = vector.broadcast %217 : vector<1x16xf32> to vector<2x16xf32>
    %219 = arith.addf %216, %218 : vector<2x16xf32>
    %cst_110 = arith.constant 0.000000e+00 : f32
    %220 = vector.broadcast %cst_110 : f32 to vector<2x16xf32>
    %221 = arith.maximumf %219, %220 : vector<2x16xf32>
    %c0_111 = arith.constant 0 : index
    %c0_112 = arith.constant 0 : index
    %222 = vector.load %arg38[%c0_111, %c0_112] : memref<16x35xf32, #tpu.memory_space<vmem>>, vector<16x35xf32>
    %cst_113 = arith.constant dense<0.000000e+00> : vector<2x35xf32>
    %223 = tpu.matmul %221, %222, %cst_113 {dimension_numbers = #tpu.dot_dimension_numbers<[1], [0], [0], [1], [0, 0, 1, 1], [], []>} : vector<2x16xf32>, vector<16x35xf32>, vector<2x35xf32> -> vector<2x35xf32>
    %c0_114 = arith.constant 0 : index
    %c0_115 = arith.constant 0 : index
    %224 = vector.load %arg39[%c0_114, %c0_115] : memref<1x35xf32, #tpu.memory_space<vmem>>, vector<1x35xf32>
    %225 = vector.broadcast %224 : vector<1x35xf32> to vector<2x35xf32>
    %226 = arith.addf %223, %225 : vector<2x35xf32>
    %cst_116 = arith.constant dense<0xFF800000> : vector<2xf32>
    %227 = vector.multi_reduction <maximumf>, %226, %cst_116 [1] : vector<2x35xf32> to vector<2xf32>
    %228 = vector.shape_cast %227 : vector<2xf32> to vector<2x1xf32>
    %229 = vector.broadcast %228 : vector<2x1xf32> to vector<2x35xf32>
    %230 = arith.subf %226, %229 : vector<2x35xf32>
    %231 = math.exp %230 : vector<2x35xf32>
    %cst_117 = arith.constant dense<0.000000e+00> : vector<2xf32>
    %232 = vector.multi_reduction <add>, %231, %cst_117 [1] : vector<2x35xf32> to vector<2xf32>
    %233 = vector.shape_cast %232 : vector<2xf32> to vector<2x1xf32>
    %234 = math.log %233 : vector<2x1xf32>
    %235 = vector.broadcast %234 : vector<2x1xf32> to vector<2x35xf32>
    %236 = arith.subf %230, %235 : vector<2x35xf32>
    %237 = vector.shape_cast %165 : vector<2x2x32xf32> to vector<4x32xf32>
    %c0_118 = arith.constant 0 : index
    %c0_119 = arith.constant 0 : index
    %238 = vector.load %arg28[%c0_118, %c0_119] : memref<32x32xf32, #tpu.memory_space<vmem>>, vector<32x32xf32>
    %cst_120 = arith.constant dense<0.000000e+00> : vector<4x32xf32>
    %239 = tpu.matmul %237, %238, %cst_120 {dimension_numbers = #tpu.dot_dimension_numbers<[1], [0], [0], [1], [0, 0, 1, 1], [], []>} : vector<4x32xf32>, vector<32x32xf32>, vector<4x32xf32> -> vector<4x32xf32>
    %c0_121 = arith.constant 0 : index
    %c0_122 = arith.constant 0 : index
    %240 = vector.load %arg29[%c0_121, %c0_122] : memref<1x32xf32, #tpu.memory_space<vmem>>, vector<1x32xf32>
    %241 = vector.broadcast %240 : vector<1x32xf32> to vector<4x32xf32>
    %242 = arith.addf %239, %241 : vector<4x32xf32>
    %243 = vector.shape_cast %242 : vector<4x32xf32> to vector<2x2x32xf32>
    %244 = vector.extract_strided_slice %243 {offsets = [0, 0, 0], sizes = [2, 1, 32], strides = [1, 1, 1]} : vector<2x2x32xf32> to vector<2x1x32xf32>
    %245 = vector.shape_cast %244 : vector<2x1x32xf32> to vector<2x32xf32>
    %246 = vector.extract_strided_slice %243 {offsets = [0, 1, 0], sizes = [2, 1, 32], strides = [1, 1, 1]} : vector<2x2x32xf32> to vector<2x1x32xf32>
    %247 = vector.shape_cast %246 : vector<2x1x32xf32> to vector<2x32xf32>
    %248 = arith.addf %245, %247 : vector<2x32xf32>
    %cst_123 = arith.constant 5.000000e-01 : f32
    %249 = vector.broadcast %cst_123 : f32 to vector<2x32xf32>
    %250 = arith.mulf %248, %249 : vector<2x32xf32>
    %cst_124 = arith.constant 0.000000e+00 : f32
    %251 = vector.broadcast %cst_124 : f32 to vector<2x32xf32>
    %252 = arith.maximumf %250, %251 : vector<2x32xf32>
    %253 = vector.shape_cast %252 : vector<2x32xf32> to vector<2x1x32xf32>
    %254 = vector.shape_cast %253 : vector<2x1x32xf32> to vector<2x32xf32>
    %cst_125 = arith.constant 1.000000e+00 : f32
    %255 = vector.broadcast %cst_125 : f32 to vector<2x32xf32>
    %256 = arith.mulf %254, %255 : vector<2x32xf32>
    %257 = tpu.concatenate %57, %256, %221 in 1 : vector<2x32xf32>, vector<2x32xf32>, vector<2x16xf32> -> vector<2x80xf32>
    %c0_126 = arith.constant 0 : index
    %c0_127 = arith.constant 0 : index
    %258 = vector.load %arg40[%c0_126, %c0_127] : memref<80x16xf32, #tpu.memory_space<vmem>>, vector<80x16xf32>
    %cst_128 = arith.constant dense<0.000000e+00> : vector<2x16xf32>
    %259 = tpu.matmul %257, %258, %cst_128 {dimension_numbers = #tpu.dot_dimension_numbers<[1], [0], [0], [1], [0, 0, 1, 1], [], []>} : vector<2x80xf32>, vector<80x16xf32>, vector<2x16xf32> -> vector<2x16xf32>
    %c0_129 = arith.constant 0 : index
    %c0_130 = arith.constant 0 : index
    %260 = vector.load %arg41[%c0_129, %c0_130] : memref<1x16xf32, #tpu.memory_space<vmem>>, vector<1x16xf32>
    %261 = vector.broadcast %260 : vector<1x16xf32> to vector<2x16xf32>
    %262 = arith.addf %259, %261 : vector<2x16xf32>
    %cst_131 = arith.constant 0.000000e+00 : f32
    %263 = vector.broadcast %cst_131 : f32 to vector<2x16xf32>
    %264 = arith.maximumf %262, %263 : vector<2x16xf32>
    %c0_132 = arith.constant 0 : index
    %c0_133 = arith.constant 0 : index
    %265 = vector.load %arg42[%c0_132, %c0_133] : memref<16x16xf32, #tpu.memory_space<vmem>>, vector<16x16xf32>
    %cst_134 = arith.constant dense<0.000000e+00> : vector<2x16xf32>
    %266 = tpu.matmul %264, %265, %cst_134 {dimension_numbers = #tpu.dot_dimension_numbers<[1], [0], [0], [1], [0, 0, 1, 1], [], []>} : vector<2x16xf32>, vector<16x16xf32>, vector<2x16xf32> -> vector<2x16xf32>
    %c0_135 = arith.constant 0 : index
    %c0_136 = arith.constant 0 : index
    %267 = vector.load %arg43[%c0_135, %c0_136] : memref<1x16xf32, #tpu.memory_space<vmem>>, vector<1x16xf32>
    %268 = vector.broadcast %267 : vector<1x16xf32> to vector<2x16xf32>
    %269 = arith.addf %266, %268 : vector<2x16xf32>
    %cst_137 = arith.constant 0.000000e+00 : f32
    %270 = vector.broadcast %cst_137 : f32 to vector<2x16xf32>
    %271 = arith.maximumf %269, %270 : vector<2x16xf32>
    %c0_138 = arith.constant 0 : index
    %c0_139 = arith.constant 0 : index
    %272 = vector.load %arg44[%c0_138, %c0_139] : memref<16x16xf32, #tpu.memory_space<vmem>>, vector<16x16xf32>
    %cst_140 = arith.constant dense<0.000000e+00> : vector<2x16xf32>
    %273 = tpu.matmul %271, %272, %cst_140 {dimension_numbers = #tpu.dot_dimension_numbers<[1], [0], [0], [1], [0, 0, 1, 1], [], []>} : vector<2x16xf32>, vector<16x16xf32>, vector<2x16xf32> -> vector<2x16xf32>
    %c0_141 = arith.constant 0 : index
    %c0_142 = arith.constant 0 : index
    %274 = vector.load %arg45[%c0_141, %c0_142] : memref<1x16xf32, #tpu.memory_space<vmem>>, vector<1x16xf32>
    %275 = vector.broadcast %274 : vector<1x16xf32> to vector<2x16xf32>
    %276 = arith.addf %273, %275 : vector<2x16xf32>
    %cst_143 = arith.constant 0.000000e+00 : f32
    %277 = vector.broadcast %cst_143 : f32 to vector<2x16xf32>
    %278 = arith.maximumf %276, %277 : vector<2x16xf32>
    %c0_144 = arith.constant 0 : index
    %c0_145 = arith.constant 0 : index
    %279 = vector.load %arg46[%c0_144, %c0_145] : memref<16x16xf32, #tpu.memory_space<vmem>>, vector<16x16xf32>
    %cst_146 = arith.constant dense<0.000000e+00> : vector<2x16xf32>
    %280 = tpu.matmul %278, %279, %cst_146 {dimension_numbers = #tpu.dot_dimension_numbers<[1], [0], [0], [1], [0, 0, 1, 1], [], []>} : vector<2x16xf32>, vector<16x16xf32>, vector<2x16xf32> -> vector<2x16xf32>
    %c0_147 = arith.constant 0 : index
    %c0_148 = arith.constant 0 : index
    %281 = vector.load %arg47[%c0_147, %c0_148] : memref<1x16xf32, #tpu.memory_space<vmem>>, vector<1x16xf32>
    %282 = vector.broadcast %281 : vector<1x16xf32> to vector<2x16xf32>
    %283 = arith.addf %280, %282 : vector<2x16xf32>
    %cst_149 = arith.constant 0.000000e+00 : f32
    %284 = vector.broadcast %cst_149 : f32 to vector<2x16xf32>
    %285 = arith.maximumf %283, %284 : vector<2x16xf32>
    %c0_150 = arith.constant 0 : index
    %c0_151 = arith.constant 0 : index
    %286 = vector.load %arg48[%c0_150, %c0_151] : memref<16x35xf32, #tpu.memory_space<vmem>>, vector<16x35xf32>
    %cst_152 = arith.constant dense<0.000000e+00> : vector<2x35xf32>
    %287 = tpu.matmul %285, %286, %cst_152 {dimension_numbers = #tpu.dot_dimension_numbers<[1], [0], [0], [1], [0, 0, 1, 1], [], []>} : vector<2x16xf32>, vector<16x35xf32>, vector<2x35xf32> -> vector<2x35xf32>
    %c0_153 = arith.constant 0 : index
    %c0_154 = arith.constant 0 : index
    %288 = vector.load %arg49[%c0_153, %c0_154] : memref<1x35xf32, #tpu.memory_space<vmem>>, vector<1x35xf32>
    %289 = vector.broadcast %288 : vector<1x35xf32> to vector<2x35xf32>
    %290 = arith.addf %287, %289 : vector<2x35xf32>
    %cst_155 = arith.constant dense<0xFF800000> : vector<2xf32>
    %291 = vector.multi_reduction <maximumf>, %290, %cst_155 [1] : vector<2x35xf32> to vector<2xf32>
    %292 = vector.shape_cast %291 : vector<2xf32> to vector<2x1xf32>
    %293 = vector.broadcast %292 : vector<2x1xf32> to vector<2x35xf32>
    %294 = arith.subf %290, %293 : vector<2x35xf32>
    %295 = math.exp %294 : vector<2x35xf32>
    %cst_156 = arith.constant dense<0.000000e+00> : vector<2xf32>
    %296 = vector.multi_reduction <add>, %295, %cst_156 [1] : vector<2x35xf32> to vector<2xf32>
    %297 = vector.shape_cast %296 : vector<2xf32> to vector<2x1xf32>
    %298 = math.log %297 : vector<2x1xf32>
    %299 = vector.broadcast %298 : vector<2x1xf32> to vector<2x35xf32>
    %300 = arith.subf %294, %299 : vector<2x35xf32>
    %cst_157 = arith.constant 0.000000e+00 : f32
    %301 = vector.broadcast %cst_157 : f32 to vector<2x93xf32>
    %302 = tpu.concatenate %72, %301, %193, %301, %236, %301, %300, %301 in 1 : vector<2x35xf32>, vector<2x93xf32>, vector<2x35xf32>, vector<2x93xf32>, vector<2x35xf32>, vector<2x93xf32>, vector<2x35xf32>, vector<2x93xf32> -> vector<2x512xf32>
    %c0_158 = arith.constant 0 : index
    %c0_159 = arith.constant 0 : index
    %303 = vector.load %arg50[%c0_158, %c0_159] : memref<2x512xf32, #tpu.memory_space<vmem>>, vector<2x512xf32>
    tpu.vector_store %arg50[%c0_158, %c0_159], %302 {strides = array<i32>} : memref<2x512xf32, #tpu.memory_space<vmem>>, vector<2x512xf32>,
    return
  }
}

</mosaic_0001>

<llo_original>
// kernel: model_forward.1
$region0: #{model_forward.1}
  #allocation0 [shape = 'u32[]', space=smem, size = 0x4, offset = 0x4, fixed_abs, tag = 'smem constant byte address 0x4 - core index']
  #allocation1 [shape = 'u32[144,128]{1,0:T(1,128)}', space=vmem, size = 0x12000, scoped, tag = 'internal scratch']
  %s0 = inlined_call_operand.smem [shape: u32[51], index: -1, kind: input, shape index: {}]
  %s1 = sld [smem:[%s0]]
  %s2 = scalar_lea.smem %s0, 1
  %s3 = sld [smem:[%s2]]
  %s4 = scalar_lea.smem %s0, 2
  %s5 = sld [smem:[%s4]]
  %s6 = scalar_lea.smem %s0, 3
  %s7 = sld [smem:[%s6]]
  %s8 = scalar_lea.smem %s0, 4
  %s9 = sld [smem:[%s8]]
  %s10 = scalar_lea.smem %s0, 5
  %s11 = sld [smem:[%s10]]
  %s12 = scalar_lea.smem %s0, 6
  %s13 = sld [smem:[%s12]]
  %s14 = scalar_lea.smem %s0, 7
  %s15 = sld [smem:[%s14]]
  %s16 = scalar_lea.smem %s0, 8
  %s17 = sld [smem:[%s16]]
  %s18 = scalar_lea.smem %s0, 9
  %s19 = sld [smem:[%s18]]
  %s20 = scalar_lea.smem %s0, 10
  %s21 = sld [smem:[%s20]]
  %s22 = scalar_lea.smem %s0, 11
  %s23 = sld [smem:[%s22]]
  %s24 = scalar_lea.smem %s0, 12
  %s25 = sld [smem:[%s24]]
  %s26 = scalar_lea.smem %s0, 13
  %s27 = sld [smem:[%s26]]
  %s28 = scalar_lea.smem %s0, 14
  %s29 = sld [smem:[%s28]]
  %s30 = scalar_lea.smem %s0, 15
  %s31 = sld [smem:[%s30]]
  %s32 = scalar_lea.smem %s0, 16
  %s33 = sld [smem:[%s32]]
  %s34 = scalar_lea.smem %s0, 17
  %s35 = sld [smem:[%s34]]
  %s36 = scalar_lea.smem %s0, 18
  %s37 = sld [smem:[%s36]]
  %s38 = scalar_lea.smem %s0, 19
  %s39 = sld [smem:[%s38]]
  %s40 = scalar_lea.smem %s0, 20
  %s41 = sld [smem:[%s40]]
  %s42 = scalar_lea.smem %s0, 21
  %s43 = sld [smem:[%s42]]
  %s44 = scalar_lea.smem %s0, 22
  %s45 = sld [smem:[%s44]]
  %s46 = scalar_lea.smem %s0, 23
  %s47 = sld [smem:[%s46]]
  %s48 = scalar_lea.smem %s0, 24
  %s49 = sld [smem:[%s48]]
  %s50 = scalar_lea.smem %s0, 25
  %s51 = sld [smem:[%s50]]
  %s52 = scalar_lea.smem %s0, 26
  %s53 = sld [smem:[%s52]]
  %s54 = scalar_lea.smem %s0, 27
  %s55 = sld [smem:[%s54]]
  %s56 = scalar_lea.smem %s0, 28
  %s57 = sld [smem:[%s56]]
  %s58 = scalar_lea.smem %s0, 29
  %s59 = sld [smem:[%s58]]
  %s60 = scalar_lea.smem %s0, 30
  %s61 = sld [smem:[%s60]]
  %s62 = scalar_lea.smem %s0, 31
  %s63 = sld [smem:[%s62]]
  %s64 = scalar_lea.smem %s0, 32
  %s65 = sld [smem:[%s64]]
  %s66 = scalar_lea.smem %s0, 33
  %s67 = sld [smem:[%s66]]
  %s68 = scalar_lea.smem %s0, 34
  %s69 = sld [smem:[%s68]]
  %s70 = scalar_lea.smem %s0, 35
  %s71 = sld [smem:[%s70]]
  %s72 = scalar_lea.smem %s0, 36
  %s73 = sld [smem:[%s72]]
  %s74 = scalar_lea.smem %s0, 37
  %s75 = sld [smem:[%s74]]
  %s76 = scalar_lea.smem %s0, 38
  %s77 = sld [smem:[%s76]]
  %s78 = scalar_lea.smem %s0, 39
  %s79 = sld [smem:[%s78]]
  %s80 = scalar_lea.smem %s0, 40
  %s81 = sld [smem:[%s80]]
  %s82 = scalar_lea.smem %s0, 41
  %s83 = sld [smem:[%s82]]
  %s84 = scalar_lea.smem %s0, 42
  %s85 = sld [smem:[%s84]]
  %s86 = scalar_lea.smem %s0, 43
  %s87 = sld [smem:[%s86]]
  %s88 = scalar_lea.smem %s0, 44
  %s89 = sld [smem:[%s88]]
  %s90 = scalar_lea.smem %s0, 45
  %s91 = sld [smem:[%s90]]
  %s92 = scalar_lea.smem %s0, 46
  %s93 = sld [smem:[%s92]]
  %s94 = scalar_lea.smem %s0, 47
  %s95 = sld [smem:[%s94]]
  %s96 = scalar_lea.smem %s0, 48
  %s97 = sld [smem:[%s96]]
  %s98 = scalar_lea.smem %s0, 49
  %s99 = sld [smem:[%s98]]
  %s100 = scalar_lea.smem %s0, 50
  %s101 = sld [smem:[%s100]]
  %s102 = sld [smem:[#allocation0]]
  $region242: #{model_forward.1} parent=0
    _
  %s104 = ssub.s32 1, %s102
  %s105 = scalar_select 0, %s104, %s102
  $region1: #{model_forward.1} parent=0
    #allocation2 [shape = 'u8[512]{0}', space=vmem, size = 0x400, scoped, tag = 'input window, operand 35, single buffered']
    #allocation3 [shape = 's32[1]{0}', space=sflag, size = 0x4, scoped, tag = 'scoped memory for model_forward.1']
    #allocation4 [shape = 'u8[512]{0}', space=vmem, size = 0x400, scoped, tag = 'input window, operand 37, single buffered']
    #allocation5 [shape = 's32[1]{0}', space=sflag, size = 0x4, scoped, tag = 'scoped memory for model_forward.1']
    #allocation6 [shape = 'u8[512]{0}', space=vmem, size = 0x400, scoped, tag = 'input window, operand 39, single buffered']
    #allocation7 [shape = 'u8[512]{0}', space=vmem, size = 0x400, scoped, tag = 'input window, operand 41, single buffered']
    #allocation8 [shape = 's32[1]{0}', space=sflag, size = 0x4, scoped, tag = 'scoped memory for model_forward.1']
    #allocation9 [shape = 'u8[512]{0}', space=vmem, size = 0x400, scoped, tag = 'input window, operand 43, single buffered']
    #allocation10 [shape = 'u8[512]{0}', space=vmem, size = 0x400, scoped, tag = 'input window, operand 45, single buffered']
    #allocation11 [shape = 's32[1]{0}', space=sflag, size = 0x4, scoped, tag = 'scoped memory for model_forward.1']
    #allocation12 [shape = 'u8[512]{0}', space=vmem, size = 0x400, scoped, tag = 'input window, operand 47, single buffered']
    #allocation13 [shape = 'u8[512]{0}', space=vmem, size = 0x400, scoped, tag = 'input window, operand 49, single buffered']
    #allocation14 [shape = 's32[1]{0}', space=sflag, size = 0x4, scoped, tag = 'scoped memory for model_forward.1']
    %106 = vsyncpa [#allocation3], 0
    %107 = vsyncpa [#allocation5], 0
    %108 = vsyncpa [#allocation8], 0
    %109 = vsyncpa [#allocation11], 0
    %110 = vsyncpa [#allocation14], 0
    // Predicated region
    $region2: #{model_forward.1} parent=1 // pred_check
      _
    $region3: #{model_forward.1} parent=1 // pred_check_branch
      %112 = sbr.rel (0) target = $region5
    $region4: #{model_forward.1} parent=1 // pred_region
      _
    $region5: #{model_forward.1} parent=1 // pred_fallthru
      _
    // Predicated region
    $region6: #{model_forward.1} parent=1 // pred_check
      _
    $region7: #{model_forward.1} parent=1 // pred_check_branch
      %114 = sbr.rel (0) target = $region9
    $region8: #{model_forward.1} parent=1 // pred_region
      _
    $region9: #{model_forward.1} parent=1 // pred_fallthru
      _
    // Predicated region
    $region10: #{model_forward.1} parent=1 // pred_check
      _
    $region11: #{model_forward.1} parent=1 // pred_check_branch
      %116 = sbr.rel (0) target = $region13
    $region12: #{model_forward.1} parent=1 // pred_region
      _
    $region13: #{model_forward.1} parent=1 // pred_fallthru
      _
    // Predicated region
    $region14: #{model_forward.1} parent=1 // pred_check
      _
    $region15: #{model_forward.1} parent=1 // pred_check_branch
      %118 = sbr.rel (0) target = $region17
    $region16: #{model_forward.1} parent=1 // pred_region
      _
    $region17: #{model_forward.1} parent=1 // pred_fallthru
      _
    // Predicated region
    $region18: #{model_forward.1} parent=1 // pred_check
      _
    $region19: #{model_forward.1} parent=1 // pred_check_branch
      %120 = sbr.rel (0) target = $region21
    $region20: #{model_forward.1} parent=1 // pred_region
      _
    $region21: #{model_forward.1} parent=1 // pred_fallthru
      _
    // Predicated region
    $region22: #{model_forward.1} parent=1 // pred_check
      _
    $region23: #{model_forward.1} parent=1 // pred_check_branch
      %122 = sbr.rel (0) target = $region25
    $region24: #{model_forward.1} parent=1 // pred_region
      _
    $region25: #{model_forward.1} parent=1 // pred_fallthru
      _
    // Predicated region
    $region26: #{model_forward.1} parent=1 // pred_check
      _
    $region27: #{model_forward.1} parent=1 // pred_check_branch
      %124 = sbr.rel (0) target = $region29
    $region28: #{model_forward.1} parent=1 // pred_region
      _
    $region29: #{model_forward.1} parent=1 // pred_fallthru
      _
    // Predicated region
    $region30: #{model_forward.1} parent=1 // pred_check
      _
    $region31: #{model_forward.1} parent=1 // pred_check_branch
      %126 = sbr.rel (0) target = $region33
    $region32: #{model_forward.1} parent=1 // pred_region
      _
    $region33: #{model_forward.1} parent=1 // pred_fallthru
      _
    // Predicated region
    $region34: #{model_forward.1} parent=1 // pred_check
      _
    $region35: #{model_forward.1} parent=1 // pred_check_branch
      %128 = sbr.rel (0) target = $region37
    $region36: #{model_forward.1} parent=1 // pred_region
      _
    $region37: #{model_forward.1} parent=1 // pred_fallthru
      _
    // Predicated region
    $region38: #{model_forward.1} parent=1 // pred_check
      _
    $region39: #{model_forward.1} parent=1 // pred_check_branch
      %130 = sbr.rel (0) target = $region41
    $region40: #{model_forward.1} parent=1 // pred_region
      _
    $region41: #{model_forward.1} parent=1 // pred_fallthru
      _
    // Predicated region
    $region42: #{model_forward.1} parent=1 // pred_check
      _
    $region43: #{model_forward.1} parent=1 // pred_check_branch
      %132 = sbr.rel (0) target = $region45
    $region44: #{model_forward.1} parent=1 // pred_region
      _
    $region45: #{model_forward.1} parent=1 // pred_fallthru
      _
    // Predicated region
    $region46: #{model_forward.1} parent=1 // pred_check
      _
    $region47: #{model_forward.1} parent=1 // pred_check_branch
      %134 = sbr.rel (0) target = $region49
    $region48: #{model_forward.1} parent=1 // pred_region
      _
    $region49: #{model_forward.1} parent=1 // pred_fallthru
      _
    // Predicated region
    $region50: #{model_forward.1} parent=1 // pred_check
      _
    $region51: #{model_forward.1} parent=1 // pred_check_branch
      %136 = sbr.rel (0) target = $region53
    $region52: #{model_forward.1} parent=1 // pred_region
      _
    $region53: #{model_forward.1} parent=1 // pred_fallthru
      _
    // Predicated region
    $region54: #{model_forward.1} parent=1 // pred_check
      _
    $region55: #{model_forward.1} parent=1 // pred_check_branch
      %138 = sbr.rel (0) target = $region57
    $region56: #{model_forward.1} parent=1 // pred_region
      _
    $region57: #{model_forward.1} parent=1 // pred_fallthru
      _
    // Predicated region
    $region58: #{model_forward.1} parent=1 // pred_check
      _
    $region59: #{model_forward.1} parent=1 // pred_check_branch
      %140 = sbr.rel (0) target = $region61
    $region60: #{model_forward.1} parent=1 // pred_region
      _
    $region61: #{model_forward.1} parent=1 // pred_fallthru
      _
    // Predicated region
    $region62: #{model_forward.1} parent=1 // pred_check
      _
    $region63: #{model_forward.1} parent=1 // pred_check_branch
      %142 = sbr.rel (0) target = $region65
    $region64: #{model_forward.1} parent=1 // pred_region
      _
    $region65: #{model_forward.1} parent=1 // pred_fallthru
      _
    // Predicated region
    $region66: #{model_forward.1} parent=1 // pred_check
      _
    $region67: #{model_forward.1} parent=1 // pred_check_branch
      %144 = sbr.rel (0) target = $region69
    $region68: #{model_forward.1} parent=1 // pred_region
      _
    $region69: #{model_forward.1} parent=1 // pred_fallthru
      _
    // Predicated region
    $region70: #{model_forward.1} parent=1 // pred_check
      _
    $region71: #{model_forward.1} parent=1 // pred_check_branch
      %146 = sbr.rel (0) target = $region73
    $region72: #{model_forward.1} parent=1 // pred_region
      _
    $region73: #{model_forward.1} parent=1 // pred_fallthru
      _
    // Predicated region
    $region74: #{model_forward.1} parent=1 // pred_check
      _
    $region75: #{model_forward.1} parent=1 // pred_check_branch
      %148 = sbr.rel (0) target = $region77
    $region76: #{model_forward.1} parent=1 // pred_region
      _
    $region77: #{model_forward.1} parent=1 // pred_fallthru
      _
    // Predicated region
    $region78: #{model_forward.1} parent=1 // pred_check
      _
    $region79: #{model_forward.1} parent=1 // pred_check_branch
      %150 = sbr.rel (0) target = $region81
    $region80: #{model_forward.1} parent=1 // pred_region
      _
    $region81: #{model_forward.1} parent=1 // pred_fallthru
      _
    // Predicated region
    $region82: #{model_forward.1} parent=1 // pred_check
      _
    $region83: #{model_forward.1} parent=1 // pred_check_branch
      %152 = sbr.rel (0) target = $region85
    $region84: #{model_forward.1} parent=1 // pred_region
      _
    $region85: #{model_forward.1} parent=1 // pred_fallthru
      _
    // Predicated region
    $region86: #{model_forward.1} parent=1 // pred_check
      _
    $region87: #{model_forward.1} parent=1 // pred_check_branch
      %154 = sbr.rel (0) target = $region89
    $region88: #{model_forward.1} parent=1 // pred_region
      _
    $region89: #{model_forward.1} parent=1 // pred_fallthru
      _
    // Predicated region
    $region90: #{model_forward.1} parent=1 // pred_check
      _
    $region91: #{model_forward.1} parent=1 // pred_check_branch
      %156 = sbr.rel (0) target = $region93
    $region92: #{model_forward.1} parent=1 // pred_region
      _
    $region93: #{model_forward.1} parent=1 // pred_fallthru
      _
    // Predicated region
    $region94: #{model_forward.1} parent=1 // pred_check
      _
    $region95: #{model_forward.1} parent=1 // pred_check_branch
      %158 = sbr.rel (0) target = $region97
    $region96: #{model_forward.1} parent=1 // pred_region
      _
    $region97: #{model_forward.1} parent=1 // pred_fallthru
      _
    // Predicated region
    $region98: #{model_forward.1} parent=1 // pred_check
      _
    $region99: #{model_forward.1} parent=1 // pred_check_branch
      %160 = sbr.rel (0) target = $region101
    $region100: #{model_forward.1} parent=1 // pred_region
      _
    $region101: #{model_forward.1} parent=1 // pred_fallthru
      _
    // Predicated region
    $region102: #{model_forward.1} parent=1 // pred_check
      _
    $region103: #{model_forward.1} parent=1 // pred_check_branch
      %162 = sbr.rel (0) target = $region105
    $region104: #{model_forward.1} parent=1 // pred_region
      _
    $region105: #{model_forward.1} parent=1 // pred_fallthru
      _
    // Predicated region
    $region106: #{model_forward.1} parent=1 // pred_check
      _
    $region107: #{model_forward.1} parent=1 // pred_check_branch
      %164 = sbr.rel (0) target = $region109
    $region108: #{model_forward.1} parent=1 // pred_region
      _
    $region109: #{model_forward.1} parent=1 // pred_fallthru
      _
    // Predicated region
    $region110: #{model_forward.1} parent=1 // pred_check
      _
    $region111: #{model_forward.1} parent=1 // pred_check_branch
      %166 = sbr.rel (0) target = $region113
    $region112: #{model_forward.1} parent=1 // pred_region
      _
    $region113: #{model_forward.1} parent=1 // pred_fallthru
      _
    // Predicated region
    $region114: #{model_forward.1} parent=1 // pred_check
      _
    $region115: #{model_forward.1} parent=1 // pred_check_branch
      %168 = sbr.rel (0) target = $region117
    $region116: #{model_forward.1} parent=1 // pred_region
      _
    $region117: #{model_forward.1} parent=1 // pred_fallthru
      _
    // Predicated region
    $region118: #{model_forward.1} parent=1 // pred_check
      _
    $region119: #{model_forward.1} parent=1 // pred_check_branch
      %170 = sbr.rel (0) target = $region121
    $region120: #{model_forward.1} parent=1 // pred_region
      _
    $region121: #{model_forward.1} parent=1 // pred_fallthru
      _
    // Predicated region
    $region122: #{model_forward.1} parent=1 // pred_check
      _
    $region123: #{model_forward.1} parent=1 // pred_check_branch
      %172 = sbr.rel (0) target = $region125
    $region124: #{model_forward.1} parent=1 // pred_region
      _
    $region125: #{model_forward.1} parent=1 // pred_fallthru
      _
    // Predicated region
    $region126: #{model_forward.1} parent=1 // pred_check
      _
    $region127: #{model_forward.1} parent=1 // pred_check_branch
      %174 = sbr.rel (0) target = $region129
    $region128: #{model_forward.1} parent=1 // pred_region
      _
    $region129: #{model_forward.1} parent=1 // pred_fallthru
      _
    // Predicated region
    $region130: #{model_forward.1} parent=1 // pred_check
      _
    $region131: #{model_forward.1} parent=1 // pred_check_branch
      %176 = sbr.rel (0) target = $region133
    $region132: #{model_forward.1} parent=1 // pred_region
      _
    $region133: #{model_forward.1} parent=1 // pred_fallthru
      _
    // Predicated region
    $region134: #{model_forward.1} parent=1 // pred_check
      _
    $region135: #{model_forward.1} parent=1 // pred_check_branch
      %178 = sbr.rel (0) target = $region137
    $region136: #{model_forward.1} parent=1 // pred_region
      _
    $region137: #{model_forward.1} parent=1 // pred_fallthru
      _
    // Predicated region
    $region138: #{model_forward.1} parent=1 // pred_check
      _
    $region139: #{model_forward.1} parent=1 // pred_check_branch
      %180 = sbr.rel (0) target = $region141
    $region140: #{model_forward.1} parent=1 // pred_region
      _
    $region141: #{model_forward.1} parent=1 // pred_fallthru
      _
    // Predicated region
    $region142: #{model_forward.1} parent=1 // pred_check
      _
    $region143: #{model_forward.1} parent=1 // pred_check_branch
      %182 = sbr.rel (0) target = $region145
    $region144: #{model_forward.1} parent=1 // pred_region
      %s184 = ssub.s32 16, 16
      %185 = vsyncadd [#allocation3], %s184
      %s187 = sshll.u32 [#allocation2], 4
      %s188 = int_to_ptr.vmem [resolvable:$true] %s187
      %190 = dma.hbm_to_vmem [thread:$0]  %s71, 16, %s188, [#allocation3]
    $region145: #{model_forward.1} parent=1 // pred_fallthru
      _
    // Predicated region
    $region146: #{model_forward.1} parent=1 // pred_check
      _
    $region147: #{model_forward.1} parent=1 // pred_check_branch
      %192 = sbr.rel (0) target = $region149
    $region148: #{model_forward.1} parent=1 // pred_region
      _
    $region149: #{model_forward.1} parent=1 // pred_fallthru
      _
    // Predicated region
    $region150: #{model_forward.1} parent=1 // pred_check
      _
    $region151: #{model_forward.1} parent=1 // pred_check_branch
      %194 = sbr.rel (0) target = $region153
    $region152: #{model_forward.1} parent=1 // pred_region
      %s196 = ssub.s32 16, 16
      %197 = vsyncadd [#allocation5], %s196
      %s199 = sshll.u32 [#allocation4], 4
      %s200 = int_to_ptr.vmem [resolvable:$true] %s199
      %202 = dma.hbm_to_vmem [thread:$0]  %s75, 16, %s200, [#allocation5]
    $region153: #{model_forward.1} parent=1 // pred_fallthru
      _
    // Predicated region
    $region154: #{model_forward.1} parent=1 // pred_check
      _
    $region155: #{model_forward.1} parent=1 // pred_check_branch
      %204 = sbr.rel (0) target = $region157
    $region156: #{model_forward.1} parent=1 // pred_region
      _
    $region157: #{model_forward.1} parent=1 // pred_fallthru
      _
    // Predicated region
    $region158: #{model_forward.1} parent=1 // pred_check
      _
    $region159: #{model_forward.1} parent=1 // pred_check_branch
      %206 = sbr.rel (0) target = $region161
    $region160: #{model_forward.1} parent=1 // pred_region
      %s208 = ssub.s32 16, 16
      %209 = vsyncadd [#allocation5], %s208
      %s211 = sshll.u32 [#allocation6], 4
      %s212 = int_to_ptr.vmem [resolvable:$true] %s211
      %214 = dma.hbm_to_vmem [thread:$0]  %s79, 16, %s212, [#allocation5]
    $region161: #{model_forward.1} parent=1 // pred_fallthru
      _
    // Predicated region
    $region162: #{model_forward.1} parent=1 // pred_check
      _
    $region163: #{model_forward.1} parent=1 // pred_check_branch
      %216 = sbr.rel (0) target = $region165
    $region164: #{model_forward.1} parent=1 // pred_region
      _
    $region165: #{model_forward.1} parent=1 // pred_fallthru
      _
    // Predicated region
    $region166: #{model_forward.1} parent=1 // pred_check
      _
    $region167: #{model_forward.1} parent=1 // pred_check_branch
      %218 = sbr.rel (0) target = $region169
    $region168: #{model_forward.1} parent=1 // pred_region
      %s220 = ssub.s32 16, 16
      %221 = vsyncadd [#allocation8], %s220
      %s223 = sshll.u32 [#allocation7], 4
      %s224 = int_to_ptr.vmem [resolvable:$true] %s223
      %226 = dma.hbm_to_vmem [thread:$0]  %s83, 16, %s224, [#allocation8]
    $region169: #{model_forward.1} parent=1 // pred_fallthru
      _
    // Predicated region
    $region170: #{model_forward.1} parent=1 // pred_check
      _
    $region171: #{model_forward.1} parent=1 // pred_check_branch
      %228 = sbr.rel (0) target = $region173
    $region172: #{model_forward.1} parent=1 // pred_region
      _
    $region173: #{model_forward.1} parent=1 // pred_fallthru
      _
    // Predicated region
    $region174: #{model_forward.1} parent=1 // pred_check
      _
    $region175: #{model_forward.1} parent=1 // pred_check_branch
      %230 = sbr.rel (0) target = $region177
    $region176: #{model_forward.1} parent=1 // pred_region
      %s232 = ssub.s32 16, 16
      %233 = vsyncadd [#allocation8], %s232
      %s235 = sshll.u32 [#allocation9], 4
      %s236 = int_to_ptr.vmem [resolvable:$true] %s235
      %238 = dma.hbm_to_vmem [thread:$0]  %s87, 16, %s236, [#allocation8]
    $region177: #{model_forward.1} parent=1 // pred_fallthru
      _
    // Predicated region
    $region178: #{model_forward.1} parent=1 // pred_check
      _
    $region179: #{model_forward.1} parent=1 // pred_check_branch
      %240 = sbr.rel (0) target = $region181
    $region180: #{model_forward.1} parent=1 // pred_region
      _
    $region181: #{model_forward.1} parent=1 // pred_fallthru
      _
    // Predicated region
    $region182: #{model_forward.1} parent=1 // pred_check
      _
    $region183: #{model_forward.1} parent=1 // pred_check_branch
      %242 = sbr.rel (0) target = $region185
    $region184: #{model_forward.1} parent=1 // pred_region
      %s244 = ssub.s32 16, 16
      %245 = vsyncadd [#allocation11], %s244
      %s247 = sshll.u32 [#allocation10], 4
      %s248 = int_to_ptr.vmem [resolvable:$true] %s247
      %250 = dma.hbm_to_vmem [thread:$0]  %s91, 16, %s248, [#allocation11]
    $region185: #{model_forward.1} parent=1 // pred_fallthru
      _
    // Predicated region
    $region186: #{model_forward.1} parent=1 // pred_check
      _
    $region187: #{model_forward.1} parent=1 // pred_check_branch
      %252 = sbr.rel (0) target = $region189
    $region188: #{model_forward.1} parent=1 // pred_region
      _
    $region189: #{model_forward.1} parent=1 // pred_fallthru
      _
    // Predicated region
    $region190: #{model_forward.1} parent=1 // pred_check
      _
    $region191: #{model_forward.1} parent=1 // pred_check_branch
      %254 = sbr.rel (0) target = $region193
    $region192: #{model_forward.1} parent=1 // pred_region
      %s256 = ssub.s32 16, 16
      %257 = vsyncadd [#allocation11], %s256
      %s259 = sshll.u32 [#allocation12], 4
      %s260 = int_to_ptr.vmem [resolvable:$true] %s259
      %262 = dma.hbm_to_vmem [thread:$0]  %s95, 16, %s260, [#allocation11]
    $region193: #{model_forward.1} parent=1 // pred_fallthru
      _
    // Predicated region
    $region194: #{model_forward.1} parent=1 // pred_check
      _
    $region195: #{model_forward.1} parent=1 // pred_check_branch
      %264 = sbr.rel (0) target = $region197
    $region196: #{model_forward.1} parent=1 // pred_region
      _
    $region197: #{model_forward.1} parent=1 // pred_fallthru
      _
    // Predicated region
    $region198: #{model_forward.1} parent=1 // pred_check
      _
    $region199: #{model_forward.1} parent=1 // pred_check_branch
      %266 = sbr.rel (0) target = $region201
    $region200: #{model_forward.1} parent=1 // pred_region
      %s268 = ssub.s32 16, 16
      %269 = vsyncadd [#allocation14], %s268
      %s271 = sshll.u32 [#allocation13], 4
      %s272 = int_to_ptr.vmem [resolvable:$true] %s271
      %274 = dma.hbm_to_vmem [thread:$0]  %s99, 16, %s272, [#allocation14]
    $region201: #{model_forward.1} parent=1 // pred_fallthru
      _
    // Predicated region
    $region202: #{model_forward.1} parent=1 // pred_check
      _
    $region203: #{model_forward.1} parent=1 // pred_check_branch
      %276 = sbr.rel (0) target = $region205
    $region204: #{model_forward.1} parent=1 // pred_region
      %277 = dma.done [#allocation3], 16
    $region205: #{model_forward.1} parent=1 // pred_fallthru
      _
    // Predicated region
    $region206: #{model_forward.1} parent=1 // pred_check
      _
    $region207: #{model_forward.1} parent=1 // pred_check_branch
      %279 = sbr.rel (0) target = $region209
    $region208: #{model_forward.1} parent=1 // pred_region
      %280 = dma.done [#allocation5], 16
    $region209: #{model_forward.1} parent=1 // pred_fallthru
      _
    // Predicated region
    $region210: #{model_forward.1} parent=1 // pred_check
      _
    $region211: #{model_forward.1} parent=1 // pred_check_branch
      %282 = sbr.rel (0) target = $region213
    $region212: #{model_forward.1} parent=1 // pred_region
      %283 = dma.done [#allocation5], 16
    $region213: #{model_forward.1} parent=1 // pred_fallthru
      _
    // Predicated region
    $region214: #{model_forward.1} parent=1 // pred_check
      _
    $region215: #{model_forward.1} parent=1 // pred_check_branch
      %285 = sbr.rel (0) target = $region217
    $region216: #{model_forward.1} parent=1 // pred_region
      %286 = dma.done [#allocation8], 16
    $region217: #{model_forward.1} parent=1 // pred_fallthru
      _
    // Predicated region
    $region218: #{model_forward.1} parent=1 // pred_check
      _
    $region219: #{model_forward.1} parent=1 // pred_check_branch
      %288 = sbr.rel (0) target = $region221
    $region220: #{model_forward.1} parent=1 // pred_region
      %289 = dma.done [#allocation8], 16
    $region221: #{model_forward.1} parent=1 // pred_fallthru
      _
    // Predicated region
    $region222: #{model_forward.1} parent=1 // pred_check
      _
    $region223: #{model_forward.1} parent=1 // pred_check_branch
      %291 = sbr.rel (0) target = $region225
    $region224: #{model_forward.1} parent=1 // pred_region
      %292 = dma.done [#allocation11], 16
    $region225: #{model_forward.1} parent=1 // pred_fallthru
      _
    // Predicated region
    $region226: #{model_forward.1} parent=1 // pred_check
      _
    $region227: #{model_forward.1} parent=1 // pred_check_branch
      %294 = sbr.rel (0) target = $region229
    $region228: #{model_forward.1} parent=1 // pred_region
      %295 = dma.done [#allocation11], 16
    $region229: #{model_forward.1} parent=1 // pred_fallthru
      _
    // Predicated region
    $region230: #{model_forward.1} parent=1 // pred_check
      _
    $region231: #{model_forward.1} parent=1 // pred_check_branch
      %297 = sbr.rel (0) target = $region233
    $region232: #{model_forward.1} parent=1 // pred_region
      %298 = dma.done [#allocation14], 16
    $region233: #{model_forward.1} parent=1 // pred_fallthru
      _
    %v299 = vld [vmem:[%s1] sm:$0x3]
    %v300 = vld [vmem:[%s3] sm:$0x3]
    %v301 = vld [vmem:[%s5] sm:$0xff]
    %v302 = vld [vmem:[%s5 + $0x8] sm:$0xff]
    %v303 = vld [vmem:[%s5 + $0x10] sm:$0xff]
    %v304 = vld [vmem:[%s5 + $0x18] sm:$0xff]
    %v305 = vld [vmem:[%s5 + $0x20] sm:$0xff]
    %v306 = vld [vmem:[%s5 + $0x28] sm:$0xff]
    %v307 = vld [vmem:[%s5 + $0x30] sm:$0xff]
    %v308 = vld [vmem:[%s5 + $0x38] sm:$0xff]
    %v309 = vld [vmem:[%s7] sm:$0x1]
    %v311 = vlaneseq
    %v312 = vshrl.u32 %v311, 7
    %v313 = vsub.s32 0, %v312
    %v314 = vrot.slane %v309, %v313
    %vm316 = vcmask 523264
    %v318 = vsel %vm316, %v299, 0
    %320 = vmatprep.subr.mxu0 0.0
    %321 = vmatpush1.msra.mxu0 %v301
    %322 = vmatprep.subr.mxu0 0.0
    %323 = vmatpush1.msra.mxu0 %v302
    %324 = vmatprep.subr.mxu0 0.0
    %325 = vmatpush1.msra.mxu0 %v303
    %326 = vmatprep.subr.mxu0 0.0
    %327 = vmatpush1.msra.mxu0 %v304
    %328 = vmatprep.subr.mxu0 0.0
    %329 = vmatpush1.msra.mxu0 %v305
    %330 = vmatprep.subr.mxu0 0.0
    %331 = vmatpush1.msra.mxu0 %v306
    %332 = vmatprep.subr.mxu0 0.0
    %333 = vmatpush1.msra.mxu0 %v307
    %334 = vmatprep.subr.mxu0 0.0
    %335 = vmatpush1.msra.mxu0 %v308
    %336 = vmatprep.subr.mxu0 0.0
    %337 = vmatpush1.msra.mxu0 0.0
    %338 = vmatprep.subr.mxu0 0.0
    %339 = vmatpush1.msra.mxu0 0.0
    %340 = vmatprep.subr.mxu0 0.0
    %341 = vmatpush1.msra.mxu0 0.0
    %342 = vmatprep.subr.mxu0 0.0
    %343 = vmatpush1.msra.mxu0 0.0
    %344 = vmatprep.subr.mxu0 0.0
    %345 = vmatpush1.msra.mxu0 0.0
    %346 = vmatprep.subr.mxu0 0.0
    %347 = vmatpush1.msra.mxu0 0.0
    %348 = vmatprep.subr.mxu0 0.0
    %349 = vmatpush1.msra.mxu0 0.0
    %350 = vmatprep.subr.mxu0 0.0
    %351 = vmatpush1.msra.mxu0 0.0
    %352 = vmatprep.subr.mxu0 0.0
    %353 = vmatpush1.msra.mxu0 0.0
    %354 = vmatprep.subr.mxu0 0.0
    %355 = vmatpush1.msra.mxu0 0.0
    %356 = vmatprep.subr.mxu0 0.0
    %357 = vmatpush1.msra.mxu0 0.0
    %358 = vmatprep.subr.mxu0 0.0
    %359 = vmatpush1.msra.mxu0 0.0
    %360 = vmatprep.subr.mxu0 0.0
    %361 = vmatpush1.msra.mxu0 0.0
    %362 = vmatprep.subr.mxu0 0.0
    %363 = vmatpush1.msra.mxu0 0.0
    %364 = vmatprep.subr.mxu0 0.0
    %365 = vmatpush1.msra.mxu0 0.0
    %366 = vmatprep.subr.mxu0 0.0
    %367 = vmatpush1.msra.mxu0 0.0
    %368 = vmatprep.subr.mxu0 0.0
    %369 = vmatpush1.msra.mxu0 0.0
    %370 = vmatprep.subr.mxu0 0.0
    %371 = vmatpush1.msra.mxu0 0.0
    %372 = vmatprep.subr.mxu0 0.0
    %373 = vmatpush1.msra.mxu0 0.0
    %374 = vmatprep.subr.mxu0 0.0
    %375 = vmatpush1.msra.mxu0 0.0
    %376 = vmatprep.subr.mxu0 0.0
    %377 = vmatpush1.msra.mxu0 0.0
    %378 = vmatprep.subr.mxu0 0.0
    %379 = vmatpush1.msra.mxu0 0.0
    %380 = vmatprep.subr.mxu0 0.0
    %381 = vmatpush1.msra.mxu0 0.0
    %382 = vmatprep.subr.mxu0 0.0
    %383 = vmatpush1.msra.mxu0 0.0
    %384 = vmatprep.mubr.f32.mxu0 0.0
    %385 = vmatmul.mubr.f32.gmra.mrb[0].mxu0 %v318
    %v386 = vpop.f32.mrb[0].mxu0
    %v387 = vadd.f32 %v314, %v386
    %v388 = vpop.f32.mrb[0].mxu0
    %389 = vdwg.mxu0
    %v390 = vmax.f32 %v387, 0.0
    %v391 = vld [vmem:[%s9] sm:$0xff]
    %v392 = vld [vmem:[%s9 + $0x8] sm:$0xff]
    %v393 = vld [vmem:[%s9 + $0x10] sm:$0xff]
    %v394 = vld [vmem:[%s9 + $0x18] sm:$0xff]
    %v395 = vld [vmem:[%s11] sm:$0x1]
    %v397 = vlaneseq
    %v398 = vshrl.u32 %v397, 7
    %v399 = vsub.s32 0, %v398
    %v400 = vrot.slane %v395, %v399
    %vm402 = vcmask 261120
    %v404 = vsel %vm402, %v390, 0
    %406 = vmatprep.subr.mxu0 0.0
    %407 = vmatpush1.msra.mxu0 %v391
    %408 = vmatprep.subr.mxu0 0.0
    %409 = vmatpush1.msra.mxu0 %v392
    %410 = vmatprep.subr.mxu0 0.0
    %411 = vmatpush1.msra.mxu0 %v393
    %412 = vmatprep.subr.mxu0 0.0
    %413 = vmatpush1.msra.mxu0 %v394
    %414 = vmatprep.subr.mxu0 0.0
    %415 = vmatpush1.msra.mxu0 0.0
    %416 = vmatprep.subr.mxu0 0.0
    %417 = vmatpush1.msra.mxu0 0.0
    %418 = vmatprep.subr.mxu0 0.0
    %419 = vmatpush1.msra.mxu0 0.0
    %420 = vmatprep.subr.mxu0 0.0
    %421 = vmatpush1.msra.mxu0 0.0
    %422 = vmatprep.subr.mxu0 0.0
    %423 = vmatpush1.msra.mxu0 0.0
    %424 = vmatprep.subr.mxu0 0.0
    %425 = vmatpush1.msra.mxu0 0.0
    %426 = vmatprep.subr.mxu0 0.0
    %427 = vmatpush1.msra.mxu0 0.0
    %428 = vmatprep.subr.mxu0 0.0
    %429 = vmatpush1.msra.mxu0 0.0
    %430 = vmatprep.subr.mxu0 0.0
    %431 = vmatpush1.msra.mxu0 0.0
    %432 = vmatprep.subr.mxu0 0.0
    %433 = vmatpush1.msra.mxu0 0.0
    %434 = vmatprep.subr.mxu0 0.0
    %435 = vmatpush1.msra.mxu0 0.0
    %436 = vmatprep.subr.mxu0 0.0
    %437 = vmatpush1.msra.mxu0 0.0
    %438 = vmatprep.subr.mxu0 0.0
    %439 = vmatpush1.msra.mxu0 0.0
    %440 = vmatprep.subr.mxu0 0.0
    %441 = vmatpush1.msra.mxu0 0.0
    %442 = vmatprep.subr.mxu0 0.0
    %443 = vmatpush1.msra.mxu0 0.0
    %444 = vmatprep.subr.mxu0 0.0
    %445 = vmatpush1.msra.mxu0 0.0
    %446 = vmatprep.subr.mxu0 0.0
    %447 = vmatpush1.msra.mxu0 0.0
    %448 = vmatprep.subr.mxu0 0.0
    %449 = vmatpush1.msra.mxu0 0.0
    %450 = vmatprep.subr.mxu0 0.0
    %451 = vmatpush1.msra.mxu0 0.0
    %452 = vmatprep.subr.mxu0 0.0
    %453 = vmatpush1.msra.mxu0 0.0
    %454 = vmatprep.subr.mxu0 0.0
    %455 = vmatpush1.msra.mxu0 0.0
    %456 = vmatprep.subr.mxu0 0.0
    %457 = vmatpush1.msra.mxu0 0.0
    %458 = vmatprep.subr.mxu0 0.0
    %459 = vmatpush1.msra.mxu0 0.0
    %460 = vmatprep.subr.mxu0 0.0
    %461 = vmatpush1.msra.mxu0 0.0
    %462 = vmatprep.subr.mxu0 0.0
    %463 = vmatpush1.msra.mxu0 0.0
    %464 = vmatprep.subr.mxu0 0.0
    %465 = vmatpush1.msra.mxu0 0.0
    %466 = vmatprep.subr.mxu0 0.0
    %467 = vmatpush1.msra.mxu0 0.0
    %468 = vmatprep.subr.mxu0 0.0
    %469 = vmatpush1.msra.mxu0 0.0
    %470 = vmatprep.mubr.f32.mxu0 0.0
    %471 = vmatmul.mubr.f32.gmra.mrb[0].mxu0 %v404
    %v472 = vpop.f32.mrb[0].mxu0
    %v473 = vadd.f32 %v400, %v472
    %v474 = vpop.f32.mrb[0].mxu0
    %475 = vdwg.mxu0
    %v476 = vmax.f32 %v473, 0.0
    %v477 = vld [vmem:[%s13] sm:$0xff]
    %v478 = vld [vmem:[%s13 + $0x8] sm:$0xff]
    %v479 = vld [vmem:[%s13 + $0x10] sm:$0xff]
    %v480 = vld [vmem:[%s13 + $0x18] sm:$0xff]
    %v481 = vld [vmem:[%s15] sm:$0x1]
    %v483 = vlaneseq
    %v484 = vshrl.u32 %v483, 7
    %v485 = vsub.s32 0, %v484
    %v486 = vrot.slane %v481, %v485
    %v489 = vsel %vm402, %v476, 0
    %491 = vmatprep.subr.mxu0 0.0
    %492 = vmatpush1.msra.mxu0 %v477
    %493 = vmatprep.subr.mxu0 0.0
    %494 = vmatpush1.msra.mxu0 %v478
    %495 = vmatprep.subr.mxu0 0.0
    %496 = vmatpush1.msra.mxu0 %v479
    %497 = vmatprep.subr.mxu0 0.0
    %498 = vmatpush1.msra.mxu0 %v480
    %499 = vmatprep.subr.mxu0 0.0
    %500 = vmatpush1.msra.mxu0 0.0
    %501 = vmatprep.subr.mxu0 0.0
    %502 = vmatpush1.msra.mxu0 0.0
    %503 = vmatprep.subr.mxu0 0.0
    %504 = vmatpush1.msra.mxu0 0.0
    %505 = vmatprep.subr.mxu0 0.0
    %506 = vmatpush1.msra.mxu0 0.0
    %507 = vmatprep.subr.mxu0 0.0
    %508 = vmatpush1.msra.mxu0 0.0
    %509 = vmatprep.subr.mxu0 0.0
    %510 = vmatpush1.msra.mxu0 0.0
    %511 = vmatprep.subr.mxu0 0.0
    %512 = vmatpush1.msra.mxu0 0.0
    %513 = vmatprep.subr.mxu0 0.0
    %514 = vmatpush1.msra.mxu0 0.0
    %515 = vmatprep.subr.mxu0 0.0
    %516 = vmatpush1.msra.mxu0 0.0
    %517 = vmatprep.subr.mxu0 0.0
    %518 = vmatpush1.msra.mxu0 0.0
    %519 = vmatprep.subr.mxu0 0.0
    %520 = vmatpush1.msra.mxu0 0.0
    %521 = vmatprep.subr.mxu0 0.0
    %522 = vmatpush1.msra.mxu0 0.0
    %523 = vmatprep.subr.mxu0 0.0
    %524 = vmatpush1.msra.mxu0 0.0
    %525 = vmatprep.subr.mxu0 0.0
    %526 = vmatpush1.msra.mxu0 0.0
    %527 = vmatprep.subr.mxu0 0.0
    %528 = vmatpush1.msra.mxu0 0.0
    %529 = vmatprep.subr.mxu0 0.0
    %530 = vmatpush1.msra.mxu0 0.0
    %531 = vmatprep.subr.mxu0 0.0
    %532 = vmatpush1.msra.mxu0 0.0
    %533 = vmatprep.subr.mxu0 0.0
    %534 = vmatpush1.msra.mxu0 0.0
    %535 = vmatprep.subr.mxu0 0.0
    %536 = vmatpush1.msra.mxu0 0.0
    %537 = vmatprep.subr.mxu0 0.0
    %538 = vmatpush1.msra.mxu0 0.0
    %539 = vmatprep.subr.mxu0 0.0
    %540 = vmatpush1.msra.mxu0 0.0
    %541 = vmatprep.subr.mxu0 0.0
    %542 = vmatpush1.msra.mxu0 0.0
    %543 = vmatprep.subr.mxu0 0.0
    %544 = vmatpush1.msra.mxu0 0.0
    %545 = vmatprep.subr.mxu0 0.0
    %546 = vmatpush1.msra.mxu0 0.0
    %547 = vmatprep.subr.mxu0 0.0
    %548 = vmatpush1.msra.mxu0 0.0
    %549 = vmatprep.subr.mxu0 0.0
    %550 = vmatpush1.msra.mxu0 0.0
    %551 = vmatprep.subr.mxu0 0.0
    %552 = vmatpush1.msra.mxu0 0.0
    %553 = vmatprep.subr.mxu0 0.0
    %554 = vmatpush1.msra.mxu0 0.0
    %555 = vmatprep.mubr.f32.mxu0 0.0
    %556 = vmatmul.mubr.f32.gmra.mrb[0].mxu0 %v489
    %v557 = vpop.f32.mrb[0].mxu0
    %v558 = vadd.f32 %v486, %v557
    %v559 = vpop.f32.mrb[0].mxu0
    %560 = vdwg.mxu0
    %v561 = vmax.f32 %v558, 0.0
    %v562 = vld [vmem:[%s17] sm:$0xff]
    %v563 = vld [vmem:[%s17 + $0x8] sm:$0xff]
    %v564 = vld [vmem:[%s17 + $0x10] sm:$0xff]
    %v565 = vld [vmem:[%s17 + $0x18] sm:$0xff]
    %v566 = vld [vmem:[%s19] sm:$0x1]
    %v568 = vlaneseq
    %v569 = vshrl.u32 %v568, 7
    %v570 = vsub.s32 0, %v569
    %v571 = vrot.slane %v566, %v570
    %v574 = vsel %vm402, %v561, 0
    %576 = vmatprep.subr.mxu0 0.0
    %577 = vmatpush1.msra.mxu0 %v562
    %578 = vmatprep.subr.mxu0 0.0
    %579 = vmatpush1.msra.mxu0 %v563
    %580 = vmatprep.subr.mxu0 0.0
    %581 = vmatpush1.msra.mxu0 %v564
    %582 = vmatprep.subr.mxu0 0.0
    %583 = vmatpush1.msra.mxu0 %v565
    %584 = vmatprep.subr.mxu0 0.0
    %585 = vmatpush1.msra.mxu0 0.0
    %586 = vmatprep.subr.mxu0 0.0
    %587 = vmatpush1.msra.mxu0 0.0
    %588 = vmatprep.subr.mxu0 0.0
    %589 = vmatpush1.msra.mxu0 0.0
    %590 = vmatprep.subr.mxu0 0.0
    %591 = vmatpush1.msra.mxu0 0.0
    %592 = vmatprep.subr.mxu0 0.0
    %593 = vmatpush1.msra.mxu0 0.0
    %594 = vmatprep.subr.mxu0 0.0
    %595 = vmatpush1.msra.mxu0 0.0
    %596 = vmatprep.subr.mxu0 0.0
    %597 = vmatpush1.msra.mxu0 0.0
    %598 = vmatprep.subr.mxu0 0.0
    %599 = vmatpush1.msra.mxu0 0.0
    %600 = vmatprep.subr.mxu0 0.0
    %601 = vmatpush1.msra.mxu0 0.0
    %602 = vmatprep.subr.mxu0 0.0
    %603 = vmatpush1.msra.mxu0 0.0
    %604 = vmatprep.subr.mxu0 0.0
    %605 = vmatpush1.msra.mxu0 0.0
    %606 = vmatprep.subr.mxu0 0.0
    %607 = vmatpush1.msra.mxu0 0.0
    %608 = vmatprep.subr.mxu0 0.0
    %609 = vmatpush1.msra.mxu0 0.0
    %610 = vmatprep.subr.mxu0 0.0
    %611 = vmatpush1.msra.mxu0 0.0
    %612 = vmatprep.subr.mxu0 0.0
    %613 = vmatpush1.msra.mxu0 0.0
    %614 = vmatprep.subr.mxu0 0.0
    %615 = vmatpush1.msra.mxu0 0.0
    %616 = vmatprep.subr.mxu0 0.0
    %617 = vmatpush1.msra.mxu0 0.0
    %618 = vmatprep.subr.mxu0 0.0
    %619 = vmatpush1.msra.mxu0 0.0
    %620 = vmatprep.subr.mxu0 0.0
    %621 = vmatpush1.msra.mxu0 0.0
    %622 = vmatprep.subr.mxu0 0.0
    %623 = vmatpush1.msra.mxu0 0.0
    %624 = vmatprep.subr.mxu0 0.0
    %625 = vmatpush1.msra.mxu0 0.0
    %626 = vmatprep.subr.mxu0 0.0
    %627 = vmatpush1.msra.mxu0 0.0
    %628 = vmatprep.subr.mxu0 0.0
    %629 = vmatpush1.msra.mxu0 0.0
    %630 = vmatprep.subr.mxu0 0.0
    %631 = vmatpush1.msra.mxu0 0.0
    %632 = vmatprep.subr.mxu0 0.0
    %633 = vmatpush1.msra.mxu0 0.0
    %634 = vmatprep.subr.mxu0 0.0
    %635 = vmatpush1.msra.mxu0 0.0
    %636 = vmatprep.subr.mxu0 0.0
    %637 = vmatpush1.msra.mxu0 0.0
    %638 = vmatprep.subr.mxu0 0.0
    %639 = vmatpush1.msra.mxu0 0.0
    %640 = vmatprep.mubr.f32.mxu0 0.0
    %641 = vmatmul.mubr.f32.gmra.mrb[0].mxu0 %v574
    %v642 = vpop.f32.mrb[0].mxu0
    %v643 = vadd.f32 %v571, %v642
    %v644 = vpop.f32.mrb[0].mxu0
    %645 = vdwg.mxu0
    %v646 = vmax.f32 %v643, 0.0
    %v647 = vld [vmem:[%s21] sm:$0xff]
    %v648 = vld [vmem:[%s21 + $0x8] sm:$0xff]
    %v649 = vld [vmem:[%s21 + $0x10] sm:$0xff]
    %v650 = vld [vmem:[%s21 + $0x18] sm:$0xff]
    %v651 = vld [vmem:[%s23] sm:$0x1]
    %v653 = vlaneseq
    %v654 = vshrl.u32 %v653, 7
    %v655 = vsub.s32 0, %v654
    %v656 = vrot.slane %v651, %v655
    %v659 = vsel %vm402, %v646, 0
    %661 = vmatprep.subr.mxu0 0.0
    %662 = vmatpush1.msra.mxu0 %v647
    %663 = vmatprep.subr.mxu0 0.0
    %664 = vmatpush1.msra.mxu0 %v648
    %665 = vmatprep.subr.mxu0 0.0
    %666 = vmatpush1.msra.mxu0 %v649
    %667 = vmatprep.subr.mxu0 0.0
    %668 = vmatpush1.msra.mxu0 %v650
    %669 = vmatprep.subr.mxu0 0.0
    %670 = vmatpush1.msra.mxu0 0.0
    %671 = vmatprep.subr.mxu0 0.0
    %672 = vmatpush1.msra.mxu0 0.0
    %673 = vmatprep.subr.mxu0 0.0
    %674 = vmatpush1.msra.mxu0 0.0
    %675 = vmatprep.subr.mxu0 0.0
    %676 = vmatpush1.msra.mxu0 0.0
    %677 = vmatprep.subr.mxu0 0.0
    %678 = vmatpush1.msra.mxu0 0.0
    %679 = vmatprep.subr.mxu0 0.0
    %680 = vmatpush1.msra.mxu0 0.0
    %681 = vmatprep.subr.mxu0 0.0
    %682 = vmatpush1.msra.mxu0 0.0
    %683 = vmatprep.subr.mxu0 0.0
    %684 = vmatpush1.msra.mxu0 0.0
    %685 = vmatprep.subr.mxu0 0.0
    %686 = vmatpush1.msra.mxu0 0.0
    %687 = vmatprep.subr.mxu0 0.0
    %688 = vmatpush1.msra.mxu0 0.0
    %689 = vmatprep.subr.mxu0 0.0
    %690 = vmatpush1.msra.mxu0 0.0
    %691 = vmatprep.subr.mxu0 0.0
    %692 = vmatpush1.msra.mxu0 0.0
    %693 = vmatprep.subr.mxu0 0.0
    %694 = vmatpush1.msra.mxu0 0.0
    %695 = vmatprep.subr.mxu0 0.0
    %696 = vmatpush1.msra.mxu0 0.0
    %697 = vmatprep.subr.mxu0 0.0
    %698 = vmatpush1.msra.mxu0 0.0
    %699 = vmatprep.subr.mxu0 0.0
    %700 = vmatpush1.msra.mxu0 0.0
    %701 = vmatprep.subr.mxu0 0.0
    %702 = vmatpush1.msra.mxu0 0.0
    %703 = vmatprep.subr.mxu0 0.0
    %704 = vmatpush1.msra.mxu0 0.0
    %705 = vmatprep.subr.mxu0 0.0
    %706 = vmatpush1.msra.mxu0 0.0
    %707 = vmatprep.subr.mxu0 0.0
    %708 = vmatpush1.msra.mxu0 0.0
    %709 = vmatprep.subr.mxu0 0.0
    %710 = vmatpush1.msra.mxu0 0.0
    %711 = vmatprep.subr.mxu0 0.0
    %712 = vmatpush1.msra.mxu0 0.0
    %713 = vmatprep.subr.mxu0 0.0
    %714 = vmatpush1.msra.mxu0 0.0
    %715 = vmatprep.subr.mxu0 0.0
    %716 = vmatpush1.msra.mxu0 0.0
    %717 = vmatprep.subr.mxu0 0.0
    %718 = vmatpush1.msra.mxu0 0.0
    %719 = vmatprep.subr.mxu0 0.0
    %720 = vmatpush1.msra.mxu0 0.0
    %721 = vmatprep.subr.mxu0 0.0
    %722 = vmatpush1.msra.mxu0 0.0
    %723 = vmatprep.subr.mxu0 0.0
    %724 = vmatpush1.msra.mxu0 0.0
    %725 = vmatprep.mubr.f32.mxu0 0.0
    %726 = vmatmul.mubr.f32.gmra.mrb[0].mxu0 %v659
    %v727 = vpop.f32.mrb[0].mxu0
    %v728 = vadd.f32 %v656, %v727
    %v729 = vpop.f32.mrb[0].mxu0
    %730 = vdwg.mxu0
    %v731 = vmax.f32 %v728, 0.0
    %v732 = vld [vmem:[%s25] sm:$0xff]
    %v733 = vld [vmem:[%s25 + $0x8] sm:$0xff]
    %v734 = vld [vmem:[%s25 + $0x10] sm:$0xff]
    %v735 = vld [vmem:[%s25 + $0x18] sm:$0xff]
    %v736 = vld [vmem:[%s27] sm:$0x1]
    %v738 = vlaneseq
    %v739 = vshrl.u32 %v738, 7
    %v740 = vsub.s32 0, %v739
    %v741 = vrot.slane %v736, %v740
    %v744 = vsel %vm402, %v731, 0
    %746 = vmatprep.subr.mxu0 0.0
    %747 = vmatpush1.msra.mxu0 %v732
    %748 = vmatprep.subr.mxu0 0.0
    %749 = vmatpush1.msra.mxu0 %v733
    %750 = vmatprep.subr.mxu0 0.0
    %751 = vmatpush1.msra.mxu0 %v734
    %752 = vmatprep.subr.mxu0 0.0
    %753 = vmatpush1.msra.mxu0 %v735
    %754 = vmatprep.subr.mxu0 0.0
    %755 = vmatpush1.msra.mxu0 0.0
    %756 = vmatprep.subr.mxu0 0.0
    %757 = vmatpush1.msra.mxu0 0.0
    %758 = vmatprep.subr.mxu0 0.0
    %759 = vmatpush1.msra.mxu0 0.0
    %760 = vmatprep.subr.mxu0 0.0
    %761 = vmatpush1.msra.mxu0 0.0
    %762 = vmatprep.subr.mxu0 0.0
    %763 = vmatpush1.msra.mxu0 0.0
    %764 = vmatprep.subr.mxu0 0.0
    %765 = vmatpush1.msra.mxu0 0.0
    %766 = vmatprep.subr.mxu0 0.0
    %767 = vmatpush1.msra.mxu0 0.0
    %768 = vmatprep.subr.mxu0 0.0
    %769 = vmatpush1.msra.mxu0 0.0
    %770 = vmatprep.subr.mxu0 0.0
    %771 = vmatpush1.msra.mxu0 0.0
    %772 = vmatprep.subr.mxu0 0.0
    %773 = vmatpush1.msra.mxu0 0.0
    %774 = vmatprep.subr.mxu0 0.0
    %775 = vmatpush1.msra.mxu0 0.0
    %776 = vmatprep.subr.mxu0 0.0
    %777 = vmatpush1.msra.mxu0 0.0
    %778 = vmatprep.subr.mxu0 0.0
    %779 = vmatpush1.msra.mxu0 0.0
    %780 = vmatprep.subr.mxu0 0.0
    %781 = vmatpush1.msra.mxu0 0.0
    %782 = vmatprep.subr.mxu0 0.0
    %783 = vmatpush1.msra.mxu0 0.0
    %784 = vmatprep.subr.mxu0 0.0
    %785 = vmatpush1.msra.mxu0 0.0
    %786 = vmatprep.subr.mxu0 0.0
    %787 = vmatpush1.msra.mxu0 0.0
    %788 = vmatprep.subr.mxu0 0.0
    %789 = vmatpush1.msra.mxu0 0.0
    %790 = vmatprep.subr.mxu0 0.0
    %791 = vmatpush1.msra.mxu0 0.0
    %792 = vmatprep.subr.mxu0 0.0
    %793 = vmatpush1.msra.mxu0 0.0
    %794 = vmatprep.subr.mxu0 0.0
    %795 = vmatpush1.msra.mxu0 0.0
    %796 = vmatprep.subr.mxu0 0.0
    %797 = vmatpush1.msra.mxu0 0.0
    %798 = vmatprep.subr.mxu0 0.0
    %799 = vmatpush1.msra.mxu0 0.0
    %800 = vmatprep.subr.mxu0 0.0
    %801 = vmatpush1.msra.mxu0 0.0
    %802 = vmatprep.subr.mxu0 0.0
    %803 = vmatpush1.msra.mxu0 0.0
    %804 = vmatprep.subr.mxu0 0.0
    %805 = vmatpush1.msra.mxu0 0.0
    %806 = vmatprep.subr.mxu0 0.0
    %807 = vmatpush1.msra.mxu0 0.0
    %808 = vmatprep.subr.mxu0 0.0
    %809 = vmatpush1.msra.mxu0 0.0
    %810 = vmatprep.mubr.f32.mxu0 0.0
    %811 = vmatmul.mubr.f32.gmra.mrb[0].mxu0 %v744
    %v812 = vpop.f32.mrb[0].mxu0
    %v813 = vadd.f32 %v741, %v812
    %v814 = vpop.f32.mrb[0].mxu0
    %815 = vdwg.mxu0
    %v816 = vmax.f32 %v813, 0.0
    %v817 = vld [vmem:[%s29] sm:$0xff]
    %v818 = vld [vmem:[%s29 + $0x8] sm:$0xff]
    %v819 = vld [vmem:[%s29 + $0x10] sm:$0xff]
    %v820 = vld [vmem:[%s29 + $0x18] sm:$0xff]
    %v821 = vld [vmem:[%s31] sm:$0x1]
    %v823 = vlaneseq
    %v824 = vshrl.u32 %v823, 7
    %v825 = vsub.s32 0, %v824
    %v826 = vrot.slane %v821, %v825
    %v829 = vsel %vm402, %v816, 0
    %831 = vmatprep.subr.mxu0 0.0
    %832 = vmatpush1.msra.mxu0 %v817
    %833 = vmatprep.subr.mxu0 0.0
    %834 = vmatpush1.msra.mxu0 %v818
    %835 = vmatprep.subr.mxu0 0.0
    %836 = vmatpush1.msra.mxu0 %v819
    %837 = vmatprep.subr.mxu0 0.0
    %838 = vmatpush1.msra.mxu0 %v820
    %839 = vmatprep.subr.mxu0 0.0
    %840 = vmatpush1.msra.mxu0 0.0
    %841 = vmatprep.subr.mxu0 0.0
    %842 = vmatpush1.msra.mxu0 0.0
    %843 = vmatprep.subr.mxu0 0.0
    %844 = vmatpush1.msra.mxu0 0.0
    %845 = vmatprep.subr.mxu0 0.0
    %846 = vmatpush1.msra.mxu0 0.0
    %847 = vmatprep.subr.mxu0 0.0
    %848 = vmatpush1.msra.mxu0 0.0
    %849 = vmatprep.subr.mxu0 0.0
    %850 = vmatpush1.msra.mxu0 0.0
    %851 = vmatprep.subr.mxu0 0.0
    %852 = vmatpush1.msra.mxu0 0.0
    %853 = vmatprep.subr.mxu0 0.0
    %854 = vmatpush1.msra.mxu0 0.0
    %855 = vmatprep.subr.mxu0 0.0
    %856 = vmatpush1.msra.mxu0 0.0
    %857 = vmatprep.subr.mxu0 0.0
    %858 = vmatpush1.msra.mxu0 0.0
    %859 = vmatprep.subr.mxu0 0.0
    %860 = vmatpush1.msra.mxu0 0.0
    %861 = vmatprep.subr.mxu0 0.0
    %862 = vmatpush1.msra.mxu0 0.0
    %863 = vmatprep.subr.mxu0 0.0
    %864 = vmatpush1.msra.mxu0 0.0
    %865 = vmatprep.subr.mxu0 0.0
    %866 = vmatpush1.msra.mxu0 0.0
    %867 = vmatprep.subr.mxu0 0.0
    %868 = vmatpush1.msra.mxu0 0.0
    %869 = vmatprep.subr.mxu0 0.0
    %870 = vmatpush1.msra.mxu0 0.0
    %871 = vmatprep.subr.mxu0 0.0
    %872 = vmatpush1.msra.mxu0 0.0
    %873 = vmatprep.subr.mxu0 0.0
    %874 = vmatpush1.msra.mxu0 0.0
    %875 = vmatprep.subr.mxu0 0.0
    %876 = vmatpush1.msra.mxu0 0.0
    %877 = vmatprep.subr.mxu0 0.0
    %878 = vmatpush1.msra.mxu0 0.0
    %879 = vmatprep.subr.mxu0 0.0
    %880 = vmatpush1.msra.mxu0 0.0
    %881 = vmatprep.subr.mxu0 0.0
    %882 = vmatpush1.msra.mxu0 0.0
    %883 = vmatprep.subr.mxu0 0.0
    %884 = vmatpush1.msra.mxu0 0.0
    %885 = vmatprep.subr.mxu0 0.0
    %886 = vmatpush1.msra.mxu0 0.0
    %887 = vmatprep.subr.mxu0 0.0
    %888 = vmatpush1.msra.mxu0 0.0
    %889 = vmatprep.subr.mxu0 0.0
    %890 = vmatpush1.msra.mxu0 0.0
    %891 = vmatprep.subr.mxu0 0.0
    %892 = vmatpush1.msra.mxu0 0.0
    %893 = vmatprep.subr.mxu0 0.0
    %894 = vmatpush1.msra.mxu0 0.0
    %895 = vmatprep.mubr.f32.mxu0 0.0
    %896 = vmatmul.mubr.f32.gmra.mrb[0].mxu0 %v829
    %v897 = vpop.f32.mrb[0].mxu0
    %v898 = vadd.f32 %v826, %v897
    %v899 = vpop.f32.mrb[0].mxu0
    %900 = vdwg.mxu0
    %v901 = vmax.f32 %v898, 0.0
    %v902 = vld [vmem:[%s33] sm:$0xff]
    %v903 = vld [vmem:[%s33 + $0x8] sm:$0xff]
    %v904 = vld [vmem:[%s33 + $0x10] sm:$0xff]
    %v905 = vld [vmem:[%s33 + $0x18] sm:$0xff]
    %v906 = vld [vmem:[%s35] sm:$0x1]
    %v908 = vlaneseq
    %v909 = vshrl.u32 %v908, 7
    %v910 = vsub.s32 0, %v909
    %v911 = vrot.slane %v906, %v910
    %v914 = vsel %vm402, %v901, 0
    %916 = vmatprep.subr.mxu0 0.0
    %917 = vmatpush1.msra.mxu0 %v902
    %918 = vmatprep.subr.mxu0 0.0
    %919 = vmatpush1.msra.mxu0 %v903
    %920 = vmatprep.subr.mxu0 0.0
    %921 = vmatpush1.msra.mxu0 %v904
    %922 = vmatprep.subr.mxu0 0.0
    %923 = vmatpush1.msra.mxu0 %v905
    %924 = vmatprep.subr.mxu0 0.0
    %925 = vmatpush1.msra.mxu0 0.0
    %926 = vmatprep.subr.mxu0 0.0
    %927 = vmatpush1.msra.mxu0 0.0
    %928 = vmatprep.subr.mxu0 0.0
    %929 = vmatpush1.msra.mxu0 0.0
    %930 = vmatprep.subr.mxu0 0.0
    %931 = vmatpush1.msra.mxu0 0.0
    %932 = vmatprep.subr.mxu0 0.0
    %933 = vmatpush1.msra.mxu0 0.0
    %934 = vmatprep.subr.mxu0 0.0
    %935 = vmatpush1.msra.mxu0 0.0
    %936 = vmatprep.subr.mxu0 0.0
    %937 = vmatpush1.msra.mxu0 0.0
    %938 = vmatprep.subr.mxu0 0.0
    %939 = vmatpush1.msra.mxu0 0.0
    %940 = vmatprep.subr.mxu0 0.0
    %941 = vmatpush1.msra.mxu0 0.0
    %942 = vmatprep.subr.mxu0 0.0
    %943 = vmatpush1.msra.mxu0 0.0
    %944 = vmatprep.subr.mxu0 0.0
    %945 = vmatpush1.msra.mxu0 0.0
    %946 = vmatprep.subr.mxu0 0.0
    %947 = vmatpush1.msra.mxu0 0.0
    %948 = vmatprep.subr.mxu0 0.0
    %949 = vmatpush1.msra.mxu0 0.0
    %950 = vmatprep.subr.mxu0 0.0
    %951 = vmatpush1.msra.mxu0 0.0
    %952 = vmatprep.subr.mxu0 0.0
    %953 = vmatpush1.msra.mxu0 0.0
    %954 = vmatprep.subr.mxu0 0.0
    %955 = vmatpush1.msra.mxu0 0.0
    %956 = vmatprep.subr.mxu0 0.0
    %957 = vmatpush1.msra.mxu0 0.0
    %958 = vmatprep.subr.mxu0 0.0
    %959 = vmatpush1.msra.mxu0 0.0
    %960 = vmatprep.subr.mxu0 0.0
    %961 = vmatpush1.msra.mxu0 0.0
    %962 = vmatprep.subr.mxu0 0.0
    %963 = vmatpush1.msra.mxu0 0.0
    %964 = vmatprep.subr.mxu0 0.0
    %965 = vmatpush1.msra.mxu0 0.0
    %966 = vmatprep.subr.mxu0 0.0
    %967 = vmatpush1.msra.mxu0 0.0
    %968 = vmatprep.subr.mxu0 0.0
    %969 = vmatpush1.msra.mxu0 0.0
    %970 = vmatprep.subr.mxu0 0.0
    %971 = vmatpush1.msra.mxu0 0.0
    %972 = vmatprep.subr.mxu0 0.0
    %973 = vmatpush1.msra.mxu0 0.0
    %974 = vmatprep.subr.mxu0 0.0
    %975 = vmatpush1.msra.mxu0 0.0
    %976 = vmatprep.subr.mxu0 0.0
    %977 = vmatpush1.msra.mxu0 0.0
    %978 = vmatprep.subr.mxu0 0.0
    %979 = vmatpush1.msra.mxu0 0.0
    %980 = vmatprep.mubr.f32.mxu0 0.0
    %981 = vmatmul.mubr.f32.gmra.mrb[0].mxu0 %v914
    %v982 = vpop.f32.mrb[0].mxu0
    %v983 = vadd.f32 %v911, %v982
    %v984 = vpop.f32.mrb[0].mxu0
    %985 = vdwg.mxu0
    %v986 = vmax.f32 %v983, 0.0
    %v987 = vld [vmem:[%s37] sm:$0xff]
    %v988 = vld [vmem:[%s37 + $0x8] sm:$0xff]
    %v989 = vld [vmem:[%s37 + $0x10] sm:$0xff]
    %v990 = vld [vmem:[%s37 + $0x18] sm:$0xff]
    %v991 = vld [vmem:[%s39] sm:$0x1]
    %v993 = vlaneseq
    %v994 = vshrl.u32 %v993, 7
    %v995 = vsub.s32 0, %v994
    %v996 = vrot.slane %v991, %v995
    %v999 = vsel %vm402, %v986, 0
    %1001 = vmatprep.subr.mxu0 0.0
    %1002 = vmatpush1.msra.mxu0 %v987
    %1003 = vmatprep.subr.mxu0 0.0
    %1004 = vmatpush1.msra.mxu0 %v988
    %1005 = vmatprep.subr.mxu0 0.0
    %1006 = vmatpush1.msra.mxu0 %v989
    %1007 = vmatprep.subr.mxu0 0.0
    %1008 = vmatpush1.msra.mxu0 %v990
    %1009 = vmatprep.subr.mxu0 0.0
    %1010 = vmatpush1.msra.mxu0 0.0
    %1011 = vmatprep.subr.mxu0 0.0
    %1012 = vmatpush1.msra.mxu0 0.0
    %1013 = vmatprep.subr.mxu0 0.0
    %1014 = vmatpush1.msra.mxu0 0.0
    %1015 = vmatprep.subr.mxu0 0.0
    %1016 = vmatpush1.msra.mxu0 0.0
    %1017 = vmatprep.subr.mxu0 0.0
    %1018 = vmatpush1.msra.mxu0 0.0
    %1019 = vmatprep.subr.mxu0 0.0
    %1020 = vmatpush1.msra.mxu0 0.0
    %1021 = vmatprep.subr.mxu0 0.0
    %1022 = vmatpush1.msra.mxu0 0.0
    %1023 = vmatprep.subr.mxu0 0.0
    %1024 = vmatpush1.msra.mxu0 0.0
    %1025 = vmatprep.subr.mxu0 0.0
    %1026 = vmatpush1.msra.mxu0 0.0
    %1027 = vmatprep.subr.mxu0 0.0
    %1028 = vmatpush1.msra.mxu0 0.0
    %1029 = vmatprep.subr.mxu0 0.0
    %1030 = vmatpush1.msra.mxu0 0.0
    %1031 = vmatprep.subr.mxu0 0.0
    %1032 = vmatpush1.msra.mxu0 0.0
    %1033 = vmatprep.subr.mxu0 0.0
    %1034 = vmatpush1.msra.mxu0 0.0
    %1035 = vmatprep.subr.mxu0 0.0
    %1036 = vmatpush1.msra.mxu0 0.0
    %1037 = vmatprep.subr.mxu0 0.0
    %1038 = vmatpush1.msra.mxu0 0.0
    %1039 = vmatprep.subr.mxu0 0.0
    %1040 = vmatpush1.msra.mxu0 0.0
    %1041 = vmatprep.subr.mxu0 0.0
    %1042 = vmatpush1.msra.mxu0 0.0
    %1043 = vmatprep.subr.mxu0 0.0
    %1044 = vmatpush1.msra.mxu0 0.0
    %1045 = vmatprep.subr.mxu0 0.0
    %1046 = vmatpush1.msra.mxu0 0.0
    %1047 = vmatprep.subr.mxu0 0.0
    %1048 = vmatpush1.msra.mxu0 0.0
    %1049 = vmatprep.subr.mxu0 0.0
    %1050 = vmatpush1.msra.mxu0 0.0
    %1051 = vmatprep.subr.mxu0 0.0
    %1052 = vmatpush1.msra.mxu0 0.0
    %1053 = vmatprep.subr.mxu0 0.0
    %1054 = vmatpush1.msra.mxu0 0.0
    %1055 = vmatprep.subr.mxu0 0.0
    %1056 = vmatpush1.msra.mxu0 0.0
    %1057 = vmatprep.subr.mxu0 0.0
    %1058 = vmatpush1.msra.mxu0 0.0
    %1059 = vmatprep.subr.mxu0 0.0
    %1060 = vmatpush1.msra.mxu0 0.0
    %1061 = vmatprep.subr.mxu0 0.0
    %1062 = vmatpush1.msra.mxu0 0.0
    %1063 = vmatprep.subr.mxu0 0.0
    %1064 = vmatpush1.msra.mxu0 0.0
    %1065 = vmatprep.mubr.f32.mxu0 0.0
    %1066 = vmatmul.mubr.f32.gmra.mrb[0].mxu0 %v999
    %v1067 = vpop.f32.mrb[0].mxu0
    %v1068 = vadd.f32 %v996, %v1067
    %v1069 = vpop.f32.mrb[0].mxu0
    %1070 = vdwg.mxu0
    %vm1071 = vcmask 279552
    %v1072 = vsel %vm1071, %v1068, -inf
    %1073 = vmax.xlane.f32.xlu0 %v1072
    %v1074 = vpop.xlane.xlu0 %1073
    %v1075 = vsub.f32 %v1068, %v1074
    %v1076 = vmul.f32 %v1075, 1.442695
    %v1077 = vpow.pop %v1076
    %v1078 = vsel %vm1071, %v1077, 0.0
    %1079 = vadd.xlane.f32.xlu0 %v1078
    %v1080 = vpop.xlane.xlu0 %1079
    %v1081 = vlog2.pop %v1080
    %v1082 = vmul.f32 %v1081, 0.6931472
    %v1083 = vsub.f32 %v1075, %v1082
    %v1084 = vlaneseq
    %v1085 = vshrl.u32 %v1084, 7
    %v1086 = vsub.s32 0, %v1085
    %v1087 = vrot.slane %v299, %v1086
    %1089 = vbcast.lane.b32.xlu0 %v1087, 256
    %v1090 = vpop.permute.xlu0 %1089
    %s1092 = sor.u32 256, 8
    %1093 = vbcast.lane.b32.xlu0 %v1087, %s1092
    %v1094 = vpop.permute.xlu0 %1093
    %s1096 = sor.u32 256, 16
    %1097 = vbcast.lane.b32.xlu0 %v1087, %s1096
    %v1098 = vpop.permute.xlu0 %1097
    %s1100 = sor.u32 256, 24
    %1101 = vbcast.lane.b32.xlu0 %v1087, %s1100
    %v1102 = vpop.permute.xlu0 %1101
    %s1104 = sor.u32 256, 32
    %1105 = vbcast.lane.b32.xlu0 %v1087, %s1104
    %v1106 = vpop.permute.xlu0 %1105
    %s1108 = sor.u32 256, 40
    %1109 = vbcast.lane.b32.xlu0 %v1087, %s1108
    %v1110 = vpop.permute.xlu0 %1109
    %s1112 = sor.u32 256, 48
    %1113 = vbcast.lane.b32.xlu0 %v1087, %s1112
    %v1114 = vpop.permute.xlu0 %1113
    %v1115 = vlaneseq
    %v1116 = vshrl.u32 %v1115, 7
    %v1117 = vsub.s32 1, %v1116
    %v1118 = vrot.slane %v299, %v1117
    %1120 = vbcast.lane.b32.xlu0 %v1118, 256
    %v1121 = vpop.permute.xlu0 %1120
    %s1123 = sor.u32 256, 8
    %1124 = vbcast.lane.b32.xlu0 %v1118, %s1123
    %v1125 = vpop.permute.xlu0 %1124
    %s1127 = sor.u32 256, 16
    %1128 = vbcast.lane.b32.xlu0 %v1118, %s1127
    %v1129 = vpop.permute.xlu0 %1128
    %s1131 = sor.u32 256, 24
    %1132 = vbcast.lane.b32.xlu0 %v1118, %s1131
    %v1133 = vpop.permute.xlu0 %1132
    %s1135 = sor.u32 256, 32
    %1136 = vbcast.lane.b32.xlu0 %v1118, %s1135
    %v1137 = vpop.permute.xlu0 %1136
    %s1139 = sor.u32 256, 40
    %1140 = vbcast.lane.b32.xlu0 %v1118, %s1139
    %v1141 = vpop.permute.xlu0 %1140
    %s1143 = sor.u32 256, 48
    %1144 = vbcast.lane.b32.xlu0 %v1118, %s1143
    %v1145 = vpop.permute.xlu0 %1144
    %s1147 = sor.u32 256, 1
    %1148 = vbcast.lane.b32.xlu0 %v1087, %s1147
    %v1149 = vpop.permute.xlu0 %1148
    %s1151 = sor.u32 256, 9
    %1152 = vbcast.lane.b32.xlu0 %v1087, %s1151
    %v1153 = vpop.permute.xlu0 %1152
    %s1155 = sor.u32 256, 17
    %1156 = vbcast.lane.b32.xlu0 %v1087, %s1155
    %v1157 = vpop.permute.xlu0 %1156
    %s1159 = sor.u32 256, 25
    %1160 = vbcast.lane.b32.xlu0 %v1087, %s1159
    %v1161 = vpop.permute.xlu0 %1160
    %s1163 = sor.u32 256, 33
    %1164 = vbcast.lane.b32.xlu0 %v1087, %s1163
    %v1165 = vpop.permute.xlu0 %1164
    %s1167 = sor.u32 256, 41
    %1168 = vbcast.lane.b32.xlu0 %v1087, %s1167
    %v1169 = vpop.permute.xlu0 %1168
    %s1171 = sor.u32 256, 49
    %1172 = vbcast.lane.b32.xlu0 %v1087, %s1171
    %v1173 = vpop.permute.xlu0 %1172
    %s1175 = sor.u32 256, 1
    %1176 = vbcast.lane.b32.xlu0 %v1118, %s1175
    %v1177 = vpop.permute.xlu0 %1176
    %s1179 = sor.u32 256, 9
    %1180 = vbcast.lane.b32.xlu0 %v1118, %s1179
    %v1181 = vpop.permute.xlu0 %1180
    %s1183 = sor.u32 256, 17
    %1184 = vbcast.lane.b32.xlu0 %v1118, %s1183
    %v1185 = vpop.permute.xlu0 %1184
    %s1187 = sor.u32 256, 25
    %1188 = vbcast.lane.b32.xlu0 %v1118, %s1187
    %v1189 = vpop.permute.xlu0 %1188
    %s1191 = sor.u32 256, 33
    %1192 = vbcast.lane.b32.xlu0 %v1118, %s1191
    %v1193 = vpop.permute.xlu0 %1192
    %s1195 = sor.u32 256, 41
    %1196 = vbcast.lane.b32.xlu0 %v1118, %s1195
    %v1197 = vpop.permute.xlu0 %1196
    %s1199 = sor.u32 256, 49
    %1200 = vbcast.lane.b32.xlu0 %v1118, %s1199
    %v1201 = vpop.permute.xlu0 %1200
    %s1203 = sor.u32 256, 2
    %1204 = vbcast.lane.b32.xlu0 %v1087, %s1203
    %v1205 = vpop.permute.xlu0 %1204
    %s1207 = sor.u32 256, 10
    %1208 = vbcast.lane.b32.xlu0 %v1087, %s1207
    %v1209 = vpop.permute.xlu0 %1208
    %s1211 = sor.u32 256, 18
    %1212 = vbcast.lane.b32.xlu0 %v1087, %s1211
    %v1213 = vpop.permute.xlu0 %1212
    %s1215 = sor.u32 256, 26
    %1216 = vbcast.lane.b32.xlu0 %v1087, %s1215
    %v1217 = vpop.permute.xlu0 %1216
    %s1219 = sor.u32 256, 34
    %1220 = vbcast.lane.b32.xlu0 %v1087, %s1219
    %v1221 = vpop.permute.xlu0 %1220
    %s1223 = sor.u32 256, 42
    %1224 = vbcast.lane.b32.xlu0 %v1087, %s1223
    %v1225 = vpop.permute.xlu0 %1224
    %s1227 = sor.u32 256, 50
    %1228 = vbcast.lane.b32.xlu0 %v1087, %s1227
    %v1229 = vpop.permute.xlu0 %1228
    %s1231 = sor.u32 256, 2
    %1232 = vbcast.lane.b32.xlu0 %v1118, %s1231
    %v1233 = vpop.permute.xlu0 %1232
    %s1235 = sor.u32 256, 10
    %1236 = vbcast.lane.b32.xlu0 %v1118, %s1235
    %v1237 = vpop.permute.xlu0 %1236
    %s1239 = sor.u32 256, 18
    %1240 = vbcast.lane.b32.xlu0 %v1118, %s1239
    %v1241 = vpop.permute.xlu0 %1240
    %s1243 = sor.u32 256, 26
    %1244 = vbcast.lane.b32.xlu0 %v1118, %s1243
    %v1245 = vpop.permute.xlu0 %1244
    %s1247 = sor.u32 256, 34
    %1248 = vbcast.lane.b32.xlu0 %v1118, %s1247
    %v1249 = vpop.permute.xlu0 %1248
    %s1251 = sor.u32 256, 42
    %1252 = vbcast.lane.b32.xlu0 %v1118, %s1251
    %v1253 = vpop.permute.xlu0 %1252
    %s1255 = sor.u32 256, 50
    %1256 = vbcast.lane.b32.xlu0 %v1118, %s1255
    %v1257 = vpop.permute.xlu0 %1256
    %s1259 = sor.u32 256, 3
    %1260 = vbcast.lane.b32.xlu0 %v1087, %s1259
    %v1261 = vpop.permute.xlu0 %1260
    %s1263 = sor.u32 256, 11
    %1264 = vbcast.lane.b32.xlu0 %v1087, %s1263
    %v1265 = vpop.permute.xlu0 %1264
    %s1267 = sor.u32 256, 19
    %1268 = vbcast.lane.b32.xlu0 %v1087, %s1267
    %v1269 = vpop.permute.xlu0 %1268
    %s1271 = sor.u32 256, 27
    %1272 = vbcast.lane.b32.xlu0 %v1087, %s1271
    %v1273 = vpop.permute.xlu0 %1272
    %s1275 = sor.u32 256, 35
    %1276 = vbcast.lane.b32.xlu0 %v1087, %s1275
    %v1277 = vpop.permute.xlu0 %1276
    %s1279 = sor.u32 256, 43
    %1280 = vbcast.lane.b32.xlu0 %v1087, %s1279
    %v1281 = vpop.permute.xlu0 %1280
    %s1283 = sor.u32 256, 51
    %1284 = vbcast.lane.b32.xlu0 %v1087, %s1283
    %v1285 = vpop.permute.xlu0 %1284
    %s1287 = sor.u32 256, 3
    %1288 = vbcast.lane.b32.xlu0 %v1118, %s1287
    %v1289 = vpop.permute.xlu0 %1288
    %s1291 = sor.u32 256, 11
    %1292 = vbcast.lane.b32.xlu0 %v1118, %s1291
    %v1293 = vpop.permute.xlu0 %1292
    %s1295 = sor.u32 256, 19
    %1296 = vbcast.lane.b32.xlu0 %v1118, %s1295
    %v1297 = vpop.permute.xlu0 %1296
    %s1299 = sor.u32 256, 27
    %1300 = vbcast.lane.b32.xlu0 %v1118, %s1299
    %v1301 = vpop.permute.xlu0 %1300
    %s1303 = sor.u32 256, 35
    %1304 = vbcast.lane.b32.xlu0 %v1118, %s1303
    %v1305 = vpop.permute.xlu0 %1304
    %s1307 = sor.u32 256, 43
    %1308 = vbcast.lane.b32.xlu0 %v1118, %s1307
    %v1309 = vpop.permute.xlu0 %1308
    %s1311 = sor.u32 256, 51
    %1312 = vbcast.lane.b32.xlu0 %v1118, %s1311
    %v1313 = vpop.permute.xlu0 %1312
    %s1315 = sor.u32 256, 4
    %1316 = vbcast.lane.b32.xlu0 %v1087, %s1315
    %v1317 = vpop.permute.xlu0 %1316
    %s1319 = sor.u32 256, 12
    %1320 = vbcast.lane.b32.xlu0 %v1087, %s1319
    %v1321 = vpop.permute.xlu0 %1320
    %s1323 = sor.u32 256, 20
    %1324 = vbcast.lane.b32.xlu0 %v1087, %s1323
    %v1325 = vpop.permute.xlu0 %1324
    %s1327 = sor.u32 256, 28
    %1328 = vbcast.lane.b32.xlu0 %v1087, %s1327
    %v1329 = vpop.permute.xlu0 %1328
    %s1331 = sor.u32 256, 36
    %1332 = vbcast.lane.b32.xlu0 %v1087, %s1331
    %v1333 = vpop.permute.xlu0 %1332
    %s1335 = sor.u32 256, 44
    %1336 = vbcast.lane.b32.xlu0 %v1087, %s1335
    %v1337 = vpop.permute.xlu0 %1336
    %s1339 = sor.u32 256, 52
    %1340 = vbcast.lane.b32.xlu0 %v1087, %s1339
    %v1341 = vpop.permute.xlu0 %1340
    %s1343 = sor.u32 256, 4
    %1344 = vbcast.lane.b32.xlu0 %v1118, %s1343
    %v1345 = vpop.permute.xlu0 %1344
    %s1347 = sor.u32 256, 12
    %1348 = vbcast.lane.b32.xlu0 %v1118, %s1347
    %v1349 = vpop.permute.xlu0 %1348
    %s1351 = sor.u32 256, 20
    %1352 = vbcast.lane.b32.xlu0 %v1118, %s1351
    %v1353 = vpop.permute.xlu0 %1352
    %s1355 = sor.u32 256, 28
    %1356 = vbcast.lane.b32.xlu0 %v1118, %s1355
    %v1357 = vpop.permute.xlu0 %1356
    %s1359 = sor.u32 256, 36
    %1360 = vbcast.lane.b32.xlu0 %v1118, %s1359
    %v1361 = vpop.permute.xlu0 %1360
    %s1363 = sor.u32 256, 44
    %1364 = vbcast.lane.b32.xlu0 %v1118, %s1363
    %v1365 = vpop.permute.xlu0 %1364
    %s1367 = sor.u32 256, 52
    %1368 = vbcast.lane.b32.xlu0 %v1118, %s1367
    %v1369 = vpop.permute.xlu0 %1368
    %s1371 = sor.u32 256, 5
    %1372 = vbcast.lane.b32.xlu0 %v1087, %s1371
    %v1373 = vpop.permute.xlu0 %1372
    %s1375 = sor.u32 256, 13
    %1376 = vbcast.lane.b32.xlu0 %v1087, %s1375
    %v1377 = vpop.permute.xlu0 %1376
    %s1379 = sor.u32 256, 21
    %1380 = vbcast.lane.b32.xlu0 %v1087, %s1379
    %v1381 = vpop.permute.xlu0 %1380
    %s1383 = sor.u32 256, 29
    %1384 = vbcast.lane.b32.xlu0 %v1087, %s1383
    %v1385 = vpop.permute.xlu0 %1384
    %s1387 = sor.u32 256, 37
    %1388 = vbcast.lane.b32.xlu0 %v1087, %s1387
    %v1389 = vpop.permute.xlu0 %1388
    %s1391 = sor.u32 256, 45
    %1392 = vbcast.lane.b32.xlu0 %v1087, %s1391
    %v1393 = vpop.permute.xlu0 %1392
    %s1395 = sor.u32 256, 53
    %1396 = vbcast.lane.b32.xlu0 %v1087, %s1395
    %v1397 = vpop.permute.xlu0 %1396
    %s1399 = sor.u32 256, 5
    %1400 = vbcast.lane.b32.xlu0 %v1118, %s1399
    %v1401 = vpop.permute.xlu0 %1400
    %s1403 = sor.u32 256, 13
    %1404 = vbcast.lane.b32.xlu0 %v1118, %s1403
    %v1405 = vpop.permute.xlu0 %1404
    %s1407 = sor.u32 256, 21
    %1408 = vbcast.lane.b32.xlu0 %v1118, %s1407
    %v1409 = vpop.permute.xlu0 %1408
    %s1411 = sor.u32 256, 29
    %1412 = vbcast.lane.b32.xlu0 %v1118, %s1411
    %v1413 = vpop.permute.xlu0 %1412
    %s1415 = sor.u32 256, 37
    %1416 = vbcast.lane.b32.xlu0 %v1118, %s1415
    %v1417 = vpop.permute.xlu0 %1416
    %s1419 = sor.u32 256, 45
    %1420 = vbcast.lane.b32.xlu0 %v1118, %s1419
    %v1421 = vpop.permute.xlu0 %1420
    %s1423 = sor.u32 256, 53
    %1424 = vbcast.lane.b32.xlu0 %v1118, %s1423
    %v1425 = vpop.permute.xlu0 %1424
    %s1427 = sor.u32 256, 6
    %1428 = vbcast.lane.b32.xlu0 %v1087, %s1427
    %v1429 = vpop.permute.xlu0 %1428
    %s1431 = sor.u32 256, 14
    %1432 = vbcast.lane.b32.xlu0 %v1087, %s1431
    %v1433 = vpop.permute.xlu0 %1432
    %s1435 = sor.u32 256, 22
    %1436 = vbcast.lane.b32.xlu0 %v1087, %s1435
    %v1437 = vpop.permute.xlu0 %1436
    %s1439 = sor.u32 256, 30
    %1440 = vbcast.lane.b32.xlu0 %v1087, %s1439
    %v1441 = vpop.permute.xlu0 %1440
    %s1443 = sor.u32 256, 38
    %1444 = vbcast.lane.b32.xlu0 %v1087, %s1443
    %v1445 = vpop.permute.xlu0 %1444
    %s1447 = sor.u32 256, 46
    %1448 = vbcast.lane.b32.xlu0 %v1087, %s1447
    %v1449 = vpop.permute.xlu0 %1448
    %s1451 = sor.u32 256, 54
    %1452 = vbcast.lane.b32.xlu0 %v1087, %s1451
    %v1453 = vpop.permute.xlu0 %1452
    %s1455 = sor.u32 256, 6
    %1456 = vbcast.lane.b32.xlu0 %v1118, %s1455
    %v1457 = vpop.permute.xlu0 %1456
    %s1459 = sor.u32 256, 14
    %1460 = vbcast.lane.b32.xlu0 %v1118, %s1459
    %v1461 = vpop.permute.xlu0 %1460
    %s1463 = sor.u32 256, 22
    %1464 = vbcast.lane.b32.xlu0 %v1118, %s1463
    %v1465 = vpop.permute.xlu0 %1464
    %s1467 = sor.u32 256, 30
    %1468 = vbcast.lane.b32.xlu0 %v1118, %s1467
    %v1469 = vpop.permute.xlu0 %1468
    %s1471 = sor.u32 256, 38
    %1472 = vbcast.lane.b32.xlu0 %v1118, %s1471
    %v1473 = vpop.permute.xlu0 %1472
    %s1475 = sor.u32 256, 46
    %1476 = vbcast.lane.b32.xlu0 %v1118, %s1475
    %v1477 = vpop.permute.xlu0 %1476
    %s1479 = sor.u32 256, 54
    %1480 = vbcast.lane.b32.xlu0 %v1118, %s1479
    %v1481 = vpop.permute.xlu0 %1480
    %s1483 = sor.u32 256, 7
    %1484 = vbcast.lane.b32.xlu0 %v1087, %s1483
    %v1485 = vpop.permute.xlu0 %1484
    %s1487 = sor.u32 256, 15
    %1488 = vbcast.lane.b32.xlu0 %v1087, %s1487
    %v1489 = vpop.permute.xlu0 %1488
    %s1491 = sor.u32 256, 23
    %1492 = vbcast.lane.b32.xlu0 %v1087, %s1491
    %v1493 = vpop.permute.xlu0 %1492
    %s1495 = sor.u32 256, 31
    %1496 = vbcast.lane.b32.xlu0 %v1087, %s1495
    %v1497 = vpop.permute.xlu0 %1496
    %s1499 = sor.u32 256, 39
    %1500 = vbcast.lane.b32.xlu0 %v1087, %s1499
    %v1501 = vpop.permute.xlu0 %1500
    %s1503 = sor.u32 256, 47
    %1504 = vbcast.lane.b32.xlu0 %v1087, %s1503
    %v1505 = vpop.permute.xlu0 %1504
    %s1507 = sor.u32 256, 55
    %1508 = vbcast.lane.b32.xlu0 %v1087, %s1507
    %v1509 = vpop.permute.xlu0 %1508
    %s1511 = sor.u32 256, 7
    %1512 = vbcast.lane.b32.xlu0 %v1118, %s1511
    %v1513 = vpop.permute.xlu0 %1512
    %s1515 = sor.u32 256, 15
    %1516 = vbcast.lane.b32.xlu0 %v1118, %s1515
    %v1517 = vpop.permute.xlu0 %1516
    %s1519 = sor.u32 256, 23
    %1520 = vbcast.lane.b32.xlu0 %v1118, %s1519
    %v1521 = vpop.permute.xlu0 %1520
    %s1523 = sor.u32 256, 31
    %1524 = vbcast.lane.b32.xlu0 %v1118, %s1523
    %v1525 = vpop.permute.xlu0 %1524
    %s1527 = sor.u32 256, 39
    %1528 = vbcast.lane.b32.xlu0 %v1118, %s1527
    %v1529 = vpop.permute.xlu0 %1528
    %s1531 = sor.u32 256, 47
    %1532 = vbcast.lane.b32.xlu0 %v1118, %s1531
    %v1533 = vpop.permute.xlu0 %1532
    %s1535 = sor.u32 256, 55
    %1536 = vbcast.lane.b32.xlu0 %v1118, %s1535
    %v1537 = vpop.permute.xlu0 %1536
    %s1539 = sor.u32 256, 56
    %1540 = vbcast.lane.b32.xlu0 %v1087, %s1539
    %v1541 = vpop.permute.xlu0 %1540
    %s1543 = sor.u32 256, 56
    %1544 = vbcast.lane.b32.xlu0 %v1118, %s1543
    %v1545 = vpop.permute.xlu0 %1544
    %s1547 = sor.u32 256, 57
    %1548 = vbcast.lane.b32.xlu0 %v1087, %s1547
    %v1549 = vpop.permute.xlu0 %1548
    %s1551 = sor.u32 256, 57
    %1552 = vbcast.lane.b32.xlu0 %v1118, %s1551
    %v1553 = vpop.permute.xlu0 %1552
    %s1555 = sor.u32 256, 58
    %1556 = vbcast.lane.b32.xlu0 %v1087, %s1555
    %v1557 = vpop.permute.xlu0 %1556
    %s1559 = sor.u32 256, 58
    %1560 = vbcast.lane.b32.xlu0 %v1118, %s1559
    %v1561 = vpop.permute.xlu0 %1560
    %vm1562 = vcmask 7168
    %v1563 = vsel %vm1562, %v1090, %v1149
    %v1564 = vsel %vm1562, %v1094, %v1153
    %v1565 = vsel %vm1562, %v1098, %v1157
    %v1566 = vsel %vm1562, %v1102, %v1161
    %v1567 = vsel %vm1562, %v1106, %v1165
    %v1568 = vsel %vm1562, %v1110, %v1169
    %v1569 = vsel %vm1562, %v1114, %v1173
    %v1570 = vsel %vm1562, %v1121, %v1177
    %v1571 = vsel %vm1562, %v1125, %v1181
    %v1572 = vsel %vm1562, %v1129, %v1185
    %v1573 = vsel %vm1562, %v1133, %v1189
    %v1574 = vsel %vm1562, %v1137, %v1193
    %v1575 = vsel %vm1562, %v1141, %v1197
    %v1576 = vsel %vm1562, %v1145, %v1201
    %vm1577 = vcmask 15360
    %v1578 = vsel %vm1577, %v1563, %v1205
    %v1579 = vsel %vm1577, %v1564, %v1209
    %v1580 = vsel %vm1577, %v1565, %v1213
    %v1581 = vsel %vm1577, %v1566, %v1217
    %v1582 = vsel %vm1577, %v1567, %v1221
    %v1583 = vsel %vm1577, %v1568, %v1225
    %v1584 = vsel %vm1577, %v1569, %v1229
    %v1585 = vsel %vm1577, %v1570, %v1233
    %v1586 = vsel %vm1577, %v1571, %v1237
    %v1587 = vsel %vm1577, %v1572, %v1241
    %v1588 = vsel %vm1577, %v1573, %v1245
    %v1589 = vsel %vm1577, %v1574, %v1249
    %v1590 = vsel %vm1577, %v1575, %v1253
    %v1591 = vsel %vm1577, %v1576, %v1257
    %vm1592 = vcmask 23552
    %v1593 = vsel %vm1592, %v1578, %v1261
    %v1594 = vsel %vm1592, %v1579, %v1265
    %v1595 = vsel %vm1592, %v1580, %v1269
    %v1596 = vsel %vm1592, %v1581, %v1273
    %v1597 = vsel %vm1592, %v1582, %v1277
    %v1598 = vsel %vm1592, %v1583, %v1281
    %v1599 = vsel %vm1592, %v1584, %v1285
    %v1600 = vsel %vm1592, %v1585, %v1289
    %v1601 = vsel %vm1592, %v1586, %v1293
    %v1602 = vsel %vm1592, %v1587, %v1297
    %v1603 = vsel %vm1592, %v1588, %v1301
    %v1604 = vsel %vm1592, %v1589, %v1305
    %v1605 = vsel %vm1592, %v1590, %v1309
    %v1606 = vsel %vm1592, %v1591, %v1313
    %vm1607 = vcmask 31744
    %v1608 = vsel %vm1607, %v1593, %v1317
    %v1609 = vsel %vm1607, %v1594, %v1321
    %v1610 = vsel %vm1607, %v1595, %v1325
    %v1611 = vsel %vm1607, %v1596, %v1329
    %v1612 = vsel %vm1607, %v1597, %v1333
    %v1613 = vsel %vm1607, %v1598, %v1337
    %v1614 = vsel %vm1607, %v1599, %v1341
    %v1615 = vsel %vm1607, %v1600, %v1345
    %v1616 = vsel %vm1607, %v1601, %v1349
    %v1617 = vsel %vm1607, %v1602, %v1353
    %v1618 = vsel %vm1607, %v1603, %v1357
    %v1619 = vsel %vm1607, %v1604, %v1361
    %v1620 = vsel %vm1607, %v1605, %v1365
    %v1621 = vsel %vm1607, %v1606, %v1369
    %vm1622 = vcmask 39936
    %v1623 = vsel %vm1622, %v1608, %v1373
    %v1624 = vsel %vm1622, %v1609, %v1377
    %v1625 = vsel %vm1622, %v1610, %v1381
    %v1626 = vsel %vm1622, %v1611, %v1385
    %v1627 = vsel %vm1622, %v1612, %v1389
    %v1628 = vsel %vm1622, %v1613, %v1393
    %v1629 = vsel %vm1622, %v1614, %v1397
    %v1630 = vsel %vm1622, %v1615, %v1401
    %v1631 = vsel %vm1622, %v1616, %v1405
    %v1632 = vsel %vm1622, %v1617, %v1409
    %v1633 = vsel %vm1622, %v1618, %v1413
    %v1634 = vsel %vm1622, %v1619, %v1417
    %v1635 = vsel %vm1622, %v1620, %v1421
    %v1636 = vsel %vm1622, %v1621, %v1425
    %vm1637 = vcmask 48128
    %v1638 = vsel %vm1637, %v1623, %v1429
    %v1639 = vsel %vm1637, %v1624, %v1433
    %v1640 = vsel %vm1637, %v1625, %v1437
    %v1641 = vsel %vm1637, %v1626, %v1441
    %v1642 = vsel %vm1637, %v1627, %v1445
    %v1643 = vsel %vm1637, %v1628, %v1449
    %v1644 = vsel %vm1637, %v1629, %v1453
    %v1645 = vsel %vm1637, %v1630, %v1457
    %v1646 = vsel %vm1637, %v1631, %v1461
    %v1647 = vsel %vm1637, %v1632, %v1465
    %v1648 = vsel %vm1637, %v1633, %v1469
    %v1649 = vsel %vm1637, %v1634, %v1473
    %v1650 = vsel %vm1637, %v1635, %v1477
    %v1651 = vsel %vm1637, %v1636, %v1481
    %vm1652 = vcmask 56320
    %v1653 = vsel %vm1652, %v1638, %v1485
    %v1654 = vsel %vm1652, %v1639, %v1489
    %v1655 = vsel %vm1652, %v1640, %v1493
    %v1656 = vsel %vm1652, %v1641, %v1497
    %v1657 = vsel %vm1652, %v1642, %v1501
    %v1658 = vsel %vm1652, %v1643, %v1505
    %v1659 = vsel %vm1652, %v1644, %v1509
    %v1660 = vsel %vm1652, %v1645, %v1513
    %v1661 = vsel %vm1652, %v1646, %v1517
    %v1662 = vsel %vm1652, %v1647, %v1521
    %v1663 = vsel %vm1652, %v1648, %v1525
    %v1664 = vsel %vm1652, %v1649, %v1529
    %v1665 = vsel %vm1652, %v1650, %v1533
    %v1666 = vsel %vm1652, %v1651, %v1537
    %vm1667 = vcmask 64512
    %v1668 = vsel %vm1667, %v1653, %v1094
    %v1669 = vsel %vm1667, %v1654, %v1098
    %v1670 = vsel %vm1667, %v1655, %v1102
    %v1671 = vsel %vm1667, %v1656, %v1106
    %v1672 = vsel %vm1667, %v1657, %v1110
    %v1673 = vsel %vm1667, %v1658, %v1114
    %v1674 = vsel %vm1667, %v1659, %v1541
    %v1675 = vsel %vm1667, %v1660, %v1125
    %v1676 = vsel %vm1667, %v1661, %v1129
    %v1677 = vsel %vm1667, %v1662, %v1133
    %v1678 = vsel %vm1667, %v1663, %v1137
    %v1679 = vsel %vm1667, %v1664, %v1141
    %v1680 = vsel %vm1667, %v1665, %v1145
    %v1681 = vsel %vm1667, %v1666, %v1545
    %vm1682 = vcmask 72704
    %v1683 = vsel %vm1682, %v1668, %v1153
    %v1684 = vsel %vm1682, %v1669, %v1157
    %v1685 = vsel %vm1682, %v1670, %v1161
    %v1686 = vsel %vm1682, %v1671, %v1165
    %v1687 = vsel %vm1682, %v1672, %v1169
    %v1688 = vsel %vm1682, %v1673, %v1173
    %v1689 = vsel %vm1682, %v1674, %v1549
    %v1690 = vsel %vm1682, %v1675, %v1181
    %v1691 = vsel %vm1682, %v1676, %v1185
    %v1692 = vsel %vm1682, %v1677, %v1189
    %v1693 = vsel %vm1682, %v1678, %v1193
    %v1694 = vsel %vm1682, %v1679, %v1197
    %v1695 = vsel %vm1682, %v1680, %v1201
    %v1696 = vsel %vm1682, %v1681, %v1553
    %vm1697 = vcmask 80896
    %v1698 = vsel %vm1697, %v1683, %v1209
    %v1699 = vsel %vm1697, %v1684, %v1213
    %v1700 = vsel %vm1697, %v1685, %v1217
    %v1701 = vsel %vm1697, %v1686, %v1221
    %v1702 = vsel %vm1697, %v1687, %v1225
    %v1703 = vsel %vm1697, %v1688, %v1229
    %v1704 = vsel %vm1697, %v1689, %v1557
    %v1705 = vsel %vm1697, %v1690, %v1237
    %v1706 = vsel %vm1697, %v1691, %v1241
    %v1707 = vsel %vm1697, %v1692, %v1245
    %v1708 = vsel %vm1697, %v1693, %v1249
    %v1709 = vsel %vm1697, %v1694, %v1253
    %v1710 = vsel %vm1697, %v1695, %v1257
    %v1711 = vsel %vm1697, %v1696, %v1561
    %v1726 = vcombine.high %v1698, %v1698
    %v1728 = vunpack.c.l.s4 1983009808
    %v1729 = vunpack.c.0.s8 %v1728
    %v1730 = vlaneseq
    %v1731 = vshrl.u32 %v1730, 7
    %v1732 = vsub.s32 %v1729, %v1731
    %v1733 = vrot.slane %v1698, %v1732
    %v1735 = vunpack.c.l.s4 1983009808
    %v1736 = vunpack.c.0.s8 %v1735
    %v1737 = vlaneseq
    %v1738 = vshrl.u32 %v1737, 7
    %v1739 = vsub.s32 %v1736, %v1738
    %v1740 = vrot.slane %v1726, %v1739
    %v1741 = vcombine.high %v1733, %v1733
    %v1742 = vcombine.high %v1740, %v1740
    %v1743 = vcombine.high %v1699, %v1699
    %v1745 = vunpack.c.l.s4 1983009808
    %v1746 = vunpack.c.0.s8 %v1745
    %v1747 = vlaneseq
    %v1748 = vshrl.u32 %v1747, 7
    %v1749 = vsub.s32 %v1746, %v1748
    %v1750 = vrot.slane %v1699, %v1749
    %v1752 = vunpack.c.l.s4 1983009808
    %v1753 = vunpack.c.0.s8 %v1752
    %v1754 = vlaneseq
    %v1755 = vshrl.u32 %v1754, 7
    %v1756 = vsub.s32 %v1753, %v1755
    %v1757 = vrot.slane %v1743, %v1756
    %v1758 = vcombine.high %v1750, %v1750
    %v1759 = vcombine.high %v1757, %v1757
    %v1760 = vcombine.high %v1700, %v1700
    %v1762 = vunpack.c.l.s4 1983009808
    %v1763 = vunpack.c.0.s8 %v1762
    %v1764 = vlaneseq
    %v1765 = vshrl.u32 %v1764, 7
    %v1766 = vsub.s32 %v1763, %v1765
    %v1767 = vrot.slane %v1700, %v1766
    %v1769 = vunpack.c.l.s4 1983009808
    %v1770 = vunpack.c.0.s8 %v1769
    %v1771 = vlaneseq
    %v1772 = vshrl.u32 %v1771, 7
    %v1773 = vsub.s32 %v1770, %v1772
    %v1774 = vrot.slane %v1760, %v1773
    %v1775 = vcombine.high %v1767, %v1767
    %v1776 = vcombine.high %v1774, %v1774
    %v1777 = vcombine.high %v1701, %v1701
    %v1779 = vunpack.c.l.s4 1983009808
    %v1780 = vunpack.c.0.s8 %v1779
    %v1781 = vlaneseq
    %v1782 = vshrl.u32 %v1781, 7
    %v1783 = vsub.s32 %v1780, %v1782
    %v1784 = vrot.slane %v1701, %v1783
    %v1786 = vunpack.c.l.s4 1983009808
    %v1787 = vunpack.c.0.s8 %v1786
    %v1788 = vlaneseq
    %v1789 = vshrl.u32 %v1788, 7
    %v1790 = vsub.s32 %v1787, %v1789
    %v1791 = vrot.slane %v1777, %v1790
    %v1792 = vcombine.high %v1784, %v1784
    %v1793 = vcombine.high %v1791, %v1791
    %v1794 = vcombine.high %v1702, %v1702
    %v1796 = vunpack.c.l.s4 1983009808
    %v1797 = vunpack.c.0.s8 %v1796
    %v1798 = vlaneseq
    %v1799 = vshrl.u32 %v1798, 7
    %v1800 = vsub.s32 %v1797, %v1799
    %v1801 = vrot.slane %v1702, %v1800
    %v1803 = vunpack.c.l.s4 1983009808
    %v1804 = vunpack.c.0.s8 %v1803
    %v1805 = vlaneseq
    %v1806 = vshrl.u32 %v1805, 7
    %v1807 = vsub.s32 %v1804, %v1806
    %v1808 = vrot.slane %v1794, %v1807
    %v1809 = vcombine.high %v1801, %v1801
    %v1810 = vcombine.high %v1808, %v1808
    %v1811 = vcombine.high %v1703, %v1703
    %v1813 = vunpack.c.l.s4 1983009808
    %v1814 = vunpack.c.0.s8 %v1813
    %v1815 = vlaneseq
    %v1816 = vshrl.u32 %v1815, 7
    %v1817 = vsub.s32 %v1814, %v1816
    %v1818 = vrot.slane %v1703, %v1817
    %v1820 = vunpack.c.l.s4 1983009808
    %v1821 = vunpack.c.0.s8 %v1820
    %v1822 = vlaneseq
    %v1823 = vshrl.u32 %v1822, 7
    %v1824 = vsub.s32 %v1821, %v1823
    %v1825 = vrot.slane %v1811, %v1824
    %v1826 = vcombine.high %v1818, %v1818
    %v1827 = vcombine.high %v1825, %v1825
    %v1828 = vcombine.high %v1704, %v1704
    %v1830 = vunpack.c.l.s4 1983009808
    %v1831 = vunpack.c.0.s8 %v1830
    %v1832 = vlaneseq
    %v1833 = vshrl.u32 %v1832, 7
    %v1834 = vsub.s32 %v1831, %v1833
    %v1835 = vrot.slane %v1704, %v1834
    %v1837 = vunpack.c.l.s4 1983009808
    %v1838 = vunpack.c.0.s8 %v1837
    %v1839 = vlaneseq
    %v1840 = vshrl.u32 %v1839, 7
    %v1841 = vsub.s32 %v1838, %v1840
    %v1842 = vrot.slane %v1828, %v1841
    %v1843 = vcombine.high %v1835, %v1835
    %v1844 = vcombine.high %v1705, %v1705
    %v1846 = vunpack.c.l.s4 1983009808
    %v1847 = vunpack.c.0.s8 %v1846
    %v1848 = vlaneseq
    %v1849 = vshrl.u32 %v1848, 7
    %v1850 = vsub.s32 %v1847, %v1849
    %v1851 = vrot.slane %v1705, %v1850
    %v1853 = vunpack.c.l.s4 1983009808
    %v1854 = vunpack.c.0.s8 %v1853
    %v1855 = vlaneseq
    %v1856 = vshrl.u32 %v1855, 7
    %v1857 = vsub.s32 %v1854, %v1856
    %v1858 = vrot.slane %v1844, %v1857
    %v1859 = vcombine.high %v1851, %v1851
    %v1860 = vcombine.high %v1858, %v1858
    %v1861 = vcombine.high %v1706, %v1706
    %v1863 = vunpack.c.l.s4 1983009808
    %v1864 = vunpack.c.0.s8 %v1863
    %v1865 = vlaneseq
    %v1866 = vshrl.u32 %v1865, 7
    %v1867 = vsub.s32 %v1864, %v1866
    %v1868 = vrot.slane %v1706, %v1867
    %v1870 = vunpack.c.l.s4 1983009808
    %v1871 = vunpack.c.0.s8 %v1870
    %v1872 = vlaneseq
    %v1873 = vshrl.u32 %v1872, 7
    %v1874 = vsub.s32 %v1871, %v1873
    %v1875 = vrot.slane %v1861, %v1874
    %v1876 = vcombine.high %v1868, %v1868
    %v1877 = vcombine.high %v1875, %v1875
    %v1878 = vcombine.high %v1707, %v1707
    %v1880 = vunpack.c.l.s4 1983009808
    %v1881 = vunpack.c.0.s8 %v1880
    %v1882 = vlaneseq
    %v1883 = vshrl.u32 %v1882, 7
    %v1884 = vsub.s32 %v1881, %v1883
    %v1885 = vrot.slane %v1707, %v1884
    %v1887 = vunpack.c.l.s4 1983009808
    %v1888 = vunpack.c.0.s8 %v1887
    %v1889 = vlaneseq
    %v1890 = vshrl.u32 %v1889, 7
    %v1891 = vsub.s32 %v1888, %v1890
    %v1892 = vrot.slane %v1878, %v1891
    %v1893 = vcombine.high %v1885, %v1885
    %v1894 = vcombine.high %v1892, %v1892
    %v1895 = vcombine.high %v1708, %v1708
    %v1897 = vunpack.c.l.s4 1983009808
    %v1898 = vunpack.c.0.s8 %v1897
    %v1899 = vlaneseq
    %v1900 = vshrl.u32 %v1899, 7
    %v1901 = vsub.s32 %v1898, %v1900
    %v1902 = vrot.slane %v1708, %v1901
    %v1904 = vunpack.c.l.s4 1983009808
    %v1905 = vunpack.c.0.s8 %v1904
    %v1906 = vlaneseq
    %v1907 = vshrl.u32 %v1906, 7
    %v1908 = vsub.s32 %v1905, %v1907
    %v1909 = vrot.slane %v1895, %v1908
    %v1910 = vcombine.high %v1902, %v1902
    %v1911 = vcombine.high %v1909, %v1909
    %v1912 = vcombine.high %v1709, %v1709
    %v1914 = vunpack.c.l.s4 1983009808
    %v1915 = vunpack.c.0.s8 %v1914
    %v1916 = vlaneseq
    %v1917 = vshrl.u32 %v1916, 7
    %v1918 = vsub.s32 %v1915, %v1917
    %v1919 = vrot.slane %v1709, %v1918
    %v1921 = vunpack.c.l.s4 1983009808
    %v1922 = vunpack.c.0.s8 %v1921
    %v1923 = vlaneseq
    %v1924 = vshrl.u32 %v1923, 7
    %v1925 = vsub.s32 %v1922, %v1924
    %v1926 = vrot.slane %v1912, %v1925
    %v1927 = vcombine.high %v1919, %v1919
    %v1928 = vcombine.high %v1926, %v1926
    %v1929 = vcombine.high %v1710, %v1710
    %v1931 = vunpack.c.l.s4 1983009808
    %v1932 = vunpack.c.0.s8 %v1931
    %v1933 = vlaneseq
    %v1934 = vshrl.u32 %v1933, 7
    %v1935 = vsub.s32 %v1932, %v1934
    %v1936 = vrot.slane %v1710, %v1935
    %v1938 = vunpack.c.l.s4 1983009808
    %v1939 = vunpack.c.0.s8 %v1938
    %v1940 = vlaneseq
    %v1941 = vshrl.u32 %v1940, 7
    %v1942 = vsub.s32 %v1939, %v1941
    %v1943 = vrot.slane %v1929, %v1942
    %v1944 = vcombine.high %v1936, %v1936
    %v1945 = vcombine.high %v1943, %v1943
    %v1946 = vcombine.high %v1711, %v1711
    %v1948 = vunpack.c.l.s4 1983009808
    %v1949 = vunpack.c.0.s8 %v1948
    %v1950 = vlaneseq
    %v1951 = vshrl.u32 %v1950, 7
    %v1952 = vsub.s32 %v1949, %v1951
    %v1953 = vrot.slane %v1711, %v1952
    %v1955 = vunpack.c.l.s4 1983009808
    %v1956 = vunpack.c.0.s8 %v1955
    %v1957 = vlaneseq
    %v1958 = vshrl.u32 %v1957, 7
    %v1959 = vsub.s32 %v1956, %v1958
    %v1960 = vrot.slane %v1946, %v1959
    %v1961 = vcombine.high %v1953, %v1953
    %v1962 = vld [vmem:[%s41] sm:$0xff]
    %v1963 = vld [vmem:[%s41 + $0x8] sm:$0x7]
    %v1964 = vld [vmem:[%s43] sm:$0x1]
    %v1966 = vlaneseq
    %v1967 = vshrl.u32 %v1966, 7
    %v1968 = vsub.s32 0, %v1967
    %v1969 = vrot.slane %v1964, %v1968
    %v1971 = vcombine.low %v1733, %v1741
    %v1972 = vcombine.low %v1740, %v1742
    %v1974 = vunpack.c.l.s4 1983009808
    %v1975 = vunpack.c.0.s8 %v1974
    %v1976 = vlaneseq
    %v1977 = vshrl.u32 %v1976, 7
    %v1978 = vsub.s32 %v1975, %v1977
    %v1979 = vrot.slane %v1971, %v1978
    %v1981 = vunpack.c.l.s4 1983009808
    %v1982 = vunpack.c.0.s8 %v1981
    %v1983 = vlaneseq
    %v1984 = vshrl.u32 %v1983, 7
    %v1985 = vsub.s32 %v1982, %v1984
    %v1986 = vrot.slane %v1972, %v1985
    %v1987 = vcombine.low %v1979, %v1986
    %v1988 = vcombine.low %v1750, %v1758
    %v1989 = vcombine.low %v1757, %v1759
    %v1991 = vunpack.c.l.s4 1983009808
    %v1992 = vunpack.c.0.s8 %v1991
    %v1993 = vlaneseq
    %v1994 = vshrl.u32 %v1993, 7
    %v1995 = vsub.s32 %v1992, %v1994
    %v1996 = vrot.slane %v1988, %v1995
    %v1998 = vunpack.c.l.s4 1983009808
    %v1999 = vunpack.c.0.s8 %v1998
    %v2000 = vlaneseq
    %v2001 = vshrl.u32 %v2000, 7
    %v2002 = vsub.s32 %v1999, %v2001
    %v2003 = vrot.slane %v1989, %v2002
    %v2004 = vcombine.low %v1996, %v2003
    %v2005 = vcombine.low %v1767, %v1775
    %v2006 = vcombine.low %v1774, %v1776
    %v2008 = vunpack.c.l.s4 1983009808
    %v2009 = vunpack.c.0.s8 %v2008
    %v2010 = vlaneseq
    %v2011 = vshrl.u32 %v2010, 7
    %v2012 = vsub.s32 %v2009, %v2011
    %v2013 = vrot.slane %v2005, %v2012
    %v2015 = vunpack.c.l.s4 1983009808
    %v2016 = vunpack.c.0.s8 %v2015
    %v2017 = vlaneseq
    %v2018 = vshrl.u32 %v2017, 7
    %v2019 = vsub.s32 %v2016, %v2018
    %v2020 = vrot.slane %v2006, %v2019
    %v2021 = vcombine.low %v2013, %v2020
    %v2022 = vcombine.low %v1784, %v1792
    %v2023 = vcombine.low %v1791, %v1793
    %v2025 = vunpack.c.l.s4 1983009808
    %v2026 = vunpack.c.0.s8 %v2025
    %v2027 = vlaneseq
    %v2028 = vshrl.u32 %v2027, 7
    %v2029 = vsub.s32 %v2026, %v2028
    %v2030 = vrot.slane %v2022, %v2029
    %v2032 = vunpack.c.l.s4 1983009808
    %v2033 = vunpack.c.0.s8 %v2032
    %v2034 = vlaneseq
    %v2035 = vshrl.u32 %v2034, 7
    %v2036 = vsub.s32 %v2033, %v2035
    %v2037 = vrot.slane %v2023, %v2036
    %v2038 = vcombine.low %v2030, %v2037
    %v2039 = vcombine.low %v1801, %v1809
    %v2040 = vcombine.low %v1808, %v1810
    %v2042 = vunpack.c.l.s4 1983009808
    %v2043 = vunpack.c.0.s8 %v2042
    %v2044 = vlaneseq
    %v2045 = vshrl.u32 %v2044, 7
    %v2046 = vsub.s32 %v2043, %v2045
    %v2047 = vrot.slane %v2039, %v2046
    %v2049 = vunpack.c.l.s4 1983009808
    %v2050 = vunpack.c.0.s8 %v2049
    %v2051 = vlaneseq
    %v2052 = vshrl.u32 %v2051, 7
    %v2053 = vsub.s32 %v2050, %v2052
    %v2054 = vrot.slane %v2040, %v2053
    %v2055 = vcombine.low %v2047, %v2054
    %v2056 = vcombine.low %v1818, %v1826
    %v2057 = vcombine.low %v1825, %v1827
    %v2059 = vunpack.c.l.s4 1983009808
    %v2060 = vunpack.c.0.s8 %v2059
    %v2061 = vlaneseq
    %v2062 = vshrl.u32 %v2061, 7
    %v2063 = vsub.s32 %v2060, %v2062
    %v2064 = vrot.slane %v2056, %v2063
    %v2066 = vunpack.c.l.s4 1983009808
    %v2067 = vunpack.c.0.s8 %v2066
    %v2068 = vlaneseq
    %v2069 = vshrl.u32 %v2068, 7
    %v2070 = vsub.s32 %v2067, %v2069
    %v2071 = vrot.slane %v2057, %v2070
    %v2072 = vcombine.low %v2064, %v2071
    %v2073 = vcombine.low %v1835, %v1843
    %v2074 = vcombine.low %v1842, %v1851
    %v2076 = vunpack.c.l.s4 1983009808
    %v2077 = vunpack.c.0.s8 %v2076
    %v2078 = vlaneseq
    %v2079 = vshrl.u32 %v2078, 7
    %v2080 = vsub.s32 %v2077, %v2079
    %v2081 = vrot.slane %v2073, %v2080
    %v2083 = vunpack.c.l.s4 1983009808
    %v2084 = vunpack.c.0.s8 %v2083
    %v2085 = vlaneseq
    %v2086 = vshrl.u32 %v2085, 7
    %v2087 = vsub.s32 %v2084, %v2086
    %v2088 = vrot.slane %v2074, %v2087
    %v2089 = vcombine.low %v2081, %v2088
    %v2090 = vcombine.low %v1859, %v1858
    %v2091 = vcombine.low %v1860, %v1868
    %v2093 = vunpack.c.l.s4 1983009808
    %v2094 = vunpack.c.0.s8 %v2093
    %v2095 = vlaneseq
    %v2096 = vshrl.u32 %v2095, 7
    %v2097 = vsub.s32 %v2094, %v2096
    %v2098 = vrot.slane %v2090, %v2097
    %v2100 = vunpack.c.l.s4 1983009808
    %v2101 = vunpack.c.0.s8 %v2100
    %v2102 = vlaneseq
    %v2103 = vshrl.u32 %v2102, 7
    %v2104 = vsub.s32 %v2101, %v2103
    %v2105 = vrot.slane %v2091, %v2104
    %v2106 = vcombine.low %v2098, %v2105
    %v2107 = vcombine.low %v1876, %v1875
    %v2108 = vcombine.low %v1877, %v1885
    %v2110 = vunpack.c.l.s4 1983009808
    %v2111 = vunpack.c.0.s8 %v2110
    %v2112 = vlaneseq
    %v2113 = vshrl.u32 %v2112, 7
    %v2114 = vsub.s32 %v2111, %v2113
    %v2115 = vrot.slane %v2107, %v2114
    %v2117 = vunpack.c.l.s4 1983009808
    %v2118 = vunpack.c.0.s8 %v2117
    %v2119 = vlaneseq
    %v2120 = vshrl.u32 %v2119, 7
    %v2121 = vsub.s32 %v2118, %v2120
    %v2122 = vrot.slane %v2108, %v2121
    %v2123 = vcombine.low %v2115, %v2122
    %v2124 = vcombine.low %v1893, %v1892
    %v2125 = vcombine.low %v1894, %v1902
    %v2127 = vunpack.c.l.s4 1983009808
    %v2128 = vunpack.c.0.s8 %v2127
    %v2129 = vlaneseq
    %v2130 = vshrl.u32 %v2129, 7
    %v2131 = vsub.s32 %v2128, %v2130
    %v2132 = vrot.slane %v2124, %v2131
    %v2134 = vunpack.c.l.s4 1983009808
    %v2135 = vunpack.c.0.s8 %v2134
    %v2136 = vlaneseq
    %v2137 = vshrl.u32 %v2136, 7
    %v2138 = vsub.s32 %v2135, %v2137
    %v2139 = vrot.slane %v2125, %v2138
    %v2140 = vcombine.low %v2132, %v2139
    %v2141 = vcombine.low %v1910, %v1909
    %v2142 = vcombine.low %v1911, %v1919
    %v2144 = vunpack.c.l.s4 1983009808
    %v2145 = vunpack.c.0.s8 %v2144
    %v2146 = vlaneseq
    %v2147 = vshrl.u32 %v2146, 7
    %v2148 = vsub.s32 %v2145, %v2147
    %v2149 = vrot.slane %v2141, %v2148
    %v2151 = vunpack.c.l.s4 1983009808
    %v2152 = vunpack.c.0.s8 %v2151
    %v2153 = vlaneseq
    %v2154 = vshrl.u32 %v2153, 7
    %v2155 = vsub.s32 %v2152, %v2154
    %v2156 = vrot.slane %v2142, %v2155
    %v2157 = vcombine.low %v2149, %v2156
    %v2158 = vcombine.low %v1927, %v1926
    %v2159 = vcombine.low %v1928, %v1936
    %v2161 = vunpack.c.l.s4 1983009808
    %v2162 = vunpack.c.0.s8 %v2161
    %v2163 = vlaneseq
    %v2164 = vshrl.u32 %v2163, 7
    %v2165 = vsub.s32 %v2162, %v2164
    %v2166 = vrot.slane %v2158, %v2165
    %v2168 = vunpack.c.l.s4 1983009808
    %v2169 = vunpack.c.0.s8 %v2168
    %v2170 = vlaneseq
    %v2171 = vshrl.u32 %v2170, 7
    %v2172 = vsub.s32 %v2169, %v2171
    %v2173 = vrot.slane %v2159, %v2172
    %v2174 = vcombine.low %v2166, %v2173
    %v2175 = vcombine.low %v1944, %v1943
    %v2176 = vcombine.low %v1945, %v1953
    %v2178 = vunpack.c.l.s4 1983009808
    %v2179 = vunpack.c.0.s8 %v2178
    %v2180 = vlaneseq
    %v2181 = vshrl.u32 %v2180, 7
    %v2182 = vsub.s32 %v2179, %v2181
    %v2183 = vrot.slane %v2175, %v2182
    %v2185 = vunpack.c.l.s4 1983009808
    %v2186 = vunpack.c.0.s8 %v2185
    %v2187 = vlaneseq
    %v2188 = vshrl.u32 %v2187, 7
    %v2189 = vsub.s32 %v2186, %v2188
    %v2190 = vrot.slane %v2176, %v2189
    %v2191 = vcombine.low %v2183, %v2190
    %v2192 = vcombine.low %v1961, %v1960
    %v2194 = vunpack.c.l.s4 1983009808
    %v2195 = vunpack.c.0.s8 %v2194
    %v2196 = vlaneseq
    %v2197 = vshrl.u32 %v2196, 7
    %v2198 = vsub.s32 %v2195, %v2197
    %v2199 = vrot.slane %v2192, %v2198
    %vm2200 = vcmask 89088
    %v2201 = vsel %vm2200, %v1987, 0
    %v2203 = vsel %vm2200, %v2004, 0
    %v2205 = vsel %vm2200, %v2021, 0
    %v2207 = vsel %vm2200, %v2038, 0
    %v2209 = vsel %vm2200, %v2055, 0
    %v2211 = vsel %vm2200, %v2072, 0
    %v2213 = vsel %vm2200, %v2089, 0
    %v2215 = vsel %vm2200, %v2106, 0
    %v2217 = vsel %vm2200, %v2123, 0
    %v2219 = vsel %vm2200, %v2140, 0
    %v2221 = vsel %vm2200, %v2157, 0
    %v2223 = vsel %vm2200, %v2174, 0
    %v2225 = vsel %vm2200, %v2191, 0
    %v2227 = vsel %vm2200, %v2199, 0
    %vm2229 = vcmask 1042432
    %v2231 = vsel %vm2229, %v1963, 0
    %2233 = vmatprep.subr.mxu0 0.0
    %2234 = vmatpush1.msra.mxu0 %v1962
    %2235 = vmatprep.subr.mxu0 0.0
    %2236 = vmatpush1.msra.mxu0 %v2231
    %2237 = vmatprep.subr.mxu0 0.0
    %2238 = vmatpush1.msra.mxu0 0.0
    %2239 = vmatprep.subr.mxu0 0.0
    %2240 = vmatpush1.msra.mxu0 0.0
    %2241 = vmatprep.subr.mxu0 0.0
    %2242 = vmatpush1.msra.mxu0 0.0
    %2243 = vmatprep.subr.mxu0 0.0
    %2244 = vmatpush1.msra.mxu0 0.0
    %2245 = vmatprep.subr.mxu0 0.0
    %2246 = vmatpush1.msra.mxu0 0.0
    %2247 = vmatprep.subr.mxu0 0.0
    %2248 = vmatpush1.msra.mxu0 0.0
    %2249 = vmatprep.subr.mxu0 0.0
    %2250 = vmatpush1.msra.mxu0 0.0
    %2251 = vmatprep.subr.mxu0 0.0
    %2252 = vmatpush1.msra.mxu0 0.0
    %2253 = vmatprep.subr.mxu0 0.0
    %2254 = vmatpush1.msra.mxu0 0.0
    %2255 = vmatprep.subr.mxu0 0.0
    %2256 = vmatpush1.msra.mxu0 0.0
    %2257 = vmatprep.subr.mxu0 0.0
    %2258 = vmatpush1.msra.mxu0 0.0
    %2259 = vmatprep.subr.mxu0 0.0
    %2260 = vmatpush1.msra.mxu0 0.0
    %2261 = vmatprep.subr.mxu0 0.0
    %2262 = vmatpush1.msra.mxu0 0.0
    %2263 = vmatprep.subr.mxu0 0.0
    %2264 = vmatpush1.msra.mxu0 0.0
    %2265 = vmatprep.subr.mxu0 0.0
    %2266 = vmatpush1.msra.mxu0 0.0
    %2267 = vmatprep.subr.mxu0 0.0
    %2268 = vmatpush1.msra.mxu0 0.0
    %2269 = vmatprep.subr.mxu0 0.0
    %2270 = vmatpush1.msra.mxu0 0.0
    %2271 = vmatprep.subr.mxu0 0.0
    %2272 = vmatpush1.msra.mxu0 0.0
    %2273 = vmatprep.subr.mxu0 0.0
    %2274 = vmatpush1.msra.mxu0 0.0
    %2275 = vmatprep.subr.mxu0 0.0
    %2276 = vmatpush1.msra.mxu0 0.0
    %2277 = vmatprep.subr.mxu0 0.0
    %2278 = vmatpush1.msra.mxu0 0.0
    %2279 = vmatprep.subr.mxu0 0.0
    %2280 = vmatpush1.msra.mxu0 0.0
    %2281 = vmatprep.subr.mxu0 0.0
    %2282 = vmatpush1.msra.mxu0 0.0
    %2283 = vmatprep.subr.mxu0 0.0
    %2284 = vmatpush1.msra.mxu0 0.0
    %2285 = vmatprep.subr.mxu0 0.0
    %2286 = vmatpush1.msra.mxu0 0.0
    %2287 = vmatprep.subr.mxu0 0.0
    %2288 = vmatpush1.msra.mxu0 0.0
    %2289 = vmatprep.subr.mxu0 0.0
    %2290 = vmatpush1.msra.mxu0 0.0
    %2291 = vmatprep.subr.mxu0 0.0
    %2292 = vmatpush1.msra.mxu0 0.0
    %2293 = vmatprep.subr.mxu0 0.0
    %2294 = vmatpush1.msra.mxu0 0.0
    %2295 = vmatprep.subr.mxu0 0.0
    %2296 = vmatpush1.msra.mxu0 0.0
    %2297 = vmatprep.mubr.f32.mxu0 0.0
    %2298 = vmatmul.mubr.f32.gmra.mrb[0].mxu0 %v2201
    %v2299 = vpop.f32.mrb[0].mxu0
    %v2300 = vadd.f32 %v1969, %v2299
    %v2301 = vpop.f32.mrb[0].mxu0
    %2302 = vmatprep.mubr.f32.mxu0 0.0
    %2303 = vmatmul.mubr.f32.gmra.mrb[0].mxu0 %v2203
    %v2304 = vpop.f32.mrb[0].mxu0
    %v2305 = vadd.f32 %v1969, %v2304
    %v2306 = vpop.f32.mrb[0].mxu0
    %2307 = vmatprep.mubr.f32.mxu0 0.0
    %2308 = vmatmul.mubr.f32.gmra.mrb[0].mxu0 %v2205
    %v2309 = vpop.f32.mrb[0].mxu0
    %v2310 = vadd.f32 %v1969, %v2309
    %v2311 = vpop.f32.mrb[0].mxu0
    %2312 = vmatprep.mubr.f32.mxu0 0.0
    %2313 = vmatmul.mubr.f32.gmra.mrb[0].mxu0 %v2207
    %v2314 = vpop.f32.mrb[0].mxu0
    %v2315 = vadd.f32 %v1969, %v2314
    %v2316 = vpop.f32.mrb[0].mxu0
    %2317 = vmatprep.mubr.f32.mxu0 0.0
    %2318 = vmatmul.mubr.f32.gmra.mrb[0].mxu0 %v2209
    %v2319 = vpop.f32.mrb[0].mxu0
    %v2320 = vadd.f32 %v1969, %v2319
    %v2321 = vpop.f32.mrb[0].mxu0
    %2322 = vmatprep.mubr.f32.mxu0 0.0
    %2323 = vmatmul.mubr.f32.gmra.mrb[0].mxu0 %v2211
    %v2324 = vpop.f32.mrb[0].mxu0
    %v2325 = vadd.f32 %v1969, %v2324
    %v2326 = vpop.f32.mrb[0].mxu0
    %2327 = vmatprep.mubr.f32.mxu0 0.0
    %2328 = vmatmul.mubr.f32.gmra.mrb[0].mxu0 %v2213
    %v2329 = vpop.f32.mrb[0].mxu0
    %v2330 = vadd.f32 %v1969, %v2329
    %v2331 = vpop.f32.mrb[0].mxu0
    %2332 = vmatprep.mubr.f32.mxu0 0.0
    %2333 = vmatmul.mubr.f32.gmra.mrb[0].mxu0 %v2215
    %v2334 = vpop.f32.mrb[0].mxu0
    %v2335 = vadd.f32 %v1969, %v2334
    %v2336 = vpop.f32.mrb[0].mxu0
    %2337 = vmatprep.mubr.f32.mxu0 0.0
    %2338 = vmatmul.mubr.f32.gmra.mrb[0].mxu0 %v2217
    %v2339 = vpop.f32.mrb[0].mxu0
    %v2340 = vadd.f32 %v1969, %v2339
    %v2341 = vpop.f32.mrb[0].mxu0
    %2342 = vmatprep.mubr.f32.mxu0 0.0
    %2343 = vmatmul.mubr.f32.gmra.mrb[0].mxu0 %v2219
    %v2344 = vpop.f32.mrb[0].mxu0
    %v2345 = vadd.f32 %v1969, %v2344
    %v2346 = vpop.f32.mrb[0].mxu0
    %2347 = vmatprep.mubr.f32.mxu0 0.0
    %2348 = vmatmul.mubr.f32.gmra.mrb[0].mxu0 %v2221
    %v2349 = vpop.f32.mrb[0].mxu0
    %v2350 = vadd.f32 %v1969, %v2349
    %v2351 = vpop.f32.mrb[0].mxu0
    %2352 = vmatprep.mubr.f32.mxu0 0.0
    %2353 = vmatmul.mubr.f32.gmra.mrb[0].mxu0 %v2223
    %v2354 = vpop.f32.mrb[0].mxu0
    %v2355 = vadd.f32 %v1969, %v2354
    %v2356 = vpop.f32.mrb[0].mxu0
    %2357 = vmatprep.mubr.f32.mxu0 0.0
    %2358 = vmatmul.mubr.f32.gmra.mrb[0].mxu0 %v2225
    %v2359 = vpop.f32.mrb[0].mxu0
    %v2360 = vadd.f32 %v1969, %v2359
    %v2361 = vpop.f32.mrb[0].mxu0
    %2362 = vmatprep.mubr.f32.mxu0 0.0
    %2363 = vmatmul.mubr.f32.gmra.mrb[0].mxu0 %v2227
    %v2364 = vpop.f32.mrb[0].mxu0
    %v2365 = vadd.f32 %v1969, %v2364
    %v2366 = vpop.f32.mrb[0].mxu0
    %2367 = vdwg.mxu0
    %v2368 = vmax.f32 %v2300, 0.0
    %v2369 = vmax.f32 %v2305, 0.0
    %v2370 = vmax.f32 %v2310, 0.0
    %v2371 = vmax.f32 %v2315, 0.0
    %v2372 = vmax.f32 %v2320, 0.0
    %v2373 = vmax.f32 %v2325, 0.0
    %v2374 = vmax.f32 %v2330, 0.0
    %v2375 = vmax.f32 %v2335, 0.0
    %v2376 = vmax.f32 %v2340, 0.0
    %v2377 = vmax.f32 %v2345, 0.0
    %v2378 = vmax.f32 %v2350, 0.0
    %v2379 = vmax.f32 %v2355, 0.0
    %v2380 = vmax.f32 %v2360, 0.0
    %v2381 = vmax.f32 %v2365, 0.0
    %v2396 = vcombine.high %v2368, %v2368
    %v2398 = vunpack.c.l.s4 1983009808
    %v2399 = vunpack.c.0.s8 %v2398
    %v2400 = vlaneseq
    %v2401 = vshrl.u32 %v2400, 7
    %v2402 = vsub.s32 %v2399, %v2401
    %v2403 = vrot.slane %v2368, %v2402
    %v2405 = vunpack.c.l.s4 1983009808
    %v2406 = vunpack.c.0.s8 %v2405
    %v2407 = vlaneseq
    %v2408 = vshrl.u32 %v2407, 7
    %v2409 = vsub.s32 %v2406, %v2408
    %v2410 = vrot.slane %v2396, %v2409
    %v2411 = vcombine.high %v2403, %v2403
    %v2412 = vcombine.high %v2410, %v2410
    %v2413 = vcombine.high %v2369, %v2369
    %v2415 = vunpack.c.l.s4 1983009808
    %v2416 = vunpack.c.0.s8 %v2415
    %v2417 = vlaneseq
    %v2418 = vshrl.u32 %v2417, 7
    %v2419 = vsub.s32 %v2416, %v2418
    %v2420 = vrot.slane %v2369, %v2419
    %v2422 = vunpack.c.l.s4 1983009808
    %v2423 = vunpack.c.0.s8 %v2422
    %v2424 = vlaneseq
    %v2425 = vshrl.u32 %v2424, 7
    %v2426 = vsub.s32 %v2423, %v2425
    %v2427 = vrot.slane %v2413, %v2426
    %v2428 = vcombine.high %v2420, %v2420
    %v2429 = vcombine.high %v2427, %v2427
    %v2430 = vcombine.high %v2370, %v2370
    %v2432 = vunpack.c.l.s4 1983009808
    %v2433 = vunpack.c.0.s8 %v2432
    %v2434 = vlaneseq
    %v2435 = vshrl.u32 %v2434, 7
    %v2436 = vsub.s32 %v2433, %v2435
    %v2437 = vrot.slane %v2370, %v2436
    %v2439 = vunpack.c.l.s4 1983009808
    %v2440 = vunpack.c.0.s8 %v2439
    %v2441 = vlaneseq
    %v2442 = vshrl.u32 %v2441, 7
    %v2443 = vsub.s32 %v2440, %v2442
    %v2444 = vrot.slane %v2430, %v2443
    %v2445 = vcombine.high %v2437, %v2437
    %v2446 = vcombine.high %v2444, %v2444
    %v2447 = vcombine.high %v2371, %v2371
    %v2449 = vunpack.c.l.s4 1983009808
    %v2450 = vunpack.c.0.s8 %v2449
    %v2451 = vlaneseq
    %v2452 = vshrl.u32 %v2451, 7
    %v2453 = vsub.s32 %v2450, %v2452
    %v2454 = vrot.slane %v2371, %v2453
    %v2456 = vunpack.c.l.s4 1983009808
    %v2457 = vunpack.c.0.s8 %v2456
    %v2458 = vlaneseq
    %v2459 = vshrl.u32 %v2458, 7
    %v2460 = vsub.s32 %v2457, %v2459
    %v2461 = vrot.slane %v2447, %v2460
    %v2462 = vcombine.high %v2454, %v2454
    %v2463 = vcombine.high %v2461, %v2461
    %v2464 = vcombine.high %v2372, %v2372
    %v2466 = vunpack.c.l.s4 1983009808
    %v2467 = vunpack.c.0.s8 %v2466
    %v2468 = vlaneseq
    %v2469 = vshrl.u32 %v2468, 7
    %v2470 = vsub.s32 %v2467, %v2469
    %v2471 = vrot.slane %v2372, %v2470
    %v2473 = vunpack.c.l.s4 1983009808
    %v2474 = vunpack.c.0.s8 %v2473
    %v2475 = vlaneseq
    %v2476 = vshrl.u32 %v2475, 7
    %v2477 = vsub.s32 %v2474, %v2476
    %v2478 = vrot.slane %v2464, %v2477
    %v2479 = vcombine.high %v2471, %v2471
    %v2480 = vcombine.high %v2478, %v2478
    %v2481 = vcombine.high %v2373, %v2373
    %v2483 = vunpack.c.l.s4 1983009808
    %v2484 = vunpack.c.0.s8 %v2483
    %v2485 = vlaneseq
    %v2486 = vshrl.u32 %v2485, 7
    %v2487 = vsub.s32 %v2484, %v2486
    %v2488 = vrot.slane %v2373, %v2487
    %v2490 = vunpack.c.l.s4 1983009808
    %v2491 = vunpack.c.0.s8 %v2490
    %v2492 = vlaneseq
    %v2493 = vshrl.u32 %v2492, 7
    %v2494 = vsub.s32 %v2491, %v2493
    %v2495 = vrot.slane %v2481, %v2494
    %v2496 = vcombine.high %v2488, %v2488
    %v2497 = vcombine.high %v2495, %v2495
    %v2498 = vcombine.high %v2374, %v2374
    %v2500 = vunpack.c.l.s4 1983009808
    %v2501 = vunpack.c.0.s8 %v2500
    %v2502 = vlaneseq
    %v2503 = vshrl.u32 %v2502, 7
    %v2504 = vsub.s32 %v2501, %v2503
    %v2505 = vrot.slane %v2374, %v2504
    %v2507 = vunpack.c.l.s4 1983009808
    %v2508 = vunpack.c.0.s8 %v2507
    %v2509 = vlaneseq
    %v2510 = vshrl.u32 %v2509, 7
    %v2511 = vsub.s32 %v2508, %v2510
    %v2512 = vrot.slane %v2498, %v2511
    %v2513 = vcombine.high %v2505, %v2505
    %v2514 = vcombine.high %v2512, %v2512
    %v2515 = vcombine.high %v2375, %v2375
    %v2517 = vunpack.c.l.s4 1983009808
    %v2518 = vunpack.c.0.s8 %v2517
    %v2519 = vlaneseq
    %v2520 = vshrl.u32 %v2519, 7
    %v2521 = vsub.s32 %v2518, %v2520
    %v2522 = vrot.slane %v2375, %v2521
    %v2524 = vunpack.c.l.s4 1983009808
    %v2525 = vunpack.c.0.s8 %v2524
    %v2526 = vlaneseq
    %v2527 = vshrl.u32 %v2526, 7
    %v2528 = vsub.s32 %v2525, %v2527
    %v2529 = vrot.slane %v2515, %v2528
    %v2530 = vcombine.high %v2522, %v2522
    %v2531 = vcombine.high %v2529, %v2529
    %v2532 = vcombine.high %v2376, %v2376
    %v2534 = vunpack.c.l.s4 1983009808
    %v2535 = vunpack.c.0.s8 %v2534
    %v2536 = vlaneseq
    %v2537 = vshrl.u32 %v2536, 7
    %v2538 = vsub.s32 %v2535, %v2537
    %v2539 = vrot.slane %v2376, %v2538
    %v2541 = vunpack.c.l.s4 1983009808
    %v2542 = vunpack.c.0.s8 %v2541
    %v2543 = vlaneseq
    %v2544 = vshrl.u32 %v2543, 7
    %v2545 = vsub.s32 %v2542, %v2544
    %v2546 = vrot.slane %v2532, %v2545
    %v2547 = vcombine.high %v2539, %v2539
    %v2548 = vcombine.high %v2546, %v2546
    %v2549 = vcombine.high %v2377, %v2377
    %v2551 = vunpack.c.l.s4 1983009808
    %v2552 = vunpack.c.0.s8 %v2551
    %v2553 = vlaneseq
    %v2554 = vshrl.u32 %v2553, 7
    %v2555 = vsub.s32 %v2552, %v2554
    %v2556 = vrot.slane %v2377, %v2555
    %v2558 = vunpack.c.l.s4 1983009808
    %v2559 = vunpack.c.0.s8 %v2558
    %v2560 = vlaneseq
    %v2561 = vshrl.u32 %v2560, 7
    %v2562 = vsub.s32 %v2559, %v2561
    %v2563 = vrot.slane %v2549, %v2562
    %v2564 = vcombine.high %v2556, %v2556
    %v2565 = vcombine.high %v2563, %v2563
    %v2566 = vcombine.high %v2378, %v2378
    %v2568 = vunpack.c.l.s4 1983009808
    %v2569 = vunpack.c.0.s8 %v2568
    %v2570 = vlaneseq
    %v2571 = vshrl.u32 %v2570, 7
    %v2572 = vsub.s32 %v2569, %v2571
    %v2573 = vrot.slane %v2378, %v2572
    %v2575 = vunpack.c.l.s4 1983009808
    %v2576 = vunpack.c.0.s8 %v2575
    %v2577 = vlaneseq
    %v2578 = vshrl.u32 %v2577, 7
    %v2579 = vsub.s32 %v2576, %v2578
    %v2580 = vrot.slane %v2566, %v2579
    %v2581 = vcombine.high %v2573, %v2573
    %v2582 = vcombine.high %v2580, %v2580
    %v2583 = vcombine.high %v2379, %v2379
    %v2585 = vunpack.c.l.s4 1983009808
    %v2586 = vunpack.c.0.s8 %v2585
    %v2587 = vlaneseq
    %v2588 = vshrl.u32 %v2587, 7
    %v2589 = vsub.s32 %v2586, %v2588
    %v2590 = vrot.slane %v2379, %v2589
    %v2592 = vunpack.c.l.s4 1983009808
    %v2593 = vunpack.c.0.s8 %v2592
    %v2594 = vlaneseq
    %v2595 = vshrl.u32 %v2594, 7
    %v2596 = vsub.s32 %v2593, %v2595
    %v2597 = vrot.slane %v2583, %v2596
    %v2598 = vcombine.high %v2590, %v2590
    %v2599 = vcombine.high %v2597, %v2597
    %v2600 = vcombine.high %v2380, %v2380
    %v2602 = vunpack.c.l.s4 1983009808
    %v2603 = vunpack.c.0.s8 %v2602
    %v2604 = vlaneseq
    %v2605 = vshrl.u32 %v2604, 7
    %v2606 = vsub.s32 %v2603, %v2605
    %v2607 = vrot.slane %v2380, %v2606
    %v2609 = vunpack.c.l.s4 1983009808
    %v2610 = vunpack.c.0.s8 %v2609
    %v2611 = vlaneseq
    %v2612 = vshrl.u32 %v2611, 7
    %v2613 = vsub.s32 %v2610, %v2612
    %v2614 = vrot.slane %v2600, %v2613
    %v2615 = vcombine.high %v2607, %v2607
    %v2616 = vcombine.high %v2614, %v2614
    %v2618 = vunpack.c.l.s4 1983009808
    %v2619 = vunpack.c.0.s8 %v2618
    %v2620 = vlaneseq
    %v2621 = vshrl.u32 %v2620, 7
    %v2622 = vsub.s32 %v2619, %v2621
    %v2623 = vrot.slane %v2381, %v2622
    %v2624 = vcombine.high %v2623, %v2623
    %v2679 = vrot.slane %v2403, 7
    %v2680 = vrot.slane %v2679, 2
    %v2681 = vrot.slane %v2411, 7
    %v2682 = vrot.slane %v2681, 2
    %v2683 = vrot.slane %v2410, 7
    %v2684 = vrot.slane %v2683, 2
    %v2685 = vrot.slane %v2412, 7
    %v2686 = vrot.slane %v2685, 2
    %v2687 = vrot.slane %v2420, 7
    %v2688 = vrot.slane %v2687, 2
    %v2689 = vrot.slane %v2428, 7
    %v2690 = vrot.slane %v2689, 2
    %v2691 = vrot.slane %v2427, 7
    %v2692 = vrot.slane %v2691, 2
    %v2693 = vrot.slane %v2429, 7
    %v2694 = vrot.slane %v2693, 2
    %v2695 = vrot.slane %v2437, 7
    %v2696 = vrot.slane %v2695, 2
    %v2697 = vrot.slane %v2445, 7
    %v2698 = vrot.slane %v2697, 2
    %v2699 = vrot.slane %v2444, 7
    %v2700 = vrot.slane %v2699, 2
    %v2701 = vrot.slane %v2446, 7
    %v2702 = vrot.slane %v2701, 2
    %v2703 = vrot.slane %v2454, 7
    %v2704 = vrot.slane %v2703, 2
    %v2705 = vrot.slane %v2462, 7
    %v2706 = vrot.slane %v2705, 2
    %v2707 = vrot.slane %v2461, 7
    %v2708 = vrot.slane %v2707, 2
    %v2709 = vrot.slane %v2463, 7
    %v2710 = vrot.slane %v2709, 2
    %v2711 = vrot.slane %v2471, 7
    %v2712 = vrot.slane %v2711, 2
    %v2713 = vrot.slane %v2479, 7
    %v2714 = vrot.slane %v2713, 2
    %v2715 = vrot.slane %v2478, 7
    %v2716 = vrot.slane %v2715, 2
    %v2717 = vrot.slane %v2480, 7
    %v2718 = vrot.slane %v2717, 2
    %v2719 = vrot.slane %v2488, 7
    %v2720 = vrot.slane %v2719, 2
    %v2721 = vrot.slane %v2496, 7
    %v2722 = vrot.slane %v2721, 2
    %v2723 = vrot.slane %v2495, 7
    %v2724 = vrot.slane %v2723, 2
    %v2725 = vrot.slane %v2497, 7
    %v2726 = vrot.slane %v2725, 2
    %v2727 = vrot.slane %v2505, 7
    %v2728 = vrot.slane %v2727, 2
    %v2729 = vrot.slane %v2513, 7
    %v2730 = vrot.slane %v2729, 2
    %v2731 = vrot.slane %v2512, 7
    %v2732 = vrot.slane %v2731, 2
    %v2733 = vrot.slane %v2514, 7
    %v2734 = vrot.slane %v2733, 2
    %v2735 = vrot.slane %v2522, 7
    %v2736 = vrot.slane %v2735, 2
    %v2737 = vrot.slane %v2530, 7
    %v2738 = vrot.slane %v2737, 2
    %v2739 = vrot.slane %v2529, 7
    %v2740 = vrot.slane %v2739, 2
    %v2741 = vrot.slane %v2531, 7
    %v2742 = vrot.slane %v2741, 2
    %v2743 = vrot.slane %v2539, 7
    %v2744 = vrot.slane %v2743, 2
    %v2745 = vrot.slane %v2547, 7
    %v2746 = vrot.slane %v2745, 2
    %v2747 = vrot.slane %v2546, 7
    %v2748 = vrot.slane %v2747, 2
    %v2749 = vrot.slane %v2548, 7
    %v2750 = vrot.slane %v2749, 2
    %v2751 = vrot.slane %v2556, 7
    %v2752 = vrot.slane %v2751, 2
    %v2753 = vrot.slane %v2564, 7
    %v2754 = vrot.slane %v2753, 2
    %v2755 = vrot.slane %v2563, 7
    %v2756 = vrot.slane %v2755, 2
    %v2757 = vrot.slane %v2565, 7
    %v2758 = vrot.slane %v2757, 2
    %v2759 = vrot.slane %v2573, 7
    %v2760 = vrot.slane %v2759, 2
    %v2761 = vrot.slane %v2581, 7
    %v2762 = vrot.slane %v2761, 2
    %v2763 = vrot.slane %v2580, 7
    %v2764 = vrot.slane %v2763, 2
    %v2765 = vrot.slane %v2582, 7
    %v2766 = vrot.slane %v2765, 2
    %v2767 = vrot.slane %v2590, 7
    %v2768 = vrot.slane %v2767, 2
    %v2769 = vrot.slane %v2598, 7
    %v2770 = vrot.slane %v2769, 2
    %v2771 = vrot.slane %v2597, 7
    %v2772 = vrot.slane %v2771, 2
    %v2773 = vrot.slane %v2599, 7
    %v2774 = vrot.slane %v2773, 2
    %v2775 = vrot.slane %v2607, 7
    %v2776 = vrot.slane %v2775, 2
    %v2777 = vrot.slane %v2615, 7
    %v2778 = vrot.slane %v2777, 2
    %v2779 = vrot.slane %v2614, 7
    %v2780 = vrot.slane %v2779, 2
    %v2781 = vrot.slane %v2616, 7
    %v2782 = vrot.slane %v2781, 2
    %v2783 = vrot.slane %v2623, 7
    %v2784 = vrot.slane %v2783, 2
    %v2785 = vrot.slane %v2624, 7
    %v2786 = vrot.slane %v2785, 2
    %v2841 = vadd.f32 %v2403, %v2680
    %v2842 = vadd.f32 %v2411, %v2682
    %v2843 = vadd.f32 %v2410, %v2684
    %v2844 = vadd.f32 %v2412, %v2686
    %v2845 = vadd.f32 %v2420, %v2688
    %v2846 = vadd.f32 %v2428, %v2690
    %v2847 = vadd.f32 %v2427, %v2692
    %v2848 = vadd.f32 %v2429, %v2694
    %v2849 = vadd.f32 %v2437, %v2696
    %v2850 = vadd.f32 %v2445, %v2698
    %v2851 = vadd.f32 %v2444, %v2700
    %v2852 = vadd.f32 %v2446, %v2702
    %v2853 = vadd.f32 %v2454, %v2704
    %v2854 = vadd.f32 %v2462, %v2706
    %v2855 = vadd.f32 %v2461, %v2708
    %v2856 = vadd.f32 %v2463, %v2710
    %v2857 = vadd.f32 %v2471, %v2712
    %v2858 = vadd.f32 %v2479, %v2714
    %v2859 = vadd.f32 %v2478, %v2716
    %v2860 = vadd.f32 %v2480, %v2718
    %v2861 = vadd.f32 %v2488, %v2720
    %v2862 = vadd.f32 %v2496, %v2722
    %v2863 = vadd.f32 %v2495, %v2724
    %v2864 = vadd.f32 %v2497, %v2726
    %v2865 = vadd.f32 %v2505, %v2728
    %v2866 = vadd.f32 %v2513, %v2730
    %v2867 = vadd.f32 %v2512, %v2732
    %v2868 = vadd.f32 %v2514, %v2734
    %v2869 = vadd.f32 %v2522, %v2736
    %v2870 = vadd.f32 %v2530, %v2738
    %v2871 = vadd.f32 %v2529, %v2740
    %v2872 = vadd.f32 %v2531, %v2742
    %v2873 = vadd.f32 %v2539, %v2744
    %v2874 = vadd.f32 %v2547, %v2746
    %v2875 = vadd.f32 %v2546, %v2748
    %v2876 = vadd.f32 %v2548, %v2750
    %v2877 = vadd.f32 %v2556, %v2752
    %v2878 = vadd.f32 %v2564, %v2754
    %v2879 = vadd.f32 %v2563, %v2756
    %v2880 = vadd.f32 %v2565, %v2758
    %v2881 = vadd.f32 %v2573, %v2760
    %v2882 = vadd.f32 %v2581, %v2762
    %v2883 = vadd.f32 %v2580, %v2764
    %v2884 = vadd.f32 %v2582, %v2766
    %v2885 = vadd.f32 %v2590, %v2768
    %v2886 = vadd.f32 %v2598, %v2770
    %v2887 = vadd.f32 %v2597, %v2772
    %v2888 = vadd.f32 %v2599, %v2774
    %v2889 = vadd.f32 %v2607, %v2776
    %v2890 = vadd.f32 %v2615, %v2778
    %v2891 = vadd.f32 %v2614, %v2780
    %v2892 = vadd.f32 %v2616, %v2782
    %v2893 = vadd.f32 %v2623, %v2784
    %v2894 = vadd.f32 %v2624, %v2786
    %v2895 = vmul.f32 %v2841, 0.5
    %v2896 = vmul.f32 %v2842, 0.5
    %v2897 = vmul.f32 %v2843, 0.5
    %v2898 = vmul.f32 %v2844, 0.5
    %v2899 = vmul.f32 %v2845, 0.5
    %v2900 = vmul.f32 %v2846, 0.5
    %v2901 = vmul.f32 %v2847, 0.5
    %v2902 = vmul.f32 %v2848, 0.5
    %v2903 = vmul.f32 %v2849, 0.5
    %v2904 = vmul.f32 %v2850, 0.5
    %v2905 = vmul.f32 %v2851, 0.5
    %v2906 = vmul.f32 %v2852, 0.5
    %v2907 = vmul.f32 %v2853, 0.5
    %v2908 = vmul.f32 %v2854, 0.5
    %v2909 = vmul.f32 %v2855, 0.5
    %v2910 = vmul.f32 %v2856, 0.5
    %v2911 = vmul.f32 %v2857, 0.5
    %v2912 = vmul.f32 %v2858, 0.5
    %v2913 = vmul.f32 %v2859, 0.5
    %v2914 = vmul.f32 %v2860, 0.5
    %v2915 = vmul.f32 %v2861, 0.5
    %v2916 = vmul.f32 %v2862, 0.5
    %v2917 = vmul.f32 %v2863, 0.5
    %v2918 = vmul.f32 %v2864, 0.5
    %v2919 = vmul.f32 %v2865, 0.5
    %v2920 = vmul.f32 %v2866, 0.5
    %v2921 = vmul.f32 %v2867, 0.5
    %v2922 = vmul.f32 %v2868, 0.5
    %v2923 = vmul.f32 %v2869, 0.5
    %v2924 = vmul.f32 %v2870, 0.5
    %v2925 = vmul.f32 %v2871, 0.5
    %v2926 = vmul.f32 %v2872, 0.5
    %v2927 = vmul.f32 %v2873, 0.5
    %v2928 = vmul.f32 %v2874, 0.5
    %v2929 = vmul.f32 %v2875, 0.5
    %v2930 = vmul.f32 %v2876, 0.5
    %v2931 = vmul.f32 %v2877, 0.5
    %v2932 = vmul.f32 %v2878, 0.5
    %v2933 = vmul.f32 %v2879, 0.5
    %v2934 = vmul.f32 %v2880, 0.5
    %v2935 = vmul.f32 %v2881, 0.5
    %v2936 = vmul.f32 %v2882, 0.5
    %v2937 = vmul.f32 %v2883, 0.5
    %v2938 = vmul.f32 %v2884, 0.5
    %v2939 = vmul.f32 %v2885, 0.5
    %v2940 = vmul.f32 %v2886, 0.5
    %v2941 = vmul.f32 %v2887, 0.5
    %v2942 = vmul.f32 %v2888, 0.5
    %v2943 = vmul.f32 %v2889, 0.5
    %v2944 = vmul.f32 %v2890, 0.5
    %v2945 = vmul.f32 %v2891, 0.5
    %v2946 = vmul.f32 %v2892, 0.5
    %v2947 = vmul.f32 %v2893, 0.5
    %v2948 = vmul.f32 %v2894, 0.5
    %v2981 = vlaneseq
    %v2982 = vshrl.u32 %v2981, 7
    %v2983 = vsub.s32 0, %v2982
    %v2984 = vrot.slane %v2895, %v2983
    %v2985 = vlaneseq
    %v2986 = vshrl.u32 %v2985, 7
    %v2987 = vsub.s32 0, %v2986
    %v2988 = vrot.slane %v2896, %v2987
    %v2989 = vlaneseq
    %v2990 = vshrl.u32 %v2989, 7
    %v2991 = vsub.s32 0, %v2990
    %v2992 = vrot.slane %v2897, %v2991
    %v2993 = vlaneseq
    %v2994 = vshrl.u32 %v2993, 7
    %v2995 = vsub.s32 0, %v2994
    %v2996 = vrot.slane %v2898, %v2995
    %v2997 = vlaneseq
    %v2998 = vshrl.u32 %v2997, 7
    %v2999 = vsub.s32 0, %v2998
    %v3000 = vrot.slane %v2899, %v2999
    %v3001 = vlaneseq
    %v3002 = vshrl.u32 %v3001, 7
    %v3003 = vsub.s32 0, %v3002
    %v3004 = vrot.slane %v2900, %v3003
    %v3005 = vlaneseq
    %v3006 = vshrl.u32 %v3005, 7
    %v3007 = vsub.s32 0, %v3006
    %v3008 = vrot.slane %v2901, %v3007
    %v3009 = vlaneseq
    %v3010 = vshrl.u32 %v3009, 7
    %v3011 = vsub.s32 0, %v3010
    %v3012 = vrot.slane %v2902, %v3011
    %v3013 = vlaneseq
    %v3014 = vshrl.u32 %v3013, 7
    %v3015 = vsub.s32 0, %v3014
    %v3016 = vrot.slane %v2903, %v3015
    %v3017 = vlaneseq
    %v3018 = vshrl.u32 %v3017, 7
    %v3019 = vsub.s32 0, %v3018
    %v3020 = vrot.slane %v2904, %v3019
    %v3021 = vlaneseq
    %v3022 = vshrl.u32 %v3021, 7
    %v3023 = vsub.s32 0, %v3022
    %v3024 = vrot.slane %v2905, %v3023
    %v3025 = vlaneseq
    %v3026 = vshrl.u32 %v3025, 7
    %v3027 = vsub.s32 0, %v3026
    %v3028 = vrot.slane %v2906, %v3027
    %v3029 = vlaneseq
    %v3030 = vshrl.u32 %v3029, 7
    %v3031 = vsub.s32 0, %v3030
    %v3032 = vrot.slane %v2907, %v3031
    %v3033 = vlaneseq
    %v3034 = vshrl.u32 %v3033, 7
    %v3035 = vsub.s32 0, %v3034
    %v3036 = vrot.slane %v2908, %v3035
    %v3037 = vlaneseq
    %v3038 = vshrl.u32 %v3037, 7
    %v3039 = vsub.s32 0, %v3038
    %v3040 = vrot.slane %v2909, %v3039
    %v3041 = vlaneseq
    %v3042 = vshrl.u32 %v3041, 7
    %v3043 = vsub.s32 0, %v3042
    %v3044 = vrot.slane %v2910, %v3043
    %v3045 = vlaneseq
    %v3046 = vshrl.u32 %v3045, 7
    %v3047 = vsub.s32 0, %v3046
    %v3048 = vrot.slane %v2922, %v3047
    %v3049 = vlaneseq
    %v3050 = vshrl.u32 %v3049, 7
    %v3051 = vsub.s32 0, %v3050
    %v3052 = vrot.slane %v2923, %v3051
    %v3053 = vlaneseq
    %v3054 = vshrl.u32 %v3053, 7
    %v3055 = vsub.s32 0, %v3054
    %v3056 = vrot.slane %v2924, %v3055
    %v3057 = vlaneseq
    %v3058 = vshrl.u32 %v3057, 7
    %v3059 = vsub.s32 0, %v3058
    %v3060 = vrot.slane %v2925, %v3059
    %v3061 = vlaneseq
    %v3062 = vshrl.u32 %v3061, 7
    %v3063 = vsub.s32 0, %v3062
    %v3064 = vrot.slane %v2926, %v3063
    %v3065 = vlaneseq
    %v3066 = vshrl.u32 %v3065, 7
    %v3067 = vsub.s32 0, %v3066
    %v3068 = vrot.slane %v2927, %v3067
    %v3069 = vlaneseq
    %v3070 = vshrl.u32 %v3069, 7
    %v3071 = vsub.s32 0, %v3070
    %v3072 = vrot.slane %v2928, %v3071
    %v3073 = vlaneseq
    %v3074 = vshrl.u32 %v3073, 7
    %v3075 = vsub.s32 0, %v3074
    %v3076 = vrot.slane %v2929, %v3075
    %v3077 = vlaneseq
    %v3078 = vshrl.u32 %v3077, 7
    %v3079 = vsub.s32 0, %v3078
    %v3080 = vrot.slane %v2930, %v3079
    %v3081 = vlaneseq
    %v3082 = vshrl.u32 %v3081, 7
    %v3083 = vsub.s32 0, %v3082
    %v3084 = vrot.slane %v2931, %v3083
    %v3085 = vlaneseq
    %v3086 = vshrl.u32 %v3085, 7
    %v3087 = vsub.s32 0, %v3086
    %v3088 = vrot.slane %v2932, %v3087
    %v3089 = vlaneseq
    %v3090 = vshrl.u32 %v3089, 7
    %v3091 = vsub.s32 0, %v3090
    %v3092 = vrot.slane %v2933, %v3091
    %v3093 = vlaneseq
    %v3094 = vshrl.u32 %v3093, 7
    %v3095 = vsub.s32 0, %v3094
    %v3096 = vrot.slane %v2934, %v3095
    %v3097 = vlaneseq
    %v3098 = vshrl.u32 %v3097, 7
    %v3099 = vsub.s32 0, %v3098
    %v3100 = vrot.slane %v2935, %v3099
    %v3101 = vlaneseq
    %v3102 = vshrl.u32 %v3101, 7
    %v3103 = vsub.s32 0, %v3102
    %v3104 = vrot.slane %v2936, %v3103
    %v3105 = vlaneseq
    %v3106 = vshrl.u32 %v3105, 7
    %v3107 = vsub.s32 0, %v3106
    %v3108 = vrot.slane %v2937, %v3107
    %vm3109 = vcmask 1041409
    %v3110 = vsel %vm3109, %v2988, %v2984
    %vm3111 = vcmask 1042434
    %v3112 = vsel %vm3111, %v2992, %v3110
    %vm3113 = vcmask 1043459
    %v3114 = vsel %vm3113, %v2996, %v3112
    %vm3115 = vcmask 1044484
    %v3116 = vsel %vm3115, %v3000, %v3114
    %vm3117 = vcmask 1045509
    %v3118 = vsel %vm3117, %v3004, %v3116
    %vm3119 = vcmask 1046534
    %v3120 = vsel %vm3119, %v3008, %v3118
    %vm3121 = vcmask 1047559
    %v3122 = vsel %vm3121, %v3012, %v3120
    %v3123 = vsel %vm3109, %v3020, %v3016
    %v3124 = vsel %vm3111, %v3024, %v3123
    %v3125 = vsel %vm3113, %v3028, %v3124
    %v3126 = vsel %vm3115, %v3032, %v3125
    %v3127 = vsel %vm3117, %v3036, %v3126
    %v3128 = vsel %vm3119, %v3040, %v3127
    %v3129 = vsel %vm3121, %v3044, %v3128
    %v3130 = vsel %vm3109, %v3052, %v3048
    %v3131 = vsel %vm3111, %v3056, %v3130
    %v3132 = vsel %vm3113, %v3060, %v3131
    %v3133 = vsel %vm3115, %v3064, %v3132
    %v3134 = vsel %vm3117, %v3068, %v3133
    %v3135 = vsel %vm3119, %v3072, %v3134
    %v3136 = vsel %vm3121, %v3076, %v3135
    %v3137 = vsel %vm3109, %v3084, %v3080
    %v3138 = vsel %vm3111, %v3088, %v3137
    %v3139 = vsel %vm3113, %v3092, %v3138
    %v3140 = vsel %vm3115, %v3096, %v3139
    %v3141 = vsel %vm3117, %v3100, %v3140
    %v3142 = vsel %vm3119, %v3104, %v3141
    %v3143 = vsel %vm3121, %v3108, %v3142
    %v3150 = vlaneseq
    %v3151 = vshrl.u32 %v3150, 7
    %v3152 = vsub.s32 0, %v3151
    %v3153 = vrot.slane %v2911, %v3152
    %v3154 = vlaneseq
    %v3155 = vshrl.u32 %v3154, 7
    %v3156 = vsub.s32 0, %v3155
    %v3157 = vrot.slane %v2938, %v3156
    %v3158 = vsel %vm3109, %v2992, %v2988
    %v3159 = vsel %vm3111, %v2996, %v3158
    %v3160 = vsel %vm3113, %v3000, %v3159
    %v3161 = vsel %vm3115, %v3004, %v3160
    %v3162 = vsel %vm3117, %v3008, %v3161
    %v3163 = vsel %vm3119, %v3012, %v3162
    %v3164 = vsel %vm3121, %v3016, %v3163
    %v3165 = vsel %vm3109, %v3024, %v3020
    %v3166 = vsel %vm3111, %v3028, %v3165
    %v3167 = vsel %vm3113, %v3032, %v3166
    %v3168 = vsel %vm3115, %v3036, %v3167
    %v3169 = vsel %vm3117, %v3040, %v3168
    %v3170 = vsel %vm3119, %v3044, %v3169
    %v3171 = vsel %vm3121, %v3153, %v3170
    %v3172 = vsel %vm3109, %v3056, %v3052
    %v3173 = vsel %vm3111, %v3060, %v3172
    %v3174 = vsel %vm3113, %v3064, %v3173
    %v3175 = vsel %vm3115, %v3068, %v3174
    %v3176 = vsel %vm3117, %v3072, %v3175
    %v3177 = vsel %vm3119, %v3076, %v3176
    %v3178 = vsel %vm3121, %v3080, %v3177
    %v3179 = vsel %vm3109, %v3088, %v3084
    %v3180 = vsel %vm3111, %v3092, %v3179
    %v3181 = vsel %vm3113, %v3096, %v3180
    %v3182 = vsel %vm3115, %v3100, %v3181
    %v3183 = vsel %vm3117, %v3104, %v3182
    %v3184 = vsel %vm3119, %v3108, %v3183
    %v3185 = vsel %vm3121, %v3157, %v3184
    %3186 = vrot.lane.b32.xlu0 %v3164, 32
    %v3187 = vpop.permute.xlu0 %3186
    %3188 = vrot.lane.b32.xlu0 %v3171, 32
    %v3189 = vpop.permute.xlu0 %3188
    %3190 = vrot.lane.b32.xlu0 %v3178, 32
    %v3191 = vpop.permute.xlu0 %3190
    %3192 = vrot.lane.b32.xlu0 %v3185, 32
    %v3193 = vpop.permute.xlu0 %3192
    %v3200 = vlaneseq
    %v3201 = vshrl.u32 %v3200, 7
    %v3202 = vsub.s32 0, %v3201
    %v3203 = vrot.slane %v2912, %v3202
    %v3204 = vlaneseq
    %v3205 = vshrl.u32 %v3204, 7
    %v3206 = vsub.s32 0, %v3205
    %v3207 = vrot.slane %v2939, %v3206
    %v3208 = vsel %vm3109, %v2996, %v2992
    %v3209 = vsel %vm3111, %v3000, %v3208
    %v3210 = vsel %vm3113, %v3004, %v3209
    %v3211 = vsel %vm3115, %v3008, %v3210
    %v3212 = vsel %vm3117, %v3012, %v3211
    %v3213 = vsel %vm3119, %v3016, %v3212
    %v3214 = vsel %vm3121, %v3020, %v3213
    %v3215 = vsel %vm3109, %v3028, %v3024
    %v3216 = vsel %vm3111, %v3032, %v3215
    %v3217 = vsel %vm3113, %v3036, %v3216
    %v3218 = vsel %vm3115, %v3040, %v3217
    %v3219 = vsel %vm3117, %v3044, %v3218
    %v3220 = vsel %vm3119, %v3153, %v3219
    %v3221 = vsel %vm3121, %v3203, %v3220
    %v3222 = vsel %vm3109, %v3060, %v3056
    %v3223 = vsel %vm3111, %v3064, %v3222
    %v3224 = vsel %vm3113, %v3068, %v3223
    %v3225 = vsel %vm3115, %v3072, %v3224
    %v3226 = vsel %vm3117, %v3076, %v3225
    %v3227 = vsel %vm3119, %v3080, %v3226
    %v3228 = vsel %vm3121, %v3084, %v3227
    %v3229 = vsel %vm3109, %v3092, %v3088
    %v3230 = vsel %vm3111, %v3096, %v3229
    %v3231 = vsel %vm3113, %v3100, %v3230
    %v3232 = vsel %vm3115, %v3104, %v3231
    %v3233 = vsel %vm3117, %v3108, %v3232
    %v3234 = vsel %vm3119, %v3157, %v3233
    %v3235 = vsel %vm3121, %v3207, %v3234
    %3236 = vrot.lane.b32.xlu0 %v3214, 64
    %v3237 = vpop.permute.xlu0 %3236
    %3238 = vrot.lane.b32.xlu0 %v3221, 64
    %v3239 = vpop.permute.xlu0 %3238
    %3240 = vrot.lane.b32.xlu0 %v3228, 64
    %v3241 = vpop.permute.xlu0 %3240
    %3242 = vrot.lane.b32.xlu0 %v3235, 64
    %v3243 = vpop.permute.xlu0 %3242
    %v3250 = vlaneseq
    %v3251 = vshrl.u32 %v3250, 7
    %v3252 = vsub.s32 0, %v3251
    %v3253 = vrot.slane %v2913, %v3252
    %v3254 = vlaneseq
    %v3255 = vshrl.u32 %v3254, 7
    %v3256 = vsub.s32 0, %v3255
    %v3257 = vrot.slane %v2940, %v3256
    %v3258 = vsel %vm3109, %v3000, %v2996
    %v3259 = vsel %vm3111, %v3004, %v3258
    %v3260 = vsel %vm3113, %v3008, %v3259
    %v3261 = vsel %vm3115, %v3012, %v3260
    %v3262 = vsel %vm3117, %v3016, %v3261
    %v3263 = vsel %vm3119, %v3020, %v3262
    %v3264 = vsel %vm3121, %v3024, %v3263
    %v3265 = vsel %vm3109, %v3032, %v3028
    %v3266 = vsel %vm3111, %v3036, %v3265
    %v3267 = vsel %vm3113, %v3040, %v3266
    %v3268 = vsel %vm3115, %v3044, %v3267
    %v3269 = vsel %vm3117, %v3153, %v3268
    %v3270 = vsel %vm3119, %v3203, %v3269
    %v3271 = vsel %vm3121, %v3253, %v3270
    %v3272 = vsel %vm3109, %v3064, %v3060
    %v3273 = vsel %vm3111, %v3068, %v3272
    %v3274 = vsel %vm3113, %v3072, %v3273
    %v3275 = vsel %vm3115, %v3076, %v3274
    %v3276 = vsel %vm3117, %v3080, %v3275
    %v3277 = vsel %vm3119, %v3084, %v3276
    %v3278 = vsel %vm3121, %v3088, %v3277
    %v3279 = vsel %vm3109, %v3096, %v3092
    %v3280 = vsel %vm3111, %v3100, %v3279
    %v3281 = vsel %vm3113, %v3104, %v3280
    %v3282 = vsel %vm3115, %v3108, %v3281
    %v3283 = vsel %vm3117, %v3157, %v3282
    %v3284 = vsel %vm3119, %v3207, %v3283
    %v3285 = vsel %vm3121, %v3257, %v3284
    %3286 = vrot.lane.b32.xlu0 %v3264, 96
    %v3287 = vpop.permute.xlu0 %3286
    %3288 = vrot.lane.b32.xlu0 %v3271, 96
    %v3289 = vpop.permute.xlu0 %3288
    %3290 = vrot.lane.b32.xlu0 %v3278, 96
    %v3291 = vpop.permute.xlu0 %3290
    %3292 = vrot.lane.b32.xlu0 %v3285, 96
    %v3293 = vpop.permute.xlu0 %3292
    %v3300 = vlaneseq
    %v3301 = vshrl.u32 %v3300, 7
    %v3302 = vsub.s32 0, %v3301
    %v3303 = vrot.slane %v2914, %v3302
    %v3304 = vlaneseq
    %v3305 = vshrl.u32 %v3304, 7
    %v3306 = vsub.s32 0, %v3305
    %v3307 = vrot.slane %v2941, %v3306
    %v3308 = vsel %vm3109, %v3004, %v3000
    %v3309 = vsel %vm3111, %v3008, %v3308
    %v3310 = vsel %vm3113, %v3012, %v3309
    %v3311 = vsel %vm3115, %v3016, %v3310
    %v3312 = vsel %vm3117, %v3020, %v3311
    %v3313 = vsel %vm3119, %v3024, %v3312
    %v3314 = vsel %vm3121, %v3028, %v3313
    %v3315 = vsel %vm3109, %v3036, %v3032
    %v3316 = vsel %vm3111, %v3040, %v3315
    %v3317 = vsel %vm3113, %v3044, %v3316
    %v3318 = vsel %vm3115, %v3153, %v3317
    %v3319 = vsel %vm3117, %v3203, %v3318
    %v3320 = vsel %vm3119, %v3253, %v3319
    %v3321 = vsel %vm3121, %v3303, %v3320
    %v3322 = vsel %vm3109, %v3068, %v3064
    %v3323 = vsel %vm3111, %v3072, %v3322
    %v3324 = vsel %vm3113, %v3076, %v3323
    %v3325 = vsel %vm3115, %v3080, %v3324
    %v3326 = vsel %vm3117, %v3084, %v3325
    %v3327 = vsel %vm3119, %v3088, %v3326
    %v3328 = vsel %vm3121, %v3092, %v3327
    %v3329 = vsel %vm3109, %v3100, %v3096
    %v3330 = vsel %vm3111, %v3104, %v3329
    %v3331 = vsel %vm3113, %v3108, %v3330
    %v3332 = vsel %vm3115, %v3157, %v3331
    %v3333 = vsel %vm3117, %v3207, %v3332
    %v3334 = vsel %vm3119, %v3257, %v3333
    %v3335 = vsel %vm3121, %v3307, %v3334
    %v3342 = vlaneseq
    %v3343 = vshrl.u32 %v3342, 7
    %v3344 = vsub.s32 0, %v3343
    %v3345 = vrot.slane %v2915, %v3344
    %v3346 = vlaneseq
    %v3347 = vshrl.u32 %v3346, 7
    %v3348 = vsub.s32 0, %v3347
    %v3349 = vrot.slane %v2942, %v3348
    %v3350 = vsel %vm3109, %v3008, %v3004
    %v3351 = vsel %vm3111, %v3012, %v3350
    %v3352 = vsel %vm3113, %v3016, %v3351
    %v3353 = vsel %vm3115, %v3020, %v3352
    %v3354 = vsel %vm3117, %v3024, %v3353
    %v3355 = vsel %vm3119, %v3028, %v3354
    %v3356 = vsel %vm3121, %v3032, %v3355
    %v3357 = vsel %vm3109, %v3040, %v3036
    %v3358 = vsel %vm3111, %v3044, %v3357
    %v3359 = vsel %vm3113, %v3153, %v3358
    %v3360 = vsel %vm3115, %v3203, %v3359
    %v3361 = vsel %vm3117, %v3253, %v3360
    %v3362 = vsel %vm3119, %v3303, %v3361
    %v3363 = vsel %vm3121, %v3345, %v3362
    %v3364 = vsel %vm3109, %v3072, %v3068
    %v3365 = vsel %vm3111, %v3076, %v3364
    %v3366 = vsel %vm3113, %v3080, %v3365
    %v3367 = vsel %vm3115, %v3084, %v3366
    %v3368 = vsel %vm3117, %v3088, %v3367
    %v3369 = vsel %vm3119, %v3092, %v3368
    %v3370 = vsel %vm3121, %v3096, %v3369
    %v3371 = vsel %vm3109, %v3104, %v3100
    %v3372 = vsel %vm3111, %v3108, %v3371
    %v3373 = vsel %vm3113, %v3157, %v3372
    %v3374 = vsel %vm3115, %v3207, %v3373
    %v3375 = vsel %vm3117, %v3257, %v3374
    %v3376 = vsel %vm3119, %v3307, %v3375
    %v3377 = vsel %vm3121, %v3349, %v3376
    %3378 = vrot.lane.b32.xlu0 %v3356, 32
    %v3379 = vpop.permute.xlu0 %3378
    %3380 = vrot.lane.b32.xlu0 %v3363, 32
    %v3381 = vpop.permute.xlu0 %3380
    %3382 = vrot.lane.b32.xlu0 %v3370, 32
    %v3383 = vpop.permute.xlu0 %3382
    %3384 = vrot.lane.b32.xlu0 %v3377, 32
    %v3385 = vpop.permute.xlu0 %3384
    %v3392 = vlaneseq
    %v3393 = vshrl.u32 %v3392, 7
    %v3394 = vsub.s32 0, %v3393
    %v3395 = vrot.slane %v2916, %v3394
    %v3396 = vlaneseq
    %v3397 = vshrl.u32 %v3396, 7
    %v3398 = vsub.s32 0, %v3397
    %v3399 = vrot.slane %v2943, %v3398
    %v3400 = vsel %vm3109, %v3012, %v3008
    %v3401 = vsel %vm3111, %v3016, %v3400
    %v3402 = vsel %vm3113, %v3020, %v3401
    %v3403 = vsel %vm3115, %v3024, %v3402
    %v3404 = vsel %vm3117, %v3028, %v3403
    %v3405 = vsel %vm3119, %v3032, %v3404
    %v3406 = vsel %vm3121, %v3036, %v3405
    %v3407 = vsel %vm3109, %v3044, %v3040
    %v3408 = vsel %vm3111, %v3153, %v3407
    %v3409 = vsel %vm3113, %v3203, %v3408
    %v3410 = vsel %vm3115, %v3253, %v3409
    %v3411 = vsel %vm3117, %v3303, %v3410
    %v3412 = vsel %vm3119, %v3345, %v3411
    %v3413 = vsel %vm3121, %v3395, %v3412
    %v3414 = vsel %vm3109, %v3076, %v3072
    %v3415 = vsel %vm3111, %v3080, %v3414
    %v3416 = vsel %vm3113, %v3084, %v3415
    %v3417 = vsel %vm3115, %v3088, %v3416
    %v3418 = vsel %vm3117, %v3092, %v3417
    %v3419 = vsel %vm3119, %v3096, %v3418
    %v3420 = vsel %vm3121, %v3100, %v3419
    %v3421 = vsel %vm3109, %v3108, %v3104
    %v3422 = vsel %vm3111, %v3157, %v3421
    %v3423 = vsel %vm3113, %v3207, %v3422
    %v3424 = vsel %vm3115, %v3257, %v3423
    %v3425 = vsel %vm3117, %v3307, %v3424
    %v3426 = vsel %vm3119, %v3349, %v3425
    %v3427 = vsel %vm3121, %v3399, %v3426
    %3428 = vrot.lane.b32.xlu0 %v3406, 64
    %v3429 = vpop.permute.xlu0 %3428
    %3430 = vrot.lane.b32.xlu0 %v3413, 64
    %v3431 = vpop.permute.xlu0 %3430
    %3432 = vrot.lane.b32.xlu0 %v3420, 64
    %v3433 = vpop.permute.xlu0 %3432
    %3434 = vrot.lane.b32.xlu0 %v3427, 64
    %v3435 = vpop.permute.xlu0 %3434
    %v3442 = vlaneseq
    %v3443 = vshrl.u32 %v3442, 7
    %v3444 = vsub.s32 0, %v3443
    %v3445 = vrot.slane %v2917, %v3444
    %v3446 = vlaneseq
    %v3447 = vshrl.u32 %v3446, 7
    %v3448 = vsub.s32 0, %v3447
    %v3449 = vrot.slane %v2944, %v3448
    %v3450 = vsel %vm3109, %v3016, %v3012
    %v3451 = vsel %vm3111, %v3020, %v3450
    %v3452 = vsel %vm3113, %v3024, %v3451
    %v3453 = vsel %vm3115, %v3028, %v3452
    %v3454 = vsel %vm3117, %v3032, %v3453
    %v3455 = vsel %vm3119, %v3036, %v3454
    %v3456 = vsel %vm3121, %v3040, %v3455
    %v3457 = vsel %vm3109, %v3153, %v3044
    %v3458 = vsel %vm3111, %v3203, %v3457
    %v3459 = vsel %vm3113, %v3253, %v3458
    %v3460 = vsel %vm3115, %v3303, %v3459
    %v3461 = vsel %vm3117, %v3345, %v3460
    %v3462 = vsel %vm3119, %v3395, %v3461
    %v3463 = vsel %vm3121, %v3445, %v3462
    %v3464 = vsel %vm3109, %v3080, %v3076
    %v3465 = vsel %vm3111, %v3084, %v3464
    %v3466 = vsel %vm3113, %v3088, %v3465
    %v3467 = vsel %vm3115, %v3092, %v3466
    %v3468 = vsel %vm3117, %v3096, %v3467
    %v3469 = vsel %vm3119, %v3100, %v3468
    %v3470 = vsel %vm3121, %v3104, %v3469
    %v3471 = vsel %vm3109, %v3157, %v3108
    %v3472 = vsel %vm3111, %v3207, %v3471
    %v3473 = vsel %vm3113, %v3257, %v3472
    %v3474 = vsel %vm3115, %v3307, %v3473
    %v3475 = vsel %vm3117, %v3349, %v3474
    %v3476 = vsel %vm3119, %v3399, %v3475
    %v3477 = vsel %vm3121, %v3449, %v3476
    %3478 = vrot.lane.b32.xlu0 %v3456, 96
    %v3479 = vpop.permute.xlu0 %3478
    %3480 = vrot.lane.b32.xlu0 %v3463, 96
    %v3481 = vpop.permute.xlu0 %3480
    %3482 = vrot.lane.b32.xlu0 %v3470, 96
    %v3483 = vpop.permute.xlu0 %3482
    %3484 = vrot.lane.b32.xlu0 %v3477, 96
    %v3485 = vpop.permute.xlu0 %3484
    %v3492 = vlaneseq
    %v3493 = vshrl.u32 %v3492, 7
    %v3494 = vsub.s32 0, %v3493
    %v3495 = vrot.slane %v2918, %v3494
    %v3496 = vlaneseq
    %v3497 = vshrl.u32 %v3496, 7
    %v3498 = vsub.s32 0, %v3497
    %v3499 = vrot.slane %v2945, %v3498
    %v3500 = vsel %vm3109, %v3203, %v3153
    %v3501 = vsel %vm3111, %v3253, %v3500
    %v3502 = vsel %vm3113, %v3303, %v3501
    %v3503 = vsel %vm3115, %v3345, %v3502
    %v3504 = vsel %vm3117, %v3395, %v3503
    %v3505 = vsel %vm3119, %v3445, %v3504
    %v3506 = vsel %vm3121, %v3495, %v3505
    %v3507 = vsel %vm3109, %v3207, %v3157
    %v3508 = vsel %vm3111, %v3257, %v3507
    %v3509 = vsel %vm3113, %v3307, %v3508
    %v3510 = vsel %vm3115, %v3349, %v3509
    %v3511 = vsel %vm3117, %v3399, %v3510
    %v3512 = vsel %vm3119, %v3449, %v3511
    %v3513 = vsel %vm3121, %v3499, %v3512
    %v3518 = vlaneseq
    %v3519 = vshrl.u32 %v3518, 7
    %v3520 = vsub.s32 0, %v3519
    %v3521 = vrot.slane %v2919, %v3520
    %v3522 = vlaneseq
    %v3523 = vshrl.u32 %v3522, 7
    %v3524 = vsub.s32 0, %v3523
    %v3525 = vrot.slane %v2946, %v3524
    %v3526 = vsel %vm3109, %v3253, %v3203
    %v3527 = vsel %vm3111, %v3303, %v3526
    %v3528 = vsel %vm3113, %v3345, %v3527
    %v3529 = vsel %vm3115, %v3395, %v3528
    %v3530 = vsel %vm3117, %v3445, %v3529
    %v3531 = vsel %vm3119, %v3495, %v3530
    %v3532 = vsel %vm3121, %v3521, %v3531
    %v3533 = vsel %vm3109, %v3257, %v3207
    %v3534 = vsel %vm3111, %v3307, %v3533
    %v3535 = vsel %vm3113, %v3349, %v3534
    %v3536 = vsel %vm3115, %v3399, %v3535
    %v3537 = vsel %vm3117, %v3449, %v3536
    %v3538 = vsel %vm3119, %v3499, %v3537
    %v3539 = vsel %vm3121, %v3525, %v3538
    %3540 = vrot.lane.b32.xlu0 %v3532, 32
    %v3541 = vpop.permute.xlu0 %3540
    %3542 = vrot.lane.b32.xlu0 %v3539, 32
    %v3543 = vpop.permute.xlu0 %3542
    %v3548 = vlaneseq
    %v3549 = vshrl.u32 %v3548, 7
    %v3550 = vsub.s32 0, %v3549
    %v3551 = vrot.slane %v2920, %v3550
    %v3552 = vlaneseq
    %v3553 = vshrl.u32 %v3552, 7
    %v3554 = vsub.s32 0, %v3553
    %v3555 = vrot.slane %v2947, %v3554
    %v3556 = vsel %vm3109, %v3303, %v3253
    %v3557 = vsel %vm3111, %v3345, %v3556
    %v3558 = vsel %vm3113, %v3395, %v3557
    %v3559 = vsel %vm3115, %v3445, %v3558
    %v3560 = vsel %vm3117, %v3495, %v3559
    %v3561 = vsel %vm3119, %v3521, %v3560
    %v3562 = vsel %vm3121, %v3551, %v3561
    %v3563 = vsel %vm3109, %v3307, %v3257
    %v3564 = vsel %vm3111, %v3349, %v3563
    %v3565 = vsel %vm3113, %v3399, %v3564
    %v3566 = vsel %vm3115, %v3449, %v3565
    %v3567 = vsel %vm3117, %v3499, %v3566
    %v3568 = vsel %vm3119, %v3525, %v3567
    %v3569 = vsel %vm3121, %v3555, %v3568
    %3570 = vrot.lane.b32.xlu0 %v3562, 64
    %v3571 = vpop.permute.xlu0 %3570
    %3572 = vrot.lane.b32.xlu0 %v3569, 64
    %v3573 = vpop.permute.xlu0 %3572
    %v3578 = vlaneseq
    %v3579 = vshrl.u32 %v3578, 7
    %v3580 = vsub.s32 0, %v3579
    %v3581 = vrot.slane %v2921, %v3580
    %v3582 = vlaneseq
    %v3583 = vshrl.u32 %v3582, 7
    %v3584 = vsub.s32 0, %v3583
    %v3585 = vrot.slane %v2948, %v3584
    %v3586 = vsel %vm3109, %v3345, %v3303
    %v3587 = vsel %vm3111, %v3395, %v3586
    %v3588 = vsel %vm3113, %v3445, %v3587
    %v3589 = vsel %vm3115, %v3495, %v3588
    %v3590 = vsel %vm3117, %v3521, %v3589
    %v3591 = vsel %vm3119, %v3551, %v3590
    %v3592 = vsel %vm3121, %v3581, %v3591
    %v3593 = vsel %vm3109, %v3349, %v3307
    %v3594 = vsel %vm3111, %v3399, %v3593
    %v3595 = vsel %vm3113, %v3449, %v3594
    %v3596 = vsel %vm3115, %v3499, %v3595
    %v3597 = vsel %vm3117, %v3525, %v3596
    %v3598 = vsel %vm3119, %v3555, %v3597
    %v3599 = vsel %vm3121, %v3585, %v3598
    %3600 = vrot.lane.b32.xlu0 %v3592, 96
    %v3601 = vpop.permute.xlu0 %3600
    %3602 = vrot.lane.b32.xlu0 %v3599, 96
    %v3603 = vpop.permute.xlu0 %3602
    %v3606 = vsel %vm402, %v3122, %v3187
    %v3607 = vsel %vm402, %v3129, %v3189
    %v3608 = vsel %vm402, %v3136, %v3191
    %v3609 = vsel %vm402, %v3143, %v3193
    %v3610 = vsel %vm316, %v3606, %v3237
    %v3611 = vsel %vm316, %v3607, %v3239
    %v3612 = vsel %vm316, %v3608, %v3241
    %v3613 = vsel %vm316, %v3609, %v3243
    %vm3614 = vcmask 785408
    %v3615 = vsel %vm3614, %v3610, %v3287
    %v3616 = vsel %vm3614, %v3611, %v3289
    %v3617 = vsel %vm3614, %v3612, %v3291
    %v3618 = vsel %vm3614, %v3613, %v3293
    %v3619 = vsel %vm402, %v3314, %v3379
    %v3620 = vsel %vm402, %v3321, %v3381
    %v3621 = vsel %vm402, %v3328, %v3383
    %v3622 = vsel %vm402, %v3335, %v3385
    %v3623 = vsel %vm316, %v3619, %v3429
    %v3624 = vsel %vm316, %v3620, %v3431
    %v3625 = vsel %vm316, %v3621, %v3433
    %v3626 = vsel %vm316, %v3622, %v3435
    %v3627 = vsel %vm3614, %v3623, %v3479
    %v3628 = vsel %vm3614, %v3624, %v3481
    %v3629 = vsel %vm3614, %v3625, %v3483
    %v3630 = vsel %vm3614, %v3626, %v3485
    %v3631 = vsel %vm402, %v3506, %v3541
    %v3632 = vsel %vm402, %v3513, %v3543
    %v3633 = vsel %vm316, %v3631, %v3571
    %v3634 = vsel %vm316, %v3632, %v3573
    %v3635 = vsel %vm3614, %v3633, %v3601
    %v3636 = vsel %vm3614, %v3634, %v3603
    %v3637 = vld [vmem:[%s45] sm:$0xff]
    %v3638 = vld [vmem:[%s45 + $0x8] sm:$0xff]
    %v3639 = vld [vmem:[%s45 + $0x10] sm:$0xff]
    %v3640 = vld [vmem:[%s45 + $0x18] sm:$0xff]
    %v3641 = vld [vmem:[%s45 + $0x20] sm:$0xff]
    %v3642 = vld [vmem:[%s45 + $0x28] sm:$0xff]
    %v3643 = vld [vmem:[%s45 + $0x30] sm:$0xff]
    %v3644 = vld [vmem:[%s45 + $0x38] sm:$0xff]
    %v3645 = vld [vmem:[%s45 + $0x40] sm:$0xff]
    %v3646 = vld [vmem:[%s45 + $0x48] sm:$0xff]
    %v3647 = vld [vmem:[%s45 + $0x50] sm:$0xff]
    %v3648 = vld [vmem:[%s45 + $0x58] sm:$0xff]
    %v3649 = vld [vmem:[%s45 + $0x60] sm:$0xff]
    %v3650 = vld [vmem:[%s45 + $0x68] sm:$0xff]
    %v3651 = vld [vmem:[%s45 + $0x70] sm:$0xff]
    %v3652 = vld [vmem:[%s45 + $0x78] sm:$0xff]
    %v3653 = vld [vmem:[%s45 + $0x80] sm:$0xff]
    %v3654 = vld [vmem:[%s45 + $0x88] sm:$0xff]
    %v3655 = vld [vmem:[%s45 + $0x90] sm:$0xff]
    %v3656 = vld [vmem:[%s45 + $0x98] sm:$0xff]
    %v3657 = vld [vmem:[%s45 + $0xa0] sm:$0xff]
    %v3658 = vld [vmem:[%s45 + $0xa8] sm:$0xff]
    %v3659 = vld [vmem:[%s45 + $0xb0] sm:$0xff]
    %v3660 = vld [vmem:[%s45 + $0xb8] sm:$0xff]
    %v3661 = vld [vmem:[%s45 + $0xc0] sm:$0xff]
    %v3662 = vld [vmem:[%s45 + $0xc8] sm:$0xff]
    %v3663 = vld [vmem:[%s45 + $0xd0] sm:$0xff]
    %v3664 = vld [vmem:[%s45 + $0xd8] sm:$0xff]
    %v3665 = vld [vmem:[%s45 + $0xe0] sm:$0xff]
    %v3666 = vld [vmem:[%s45 + $0xe8] sm:$0xff]
    %v3667 = vld [vmem:[%s45 + $0xf0] sm:$0xff]
    %v3668 = vld [vmem:[%s45 + $0xf8] sm:$0xff]
    %v3669 = vld [vmem:[%s45 + $0x100] sm:$0xff]
    %v3670 = vld [vmem:[%s45 + $0x108] sm:$0xff]
    %v3671 = vld [vmem:[%s45 + $0x110] sm:$0xff]
    %v3672 = vld [vmem:[%s45 + $0x118] sm:$0xff]
    %v3673 = vld [vmem:[%s45 + $0x120] sm:$0xff]
    %v3674 = vld [vmem:[%s45 + $0x128] sm:$0xff]
    %v3675 = vld [vmem:[%s45 + $0x130] sm:$0xff]
    %v3676 = vld [vmem:[%s45 + $0x138] sm:$0xff]
    %v3677 = vld [vmem:[%s45 + $0x140] sm:$0xff]
    %v3678 = vld [vmem:[%s45 + $0x148] sm:$0xff]
    %v3679 = vld [vmem:[%s45 + $0x150] sm:$0xff]
    %v3680 = vld [vmem:[%s45 + $0x158] sm:$0xff]
    %v3681 = vld [vmem:[%s45 + $0x160] sm:$0xff]
    %v3682 = vld [vmem:[%s45 + $0x168] sm:$0xff]
    %v3683 = vld [vmem:[%s45 + $0x170] sm:$0xff]
    %v3684 = vld [vmem:[%s45 + $0x178] sm:$0xff]
    %v3685 = vld [vmem:[%s47] sm:$0x1]
    %v3687 = vlaneseq
    %v3688 = vshrl.u32 %v3687, 7
    %v3689 = vsub.s32 0, %v3688
    %v3690 = vrot.slane %v3685, %v3689
    %3692 = vmatprep.subr.mxu0 0.0
    %3693 = vmatpush1.msra.mxu0 %v3637
    %3694 = vmatprep.subr.mxu0 0.0
    %3695 = vmatpush1.msra.mxu0 %v3638
    %3696 = vmatprep.subr.mxu0 0.0
    %3697 = vmatpush1.msra.mxu0 %v3639
    %3698 = vmatprep.subr.mxu0 0.0
    %3699 = vmatpush1.msra.mxu0 %v3640
    %3700 = vmatprep.subr.mxu0 0.0
    %3701 = vmatpush1.msra.mxu0 %v3641
    %3702 = vmatprep.subr.mxu0 0.0
    %3703 = vmatpush1.msra.mxu0 %v3642
    %3704 = vmatprep.subr.mxu0 0.0
    %3705 = vmatpush1.msra.mxu0 %v3643
    %3706 = vmatprep.subr.mxu0 0.0
    %3707 = vmatpush1.msra.mxu0 %v3644
    %3708 = vmatprep.subr.mxu0 0.0
    %3709 = vmatpush1.msra.mxu0 %v3645
    %3710 = vmatprep.subr.mxu0 0.0
    %3711 = vmatpush1.msra.mxu0 %v3646
    %3712 = vmatprep.subr.mxu0 0.0
    %3713 = vmatpush1.msra.mxu0 %v3647
    %3714 = vmatprep.subr.mxu0 0.0
    %3715 = vmatpush1.msra.mxu0 %v3648
    %3716 = vmatprep.subr.mxu0 0.0
    %3717 = vmatpush1.msra.mxu0 %v3649
    %3718 = vmatprep.subr.mxu0 0.0
    %3719 = vmatpush1.msra.mxu0 %v3650
    %3720 = vmatprep.subr.mxu0 0.0
    %3721 = vmatpush1.msra.mxu0 %v3651
    %3722 = vmatprep.subr.mxu0 0.0
    %3723 = vmatpush1.msra.mxu0 %v3652
    %3724 = vmatprep.subr.mxu0 0.0
    %3725 = vmatpush1.msra.mxu0 %v3653
    %3726 = vmatprep.subr.mxu0 0.0
    %3727 = vmatpush1.msra.mxu0 %v3654
    %3728 = vmatprep.subr.mxu0 0.0
    %3729 = vmatpush1.msra.mxu0 %v3655
    %3730 = vmatprep.subr.mxu0 0.0
    %3731 = vmatpush1.msra.mxu0 %v3656
    %3732 = vmatprep.subr.mxu0 0.0
    %3733 = vmatpush1.msra.mxu0 %v3657
    %3734 = vmatprep.subr.mxu0 0.0
    %3735 = vmatpush1.msra.mxu0 %v3658
    %3736 = vmatprep.subr.mxu0 0.0
    %3737 = vmatpush1.msra.mxu0 %v3659
    %3738 = vmatprep.subr.mxu0 0.0
    %3739 = vmatpush1.msra.mxu0 %v3660
    %3740 = vmatprep.subr.mxu0 0.0
    %3741 = vmatpush1.msra.mxu0 %v3661
    %3742 = vmatprep.subr.mxu0 0.0
    %3743 = vmatpush1.msra.mxu0 %v3662
    %3744 = vmatprep.subr.mxu0 0.0
    %3745 = vmatpush1.msra.mxu0 %v3663
    %3746 = vmatprep.subr.mxu0 0.0
    %3747 = vmatpush1.msra.mxu0 %v3664
    %3748 = vmatprep.subr.mxu0 0.0
    %3749 = vmatpush1.msra.mxu0 %v3665
    %3750 = vmatprep.subr.mxu0 0.0
    %3751 = vmatpush1.msra.mxu0 %v3666
    %3752 = vmatprep.subr.mxu0 0.0
    %3753 = vmatpush1.msra.mxu0 %v3667
    %3754 = vmatprep.subr.mxu0 0.0
    %3755 = vmatpush1.msra.mxu0 %v3668
    %3756 = vmatprep.mubr.f32.mxu0 %v3627
    %3757 = vmatmul.mubr.f32.gmra.mrb[0].mxu0 %v3615
    %v3758 = vpop.f32.mrb[0].mxu0
    %v3759 = vadd.f32 %v3690, %v3758
    %v3760 = vpop.f32.mrb[0].mxu0
    %3761 = vmatprep.mubr.f32.mxu0 %v3628
    %3762 = vmatmul.mubr.f32.gmra.mrb[0].mxu0 %v3616
    %v3763 = vpop.f32.mrb[0].mxu0
    %v3764 = vadd.f32 %v3690, %v3763
    %v3765 = vpop.f32.mrb[0].mxu0
    %3766 = vmatprep.mubr.f32.mxu0 %v3629
    %3767 = vmatmul.mubr.f32.gmra.mrb[0].mxu0 %v3617
    %v3768 = vpop.f32.mrb[0].mxu0
    %v3769 = vadd.f32 %v3690, %v3768
    %v3770 = vpop.f32.mrb[0].mxu0
    %3771 = vmatprep.mubr.f32.mxu0 %v3630
    %3772 = vmatmul.mubr.f32.gmra.mrb[0].mxu0 %v3618
    %v3773 = vpop.f32.mrb[0].mxu0
    %v3774 = vadd.f32 %v3690, %v3773
    %v3775 = vpop.f32.mrb[0].mxu0
    %3776 = vdwg.mxu0
    %3777 = vmatprep.subr.mxu0 0.0
    %3778 = vmatpush1.msra.mxu0 %v3669
    %3779 = vmatprep.subr.mxu0 0.0
    %3780 = vmatpush1.msra.mxu0 %v3670
    %3781 = vmatprep.subr.mxu0 0.0
    %3782 = vmatpush1.msra.mxu0 %v3671
    %3783 = vmatprep.subr.mxu0 0.0
    %3784 = vmatpush1.msra.mxu0 %v3672
    %3785 = vmatprep.subr.mxu0 0.0
    %3786 = vmatpush1.msra.mxu0 %v3673
    %3787 = vmatprep.subr.mxu0 0.0
    %3788 = vmatpush1.msra.mxu0 %v3674
    %3789 = vmatprep.subr.mxu0 0.0
    %3790 = vmatpush1.msra.mxu0 %v3675
    %3791 = vmatprep.subr.mxu0 0.0
    %3792 = vmatpush1.msra.mxu0 %v3676
    %3793 = vmatprep.subr.mxu0 0.0
    %3794 = vmatpush1.msra.mxu0 %v3677
    %3795 = vmatprep.subr.mxu0 0.0
    %3796 = vmatpush1.msra.mxu0 %v3678
    %3797 = vmatprep.subr.mxu0 0.0
    %3798 = vmatpush1.msra.mxu0 %v3679
    %3799 = vmatprep.subr.mxu0 0.0
    %3800 = vmatpush1.msra.mxu0 %v3680
    %3801 = vmatprep.subr.mxu0 0.0
    %3802 = vmatpush1.msra.mxu0 %v3681
    %3803 = vmatprep.subr.mxu0 0.0
    %3804 = vmatpush1.msra.mxu0 %v3682
    %3805 = vmatprep.subr.mxu0 0.0
    %3806 = vmatpush1.msra.mxu0 %v3683
    %3807 = vmatprep.subr.mxu0 0.0
    %3808 = vmatpush1.msra.mxu0 %v3684
    %3809 = vmatprep.subr.mxu0 0.0
    %3810 = vmatpush1.msra.mxu0 0.0
    %3811 = vmatprep.subr.mxu0 0.0
    %3812 = vmatpush1.msra.mxu0 0.0
    %3813 = vmatprep.subr.mxu0 0.0
    %3814 = vmatpush1.msra.mxu0 0.0
    %3815 = vmatprep.subr.mxu0 0.0
    %3816 = vmatpush1.msra.mxu0 0.0
    %3817 = vmatprep.subr.mxu0 0.0
    %3818 = vmatpush1.msra.mxu0 0.0
    %3819 = vmatprep.subr.mxu0 0.0
    %3820 = vmatpush1.msra.mxu0 0.0
    %3821 = vmatprep.subr.mxu0 0.0
    %3822 = vmatpush1.msra.mxu0 0.0
    %3823 = vmatprep.subr.mxu0 0.0
    %3824 = vmatpush1.msra.mxu0 0.0
    %3825 = vmatprep.subr.mxu0 0.0
    %3826 = vmatpush1.msra.mxu0 0.0
    %3827 = vmatprep.subr.mxu0 0.0
    %3828 = vmatpush1.msra.mxu0 0.0
    %3829 = vmatprep.subr.mxu0 0.0
    %3830 = vmatpush1.msra.mxu0 0.0
    %3831 = vmatprep.subr.mxu0 0.0
    %3832 = vmatpush1.msra.mxu0 0.0
    %3833 = vmatprep.subr.mxu0 0.0
    %3834 = vmatpush1.msra.mxu0 0.0
    %3835 = vmatprep.subr.mxu0 0.0
    %3836 = vmatpush1.msra.mxu0 0.0
    %3837 = vmatprep.subr.mxu0 0.0
    %3838 = vmatpush1.msra.mxu0 0.0
    %3839 = vmatprep.subr.mxu0 0.0
    %3840 = vmatpush1.msra.mxu0 0.0
    %3841 = vmatprep.mubr.f32.mxu0 0.0
    %3842 = vmatmul.mubr.f32.gmra.mrb[0].mxu0 %v3616
    %v3843 = vpop.f32.mrb[0].mxu0
    %v3844 = vadd.f32 %v3759, %v3843
    %v3845 = vpop.f32.mrb[0].mxu0
    %3846 = vmatprep.mubr.f32.mxu0 0.0
    %3847 = vmatmul.mubr.f32.gmra.mrb[0].mxu0 %v3635
    %v3848 = vpop.f32.mrb[0].mxu0
    %v3849 = vadd.f32 %v3764, %v3848
    %v3850 = vpop.f32.mrb[0].mxu0
    %3851 = vmatprep.mubr.f32.mxu0 0.0
    %3852 = vmatmul.mubr.f32.gmra.mrb[0].mxu0 %v3618
    %v3853 = vpop.f32.mrb[0].mxu0
    %v3854 = vadd.f32 %v3769, %v3853
    %v3855 = vpop.f32.mrb[0].mxu0
    %3856 = vmatprep.mubr.f32.mxu0 0.0
    %3857 = vmatmul.mubr.f32.gmra.mrb[0].mxu0 %v3636
    %v3858 = vpop.f32.mrb[0].mxu0
    %v3859 = vadd.f32 %v3774, %v3858
    %v3860 = vpop.f32.mrb[0].mxu0
    %3861 = vdwg.mxu0
    %v3862 = vmax.f32 %v3844, 0.0
    %v3863 = vmax.f32 %v3849, 0.0
    %v3864 = vmax.f32 %v3854, 0.0
    %v3865 = vmax.f32 %v3859, 0.0
    %v3870 = vcombine.high %v3862, %v3862
    %v3872 = vunpack.c.l.s4 1983009808
    %v3873 = vunpack.c.0.s8 %v3872
    %v3874 = vlaneseq
    %v3875 = vshrl.u32 %v3874, 7
    %v3876 = vsub.s32 %v3873, %v3875
    %v3877 = vrot.slane %v3862, %v3876
    %v3879 = vunpack.c.l.s4 1983009808
    %v3880 = vunpack.c.0.s8 %v3879
    %v3881 = vlaneseq
    %v3882 = vshrl.u32 %v3881, 7
    %v3883 = vsub.s32 %v3880, %v3882
    %v3884 = vrot.slane %v3870, %v3883
    %v3885 = vcombine.high %v3877, %v3877
    %v3886 = vcombine.high %v3884, %v3884
    %v3887 = vcombine.high %v3863, %v3863
    %v3889 = vunpack.c.l.s4 1983009808
    %v3890 = vunpack.c.0.s8 %v3889
    %v3891 = vlaneseq
    %v3892 = vshrl.u32 %v3891, 7
    %v3893 = vsub.s32 %v3890, %v3892
    %v3894 = vrot.slane %v3863, %v3893
    %v3896 = vunpack.c.l.s4 1983009808
    %v3897 = vunpack.c.0.s8 %v3896
    %v3898 = vlaneseq
    %v3899 = vshrl.u32 %v3898, 7
    %v3900 = vsub.s32 %v3897, %v3899
    %v3901 = vrot.slane %v3887, %v3900
    %v3902 = vcombine.high %v3894, %v3894
    %v3903 = vcombine.high %v3901, %v3901
    %v3904 = vcombine.high %v3864, %v3864
    %v3906 = vunpack.c.l.s4 1983009808
    %v3907 = vunpack.c.0.s8 %v3906
    %v3908 = vlaneseq
    %v3909 = vshrl.u32 %v3908, 7
    %v3910 = vsub.s32 %v3907, %v3909
    %v3911 = vrot.slane %v3864, %v3910
    %v3913 = vunpack.c.l.s4 1983009808
    %v3914 = vunpack.c.0.s8 %v3913
    %v3915 = vlaneseq
    %v3916 = vshrl.u32 %v3915, 7
    %v3917 = vsub.s32 %v3914, %v3916
    %v3918 = vrot.slane %v3904, %v3917
    %v3919 = vcombine.high %v3911, %v3911
    %v3920 = vcombine.high %v3918, %v3918
    %v3921 = vcombine.high %v3865, %v3865
    %v3923 = vunpack.c.l.s4 1983009808
    %v3924 = vunpack.c.0.s8 %v3923
    %v3925 = vlaneseq
    %v3926 = vshrl.u32 %v3925, 7
    %v3927 = vsub.s32 %v3924, %v3926
    %v3928 = vrot.slane %v3865, %v3927
    %v3930 = vunpack.c.l.s4 1983009808
    %v3931 = vunpack.c.0.s8 %v3930
    %v3932 = vlaneseq
    %v3933 = vshrl.u32 %v3932, 7
    %v3934 = vsub.s32 %v3931, %v3933
    %v3935 = vrot.slane %v3921, %v3934
    %v3936 = vcombine.high %v3928, %v3928
    %v3937 = vcombine.high %v3935, %v3935
    %v3954 = vrot.slane %v3877, 7
    %v3955 = vrot.slane %v3954, 2
    %v3956 = vrot.slane %v3885, 7
    %v3957 = vrot.slane %v3956, 2
    %v3958 = vrot.slane %v3884, 7
    %v3959 = vrot.slane %v3958, 2
    %v3960 = vrot.slane %v3886, 7
    %v3961 = vrot.slane %v3960, 2
    %v3962 = vrot.slane %v3894, 7
    %v3963 = vrot.slane %v3962, 2
    %v3964 = vrot.slane %v3902, 7
    %v3965 = vrot.slane %v3964, 2
    %v3966 = vrot.slane %v3901, 7
    %v3967 = vrot.slane %v3966, 2
    %v3968 = vrot.slane %v3903, 7
    %v3969 = vrot.slane %v3968, 2
    %v3970 = vrot.slane %v3911, 7
    %v3971 = vrot.slane %v3970, 2
    %v3972 = vrot.slane %v3919, 7
    %v3973 = vrot.slane %v3972, 2
    %v3974 = vrot.slane %v3918, 7
    %v3975 = vrot.slane %v3974, 2
    %v3976 = vrot.slane %v3920, 7
    %v3977 = vrot.slane %v3976, 2
    %v3978 = vrot.slane %v3928, 7
    %v3979 = vrot.slane %v3978, 2
    %v3980 = vrot.slane %v3936, 7
    %v3981 = vrot.slane %v3980, 2
    %v3982 = vrot.slane %v3935, 7
    %v3983 = vrot.slane %v3982, 2
    %v3984 = vrot.slane %v3937, 7
    %v3985 = vrot.slane %v3984, 2
    %v4002 = vadd.f32 %v3877, %v3955
    %v4003 = vadd.f32 %v3885, %v3957
    %v4004 = vadd.f32 %v3884, %v3959
    %v4005 = vadd.f32 %v3886, %v3961
    %v4006 = vadd.f32 %v3894, %v3963
    %v4007 = vadd.f32 %v3902, %v3965
    %v4008 = vadd.f32 %v3901, %v3967
    %v4009 = vadd.f32 %v3903, %v3969
    %v4010 = vadd.f32 %v3911, %v3971
    %v4011 = vadd.f32 %v3919, %v3973
    %v4012 = vadd.f32 %v3918, %v3975
    %v4013 = vadd.f32 %v3920, %v3977
    %v4014 = vadd.f32 %v3928, %v3979
    %v4015 = vadd.f32 %v3936, %v3981
    %v4016 = vadd.f32 %v3935, %v3983
    %v4017 = vadd.f32 %v3937, %v3985
    %v4018 = vmul.f32 %v4002, 0.5
    %v4019 = vmul.f32 %v4003, 0.5
    %v4020 = vmul.f32 %v4004, 0.5
    %v4021 = vmul.f32 %v4005, 0.5
    %v4022 = vmul.f32 %v4006, 0.5
    %v4023 = vmul.f32 %v4007, 0.5
    %v4024 = vmul.f32 %v4008, 0.5
    %v4025 = vmul.f32 %v4009, 0.5
    %v4026 = vmul.f32 %v4010, 0.5
    %v4027 = vmul.f32 %v4011, 0.5
    %v4028 = vmul.f32 %v4012, 0.5
    %v4029 = vmul.f32 %v4013, 0.5
    %v4030 = vmul.f32 %v4014, 0.5
    %v4031 = vmul.f32 %v4015, 0.5
    %v4032 = vmul.f32 %v4016, 0.5
    %v4033 = vmul.f32 %v4017, 0.5
    %v4042 = vlaneseq
    %v4043 = vshrl.u32 %v4042, 7
    %v4044 = vsub.s32 0, %v4043
    %v4045 = vrot.slane %v4018, %v4044
    %v4046 = vlaneseq
    %v4047 = vshrl.u32 %v4046, 7
    %v4048 = vsub.s32 0, %v4047
    %v4049 = vrot.slane %v4019, %v4048
    %v4050 = vlaneseq
    %v4051 = vshrl.u32 %v4050, 7
    %v4052 = vsub.s32 0, %v4051
    %v4053 = vrot.slane %v4020, %v4052
    %v4054 = vlaneseq
    %v4055 = vshrl.u32 %v4054, 7
    %v4056 = vsub.s32 0, %v4055
    %v4057 = vrot.slane %v4021, %v4056
    %v4058 = vlaneseq
    %v4059 = vshrl.u32 %v4058, 7
    %v4060 = vsub.s32 0, %v4059
    %v4061 = vrot.slane %v4026, %v4060
    %v4062 = vlaneseq
    %v4063 = vshrl.u32 %v4062, 7
    %v4064 = vsub.s32 0, %v4063
    %v4065 = vrot.slane %v4027, %v4064
    %v4066 = vlaneseq
    %v4067 = vshrl.u32 %v4066, 7
    %v4068 = vsub.s32 0, %v4067
    %v4069 = vrot.slane %v4028, %v4068
    %v4070 = vlaneseq
    %v4071 = vshrl.u32 %v4070, 7
    %v4072 = vsub.s32 0, %v4071
    %v4073 = vrot.slane %v4029, %v4072
    %v4074 = vsel %vm3109, %v4049, %v4045
    %v4075 = vsel %vm3111, %v4053, %v4074
    %v4076 = vsel %vm3113, %v4057, %v4075
    %v4077 = vsel %vm3109, %v4065, %v4061
    %v4078 = vsel %vm3111, %v4069, %v4077
    %v4079 = vsel %vm3113, %v4073, %v4078
    %v4084 = vlaneseq
    %v4085 = vshrl.u32 %v4084, 7
    %v4086 = vsub.s32 0, %v4085
    %v4087 = vrot.slane %v4022, %v4086
    %v4088 = vlaneseq
    %v4089 = vshrl.u32 %v4088, 7
    %v4090 = vsub.s32 0, %v4089
    %v4091 = vrot.slane %v4030, %v4090
    %v4092 = vsel %vm3109, %v4053, %v4049
    %v4093 = vsel %vm3111, %v4057, %v4092
    %v4094 = vsel %vm3113, %v4087, %v4093
    %v4095 = vsel %vm3109, %v4069, %v4065
    %v4096 = vsel %vm3111, %v4073, %v4095
    %v4097 = vsel %vm3113, %v4091, %v4096
    %4098 = vrot.lane.b32.xlu0 %v4094, 32
    %v4099 = vpop.permute.xlu0 %4098
    %4100 = vrot.lane.b32.xlu0 %v4097, 32
    %v4101 = vpop.permute.xlu0 %4100
    %v4106 = vlaneseq
    %v4107 = vshrl.u32 %v4106, 7
    %v4108 = vsub.s32 0, %v4107
    %v4109 = vrot.slane %v4023, %v4108
    %v4110 = vlaneseq
    %v4111 = vshrl.u32 %v4110, 7
    %v4112 = vsub.s32 0, %v4111
    %v4113 = vrot.slane %v4031, %v4112
    %v4114 = vsel %vm3109, %v4057, %v4053
    %v4115 = vsel %vm3111, %v4087, %v4114
    %v4116 = vsel %vm3113, %v4109, %v4115
    %v4117 = vsel %vm3109, %v4073, %v4069
    %v4118 = vsel %vm3111, %v4091, %v4117
    %v4119 = vsel %vm3113, %v4113, %v4118
    %4120 = vrot.lane.b32.xlu0 %v4116, 64
    %v4121 = vpop.permute.xlu0 %4120
    %4122 = vrot.lane.b32.xlu0 %v4119, 64
    %v4123 = vpop.permute.xlu0 %4122
    %v4128 = vlaneseq
    %v4129 = vshrl.u32 %v4128, 7
    %v4130 = vsub.s32 0, %v4129
    %v4131 = vrot.slane %v4024, %v4130
    %v4132 = vlaneseq
    %v4133 = vshrl.u32 %v4132, 7
    %v4134 = vsub.s32 0, %v4133
    %v4135 = vrot.slane %v4032, %v4134
    %v4136 = vsel %vm3109, %v4087, %v4057
    %v4137 = vsel %vm3111, %v4109, %v4136
    %v4138 = vsel %vm3113, %v4131, %v4137
    %v4139 = vsel %vm3109, %v4091, %v4073
    %v4140 = vsel %vm3111, %v4113, %v4139
    %v4141 = vsel %vm3113, %v4135, %v4140
    %4142 = vrot.lane.b32.xlu0 %v4138, 96
    %v4143 = vpop.permute.xlu0 %4142
    %4144 = vrot.lane.b32.xlu0 %v4141, 96
    %v4145 = vpop.permute.xlu0 %4144
    %v4150 = vlaneseq
    %v4151 = vshrl.u32 %v4150, 7
    %v4152 = vsub.s32 0, %v4151
    %v4153 = vrot.slane %v4025, %v4152
    %v4154 = vlaneseq
    %v4155 = vshrl.u32 %v4154, 7
    %v4156 = vsub.s32 0, %v4155
    %v4157 = vrot.slane %v4033, %v4156
    %v4158 = vsel %vm3109, %v4109, %v4087
    %v4159 = vsel %vm3111, %v4131, %v4158
    %v4160 = vsel %vm3113, %v4153, %v4159
    %v4161 = vsel %vm3109, %v4113, %v4091
    %v4162 = vsel %vm3111, %v4135, %v4161
    %v4163 = vsel %vm3113, %v4157, %v4162
    %v4164 = vsel %vm402, %v4076, %v4099
    %v4165 = vsel %vm402, %v4079, %v4101
    %v4166 = vsel %vm316, %v4164, %v4121
    %v4167 = vsel %vm316, %v4165, %v4123
    %v4168 = vsel %vm3614, %v4166, %v4143
    %v4169 = vsel %vm3614, %v4167, %v4145
    %v4172 = vcombine.low %v4168, %v4160
    %v4173 = vcombine.low %v4169, %v4163
    %v4174 = vld [vmem:[%s49] sm:$0xff]
    %v4175 = vld [vmem:[%s49 + $0x8] sm:$0xff]
    %v4176 = vld [vmem:[%s49 + $0x10] sm:$0xff]
    %v4177 = vld [vmem:[%s49 + $0x18] sm:$0xff]
    %v4178 = vld [vmem:[%s49 + $0x20] sm:$0xff]
    %v4179 = vld [vmem:[%s49 + $0x28] sm:$0xff]
    %v4180 = vld [vmem:[%s49 + $0x30] sm:$0xff]
    %v4181 = vld [vmem:[%s49 + $0x38] sm:$0xff]
    %v4182 = vld [vmem:[%s49 + $0x40] sm:$0xff]
    %v4183 = vld [vmem:[%s49 + $0x48] sm:$0xff]
    %v4184 = vld [vmem:[%s49 + $0x50] sm:$0xff]
    %v4185 = vld [vmem:[%s49 + $0x58] sm:$0xff]
    %v4186 = vld [vmem:[%s49 + $0x60] sm:$0xff]
    %v4187 = vld [vmem:[%s49 + $0x68] sm:$0xff]
    %v4188 = vld [vmem:[%s49 + $0x70] sm:$0xff]
    %v4189 = vld [vmem:[%s49 + $0x78] sm:$0xff]
    %v4190 = vld [vmem:[%s49 + $0x80] sm:$0xff]
    %v4191 = vld [vmem:[%s49 + $0x88] sm:$0xff]
    %v4192 = vld [vmem:[%s49 + $0x90] sm:$0xff]
    %v4193 = vld [vmem:[%s49 + $0x98] sm:$0xff]
    %v4194 = vld [vmem:[%s51] sm:$0x1]
    %v4196 = vlaneseq
    %v4197 = vshrl.u32 %v4196, 7
    %v4198 = vsub.s32 0, %v4197
    %v4199 = vrot.slane %v4194, %v4198
    %v4201 = vcombine.low %v4172, %v4173
    %v4202 = vcombine.high %v4172, %v4173
    %v4204 = vsel %vm402, %v4202, 0
    %4206 = vmatprep.subr.mxu0 0.0
    %4207 = vmatpush1.msra.mxu0 %v4174
    %4208 = vmatprep.subr.mxu0 0.0
    %4209 = vmatpush1.msra.mxu0 %v4175
    %4210 = vmatprep.subr.mxu0 0.0
    %4211 = vmatpush1.msra.mxu0 %v4176
    %4212 = vmatprep.subr.mxu0 0.0
    %4213 = vmatpush1.msra.mxu0 %v4177
    %4214 = vmatprep.subr.mxu0 0.0
    %4215 = vmatpush1.msra.mxu0 %v4178
    %4216 = vmatprep.subr.mxu0 0.0
    %4217 = vmatpush1.msra.mxu0 %v4179
    %4218 = vmatprep.subr.mxu0 0.0
    %4219 = vmatpush1.msra.mxu0 %v4180
    %4220 = vmatprep.subr.mxu0 0.0
    %4221 = vmatpush1.msra.mxu0 %v4181
    %4222 = vmatprep.subr.mxu0 0.0
    %4223 = vmatpush1.msra.mxu0 %v4182
    %4224 = vmatprep.subr.mxu0 0.0
    %4225 = vmatpush1.msra.mxu0 %v4183
    %4226 = vmatprep.subr.mxu0 0.0
    %4227 = vmatpush1.msra.mxu0 %v4184
    %4228 = vmatprep.subr.mxu0 0.0
    %4229 = vmatpush1.msra.mxu0 %v4185
    %4230 = vmatprep.subr.mxu0 0.0
    %4231 = vmatpush1.msra.mxu0 %v4186
    %4232 = vmatprep.subr.mxu0 0.0
    %4233 = vmatpush1.msra.mxu0 %v4187
    %4234 = vmatprep.subr.mxu0 0.0
    %4235 = vmatpush1.msra.mxu0 %v4188
    %4236 = vmatprep.subr.mxu0 0.0
    %4237 = vmatpush1.msra.mxu0 %v4189
    %4238 = vmatprep.subr.mxu0 0.0
    %4239 = vmatpush1.msra.mxu0 %v4190
    %4240 = vmatprep.subr.mxu0 0.0
    %4241 = vmatpush1.msra.mxu0 %v4191
    %4242 = vmatprep.subr.mxu0 0.0
    %4243 = vmatpush1.msra.mxu0 %v4192
    %4244 = vmatprep.subr.mxu0 0.0
    %4245 = vmatpush1.msra.mxu0 %v4193
    %4246 = vmatprep.subr.mxu0 0.0
    %4247 = vmatpush1.msra.mxu0 0.0
    %4248 = vmatprep.subr.mxu0 0.0
    %4249 = vmatpush1.msra.mxu0 0.0
    %4250 = vmatprep.subr.mxu0 0.0
    %4251 = vmatpush1.msra.mxu0 0.0
    %4252 = vmatprep.subr.mxu0 0.0
    %4253 = vmatpush1.msra.mxu0 0.0
    %4254 = vmatprep.subr.mxu0 0.0
    %4255 = vmatpush1.msra.mxu0 0.0
    %4256 = vmatprep.subr.mxu0 0.0
    %4257 = vmatpush1.msra.mxu0 0.0
    %4258 = vmatprep.subr.mxu0 0.0
    %4259 = vmatpush1.msra.mxu0 0.0
    %4260 = vmatprep.subr.mxu0 0.0
    %4261 = vmatpush1.msra.mxu0 0.0
    %4262 = vmatprep.subr.mxu0 0.0
    %4263 = vmatpush1.msra.mxu0 0.0
    %4264 = vmatprep.subr.mxu0 0.0
    %4265 = vmatpush1.msra.mxu0 0.0
    %4266 = vmatprep.subr.mxu0 0.0
    %4267 = vmatpush1.msra.mxu0 0.0
    %4268 = vmatprep.subr.mxu0 0.0
    %4269 = vmatpush1.msra.mxu0 0.0
    %4270 = vmatprep.mubr.f32.mxu0 %v4204
    %4271 = vmatmul.mubr.f32.gmra.mrb[0].mxu0 %v4201
    %v4272 = vpop.f32.mrb[0].mxu0
    %v4273 = vadd.f32 %v4199, %v4272
    %v4274 = vpop.f32.mrb[0].mxu0
    %4275 = vdwg.mxu0
    %v4276 = vmax.f32 %v4273, 0.0
    %v4278 = vcombine.high %v4276, %v4276
    %v4280 = vunpack.c.l.s4 1983009808
    %v4281 = vunpack.c.0.s8 %v4280
    %v4282 = vlaneseq
    %v4283 = vshrl.u32 %v4282, 7
    %v4284 = vsub.s32 %v4281, %v4283
    %v4285 = vrot.slane %v4276, %v4284
    %v4287 = vunpack.c.l.s4 1983009808
    %v4288 = vunpack.c.0.s8 %v4287
    %v4289 = vlaneseq
    %v4290 = vshrl.u32 %v4289, 7
    %v4291 = vsub.s32 %v4288, %v4290
    %v4292 = vrot.slane %v4278, %v4291
    %v4293 = vcombine.high %v4285, %v4285
    %v4294 = vcombine.high %v4292, %v4292
    %v4299 = vrot.slane %v4285, 7
    %v4300 = vrot.slane %v4299, 2
    %v4301 = vrot.slane %v4293, 7
    %v4302 = vrot.slane %v4301, 2
    %v4303 = vrot.slane %v4292, 7
    %v4304 = vrot.slane %v4303, 2
    %v4305 = vrot.slane %v4294, 7
    %v4306 = vrot.slane %v4305, 2
    %v4311 = vadd.f32 %v4285, %v4300
    %v4312 = vadd.f32 %v4293, %v4302
    %v4313 = vadd.f32 %v4292, %v4304
    %v4314 = vadd.f32 %v4294, %v4306
    %v4315 = vmul.f32 %v4311, 0.5
    %v4316 = vmul.f32 %v4312, 0.5
    %v4317 = vmul.f32 %v4313, 0.5
    %v4318 = vmul.f32 %v4314, 0.5
    %v4319 = vld [vmem:[%s53] sm:$0xff]
    %v4320 = vld [vmem:[%s53 + $0x8] sm:$0xff]
    %v4321 = vld [vmem:[%s53 + $0x10] sm:$0xff]
    %v4322 = vld [vmem:[%s53 + $0x18] sm:$0xff]
    %v4323 = vld [vmem:[%s55] sm:$0x1]
    %v4325 = vlaneseq
    %v4326 = vshrl.u32 %v4325, 7
    %v4327 = vsub.s32 0, %v4326
    %v4328 = vrot.slane %v4323, %v4327
    %v4334 = vlaneseq
    %v4335 = vshrl.u32 %v4334, 7
    %v4336 = vsub.s32 0, %v4335
    %v4337 = vrot.slane %v4315, %v4336
    %v4338 = vlaneseq
    %v4339 = vshrl.u32 %v4338, 7
    %v4340 = vsub.s32 0, %v4339
    %v4341 = vrot.slane %v4316, %v4340
    %v4342 = vlaneseq
    %v4343 = vshrl.u32 %v4342, 7
    %v4344 = vsub.s32 0, %v4343
    %v4345 = vrot.slane %v4317, %v4344
    %v4346 = vlaneseq
    %v4347 = vshrl.u32 %v4346, 7
    %v4348 = vsub.s32 0, %v4347
    %v4349 = vrot.slane %v4318, %v4348
    %v4350 = vsel %vm3109, %v4341, %v4337
    %v4351 = vsel %vm3111, %v4345, %v4350
    %v4352 = vsel %vm3113, %v4349, %v4351
    %v4353 = vsel %vm402, %v4352, 0
    %4355 = vmatprep.subr.mxu0 0.0
    %4356 = vmatpush1.msra.mxu0 %v4319
    %4357 = vmatprep.subr.mxu0 0.0
    %4358 = vmatpush1.msra.mxu0 %v4320
    %4359 = vmatprep.subr.mxu0 0.0
    %4360 = vmatpush1.msra.mxu0 %v4321
    %4361 = vmatprep.subr.mxu0 0.0
    %4362 = vmatpush1.msra.mxu0 %v4322
    %4363 = vmatprep.subr.mxu0 0.0
    %4364 = vmatpush1.msra.mxu0 0.0
    %4365 = vmatprep.subr.mxu0 0.0
    %4366 = vmatpush1.msra.mxu0 0.0
    %4367 = vmatprep.subr.mxu0 0.0
    %4368 = vmatpush1.msra.mxu0 0.0
    %4369 = vmatprep.subr.mxu0 0.0
    %4370 = vmatpush1.msra.mxu0 0.0
    %4371 = vmatprep.subr.mxu0 0.0
    %4372 = vmatpush1.msra.mxu0 0.0
    %4373 = vmatprep.subr.mxu0 0.0
    %4374 = vmatpush1.msra.mxu0 0.0
    %4375 = vmatprep.subr.mxu0 0.0
    %4376 = vmatpush1.msra.mxu0 0.0
    %4377 = vmatprep.subr.mxu0 0.0
    %4378 = vmatpush1.msra.mxu0 0.0
    %4379 = vmatprep.subr.mxu0 0.0
    %4380 = vmatpush1.msra.mxu0 0.0
    %4381 = vmatprep.subr.mxu0 0.0
    %4382 = vmatpush1.msra.mxu0 0.0
    %4383 = vmatprep.subr.mxu0 0.0
    %4384 = vmatpush1.msra.mxu0 0.0
    %4385 = vmatprep.subr.mxu0 0.0
    %4386 = vmatpush1.msra.mxu0 0.0
    %4387 = vmatprep.subr.mxu0 0.0
    %4388 = vmatpush1.msra.mxu0 0.0
    %4389 = vmatprep.subr.mxu0 0.0
    %4390 = vmatpush1.msra.mxu0 0.0
    %4391 = vmatprep.subr.mxu0 0.0
    %4392 = vmatpush1.msra.mxu0 0.0
    %4393 = vmatprep.subr.mxu0 0.0
    %4394 = vmatpush1.msra.mxu0 0.0
    %4395 = vmatprep.subr.mxu0 0.0
    %4396 = vmatpush1.msra.mxu0 0.0
    %4397 = vmatprep.subr.mxu0 0.0
    %4398 = vmatpush1.msra.mxu0 0.0
    %4399 = vmatprep.subr.mxu0 0.0
    %4400 = vmatpush1.msra.mxu0 0.0
    %4401 = vmatprep.subr.mxu0 0.0
    %4402 = vmatpush1.msra.mxu0 0.0
    %4403 = vmatprep.subr.mxu0 0.0
    %4404 = vmatpush1.msra.mxu0 0.0
    %4405 = vmatprep.subr.mxu0 0.0
    %4406 = vmatpush1.msra.mxu0 0.0
    %4407 = vmatprep.subr.mxu0 0.0
    %4408 = vmatpush1.msra.mxu0 0.0
    %4409 = vmatprep.subr.mxu0 0.0
    %4410 = vmatpush1.msra.mxu0 0.0
    %4411 = vmatprep.subr.mxu0 0.0
    %4412 = vmatpush1.msra.mxu0 0.0
    %4413 = vmatprep.subr.mxu0 0.0
    %4414 = vmatpush1.msra.mxu0 0.0
    %4415 = vmatprep.subr.mxu0 0.0
    %4416 = vmatpush1.msra.mxu0 0.0
    %4417 = vmatprep.subr.mxu0 0.0
    %4418 = vmatpush1.msra.mxu0 0.0
    %4419 = vmatprep.mubr.f32.mxu0 0.0
    %4420 = vmatmul.mubr.f32.gmra.mrb[0].mxu0 %v4353
    %v4421 = vpop.f32.mrb[0].mxu0
    %v4422 = vadd.f32 %v4328, %v4421
    %v4423 = vpop.f32.mrb[0].mxu0
    %4424 = vdwg.mxu0
    %v4427 = vunpack.c.l.s4 1983009808
    %v4428 = vunpack.c.0.s8 %v4427
    %v4429 = vlaneseq
    %v4430 = vshrl.u32 %v4429, 7
    %v4431 = vsub.s32 %v4428, %v4430
    %v4432 = vrot.slane %v4422, %v4431
    %v4433 = vcombine.high %v4432, %v4432
    %v4436 = vrot.slane %v4432, 7
    %v4437 = vrot.slane %v4436, 2
    %v4438 = vrot.slane %v4433, 7
    %v4439 = vrot.slane %v4438, 2
    %v4442 = vadd.f32 %v4432, %v4437
    %v4443 = vadd.f32 %v4433, %v4439
    %v4444 = vmul.f32 %v4442, 0.5
    %v4445 = vmul.f32 %v4443, 0.5
    %v4448 = vlaneseq
    %v4449 = vshrl.u32 %v4448, 7
    %v4450 = vsub.s32 0, %v4449
    %v4451 = vrot.slane %v4444, %v4450
    %v4452 = vlaneseq
    %v4453 = vshrl.u32 %v4452, 7
    %v4454 = vsub.s32 0, %v4453
    %v4455 = vrot.slane %v4445, %v4454
    %v4456 = vsel %vm3109, %v4455, %v4451
    %v4458 = vsel %vm1071, %v4456, -inf
    %4459 = vmax.xlane.f32.xlu0 %v4458
    %v4460 = vpop.xlane.xlu0 %4459
    %v4463 = vunpack.c.l.s4 269488144
    %v4464 = vunpack.c.0.s8 %v4463
    %v4465 = vlaneseq
    %v4466 = vshrl.u32 %v4465, 7
    %v4467 = vsub.s32 %v4464, %v4466
    %v4468 = vrot.slane %v4460, %v4467
    %v4469 = vrot.slane %v4468, 1
    %v4472 = vsub.f32 %v4444, %v4468
    %v4473 = vsub.f32 %v4445, %v4469
    %v4474 = vmul.f32 %v4472, 1.442695
    %v4475 = vpow.pop %v4474
    %v4476 = vmul.f32 %v4473, 1.442695
    %v4477 = vpow.pop %v4476
    %v4480 = vlaneseq
    %v4481 = vshrl.u32 %v4480, 7
    %v4482 = vsub.s32 0, %v4481
    %v4483 = vrot.slane %v4475, %v4482
    %v4484 = vlaneseq
    %v4485 = vshrl.u32 %v4484, 7
    %v4486 = vsub.s32 0, %v4485
    %v4487 = vrot.slane %v4477, %v4486
    %v4488 = vsel %vm3109, %v4487, %v4483
    %v4490 = vsel %vm1071, %v4488, 0.0
    %4491 = vadd.xlane.f32.xlu0 %v4490
    %v4492 = vpop.xlane.xlu0 %4491
    %v4493 = vlog2.pop %v4492
    %v4494 = vmul.f32 %v4493, 0.6931472
    %v4497 = vunpack.c.l.s4 269488144
    %v4498 = vunpack.c.0.s8 %v4497
    %v4499 = vlaneseq
    %v4500 = vshrl.u32 %v4499, 7
    %v4501 = vsub.s32 %v4498, %v4500
    %v4502 = vrot.slane %v4494, %v4501
    %v4503 = vrot.slane %v4502, 1
    %v4506 = vsub.f32 %v4472, %v4502
    %v4507 = vsub.f32 %v4473, %v4503
    %v4508 = vld [vmem:[%s61] sm:$0x1]
    %v4509 = vld [vmem:[%s63] sm:$0x1]
    %v4511 = vlaneseq
    %v4512 = vshrl.u32 %v4511, 7
    %v4513 = vsub.s32 0, %v4512
    %v4514 = vrot.slane %v4509, %v4513
    %v4517 = vsel %vm1562, %v300, 0
    %vm4519 = vcmask 1040384
    %v4521 = vsel %vm4519, %v4508, 0
    %4523 = vmatprep.subr.mxu0 0.0
    %4524 = vmatpush1.msra.mxu0 %v4521
    %4525 = vmatprep.subr.mxu0 0.0
    %4526 = vmatpush1.msra.mxu0 0.0
    %4527 = vmatprep.subr.mxu0 0.0
    %4528 = vmatpush1.msra.mxu0 0.0
    %4529 = vmatprep.subr.mxu0 0.0
    %4530 = vmatpush1.msra.mxu0 0.0
    %4531 = vmatprep.subr.mxu0 0.0
    %4532 = vmatpush1.msra.mxu0 0.0
    %4533 = vmatprep.subr.mxu0 0.0
    %4534 = vmatpush1.msra.mxu0 0.0
    %4535 = vmatprep.subr.mxu0 0.0
    %4536 = vmatpush1.msra.mxu0 0.0
    %4537 = vmatprep.subr.mxu0 0.0
    %4538 = vmatpush1.msra.mxu0 0.0
    %4539 = vmatprep.subr.mxu0 0.0
    %4540 = vmatpush1.msra.mxu0 0.0
    %4541 = vmatprep.subr.mxu0 0.0
    %4542 = vmatpush1.msra.mxu0 0.0
    %4543 = vmatprep.subr.mxu0 0.0
    %4544 = vmatpush1.msra.mxu0 0.0
    %4545 = vmatprep.subr.mxu0 0.0
    %4546 = vmatpush1.msra.mxu0 0.0
    %4547 = vmatprep.subr.mxu0 0.0
    %4548 = vmatpush1.msra.mxu0 0.0
    %4549 = vmatprep.subr.mxu0 0.0
    %4550 = vmatpush1.msra.mxu0 0.0
    %4551 = vmatprep.subr.mxu0 0.0
    %4552 = vmatpush1.msra.mxu0 0.0
    %4553 = vmatprep.subr.mxu0 0.0
    %4554 = vmatpush1.msra.mxu0 0.0
    %4555 = vmatprep.subr.mxu0 0.0
    %4556 = vmatpush1.msra.mxu0 0.0
    %4557 = vmatprep.subr.mxu0 0.0
    %4558 = vmatpush1.msra.mxu0 0.0
    %4559 = vmatprep.subr.mxu0 0.0
    %4560 = vmatpush1.msra.mxu0 0.0
    %4561 = vmatprep.subr.mxu0 0.0
    %4562 = vmatpush1.msra.mxu0 0.0
    %4563 = vmatprep.subr.mxu0 0.0
    %4564 = vmatpush1.msra.mxu0 0.0
    %4565 = vmatprep.subr.mxu0 0.0
    %4566 = vmatpush1.msra.mxu0 0.0
    %4567 = vmatprep.subr.mxu0 0.0
    %4568 = vmatpush1.msra.mxu0 0.0
    %4569 = vmatprep.subr.mxu0 0.0
    %4570 = vmatpush1.msra.mxu0 0.0
    %4571 = vmatprep.subr.mxu0 0.0
    %4572 = vmatpush1.msra.mxu0 0.0
    %4573 = vmatprep.subr.mxu0 0.0
    %4574 = vmatpush1.msra.mxu0 0.0
    %4575 = vmatprep.subr.mxu0 0.0
    %4576 = vmatpush1.msra.mxu0 0.0
    %4577 = vmatprep.subr.mxu0 0.0
    %4578 = vmatpush1.msra.mxu0 0.0
    %4579 = vmatprep.subr.mxu0 0.0
    %4580 = vmatpush1.msra.mxu0 0.0
    %4581 = vmatprep.subr.mxu0 0.0
    %4582 = vmatpush1.msra.mxu0 0.0
    %4583 = vmatprep.subr.mxu0 0.0
    %4584 = vmatpush1.msra.mxu0 0.0
    %4585 = vmatprep.subr.mxu0 0.0
    %4586 = vmatpush1.msra.mxu0 0.0
    %4587 = vmatprep.mubr.f32.mxu0 0.0
    %4588 = vmatmul.mubr.f32.gmra.mrb[0].mxu0 %v4517
    %v4589 = vpop.f32.mrb[0].mxu0
    %v4590 = vadd.f32 %v4514, %v4589
    %v4591 = vpop.f32.mrb[0].mxu0
    %4592 = vdwg.mxu0
    %v4593 = vmax.f32 %v4590, 0.0
    %v4594 = vld [vmem:[%s65] sm:$0xff]
    %v4595 = vld [vmem:[%s65 + $0x8] sm:$0xff]
    %v4596 = vld [vmem:[%s67] sm:$0x1]
    %v4598 = vlaneseq
    %v4599 = vshrl.u32 %v4598, 7
    %v4600 = vsub.s32 0, %v4599
    %v4601 = vrot.slane %v4596, %v4600
    %vm4603 = vcmask 130048
    %v4605 = vsel %vm4603, %v4593, 0
    %4607 = vmatprep.subr.mxu0 0.0
    %4608 = vmatpush1.msra.mxu0 %v4594
    %4609 = vmatprep.subr.mxu0 0.0
    %4610 = vmatpush1.msra.mxu0 %v4595
    %4611 = vmatprep.subr.mxu0 0.0
    %4612 = vmatpush1.msra.mxu0 0.0
    %4613 = vmatprep.subr.mxu0 0.0
    %4614 = vmatpush1.msra.mxu0 0.0
    %4615 = vmatprep.subr.mxu0 0.0
    %4616 = vmatpush1.msra.mxu0 0.0
    %4617 = vmatprep.subr.mxu0 0.0
    %4618 = vmatpush1.msra.mxu0 0.0
    %4619 = vmatprep.subr.mxu0 0.0
    %4620 = vmatpush1.msra.mxu0 0.0
    %4621 = vmatprep.subr.mxu0 0.0
    %4622 = vmatpush1.msra.mxu0 0.0
    %4623 = vmatprep.subr.mxu0 0.0
    %4624 = vmatpush1.msra.mxu0 0.0
    %4625 = vmatprep.subr.mxu0 0.0
    %4626 = vmatpush1.msra.mxu0 0.0
    %4627 = vmatprep.subr.mxu0 0.0
    %4628 = vmatpush1.msra.mxu0 0.0
    %4629 = vmatprep.subr.mxu0 0.0
    %4630 = vmatpush1.msra.mxu0 0.0
    %4631 = vmatprep.subr.mxu0 0.0
    %4632 = vmatpush1.msra.mxu0 0.0
    %4633 = vmatprep.subr.mxu0 0.0
    %4634 = vmatpush1.msra.mxu0 0.0
    %4635 = vmatprep.subr.mxu0 0.0
    %4636 = vmatpush1.msra.mxu0 0.0
    %4637 = vmatprep.subr.mxu0 0.0
    %4638 = vmatpush1.msra.mxu0 0.0
    %4639 = vmatprep.subr.mxu0 0.0
    %4640 = vmatpush1.msra.mxu0 0.0
    %4641 = vmatprep.subr.mxu0 0.0
    %4642 = vmatpush1.msra.mxu0 0.0
    %4643 = vmatprep.subr.mxu0 0.0
    %4644 = vmatpush1.msra.mxu0 0.0
    %4645 = vmatprep.subr.mxu0 0.0
    %4646 = vmatpush1.msra.mxu0 0.0
    %4647 = vmatprep.subr.mxu0 0.0
    %4648 = vmatpush1.msra.mxu0 0.0
    %4649 = vmatprep.subr.mxu0 0.0
    %4650 = vmatpush1.msra.mxu0 0.0
    %4651 = vmatprep.subr.mxu0 0.0
    %4652 = vmatpush1.msra.mxu0 0.0
    %4653 = vmatprep.subr.mxu0 0.0
    %4654 = vmatpush1.msra.mxu0 0.0
    %4655 = vmatprep.subr.mxu0 0.0
    %4656 = vmatpush1.msra.mxu0 0.0
    %4657 = vmatprep.subr.mxu0 0.0
    %4658 = vmatpush1.msra.mxu0 0.0
    %4659 = vmatprep.subr.mxu0 0.0
    %4660 = vmatpush1.msra.mxu0 0.0
    %4661 = vmatprep.subr.mxu0 0.0
    %4662 = vmatpush1.msra.mxu0 0.0
    %4663 = vmatprep.subr.mxu0 0.0
    %4664 = vmatpush1.msra.mxu0 0.0
    %4665 = vmatprep.subr.mxu0 0.0
    %4666 = vmatpush1.msra.mxu0 0.0
    %4667 = vmatprep.subr.mxu0 0.0
    %4668 = vmatpush1.msra.mxu0 0.0
    %4669 = vmatprep.subr.mxu0 0.0
    %4670 = vmatpush1.msra.mxu0 0.0
    %4671 = vmatprep.mubr.f32.mxu0 0.0
    %4672 = vmatmul.mubr.f32.gmra.mrb[0].mxu0 %v4605
    %v4673 = vpop.f32.mrb[0].mxu0
    %v4674 = vadd.f32 %v4601, %v4673
    %v4675 = vpop.f32.mrb[0].mxu0
    %4676 = vdwg.mxu0
    %v4677 = vmax.f32 %v4674, 0.0
    %v4678 = vld [vmem:[%s69] sm:$0xff]
    %v4679 = vld [vmem:[%s69 + $0x8] sm:$0xff]
    %v4680 = vld [vmem:[#allocation2] sm:$0x1]
    %v4682 = vlaneseq
    %v4683 = vshrl.u32 %v4682, 7
    %v4684 = vsub.s32 0, %v4683
    %v4685 = vrot.slane %v4680, %v4684
    %v4688 = vsel %vm4603, %v4677, 0
    %4690 = vmatprep.subr.mxu0 0.0
    %4691 = vmatpush1.msra.mxu0 %v4678
    %4692 = vmatprep.subr.mxu0 0.0
    %4693 = vmatpush1.msra.mxu0 %v4679
    %4694 = vmatprep.subr.mxu0 0.0
    %4695 = vmatpush1.msra.mxu0 0.0
    %4696 = vmatprep.subr.mxu0 0.0
    %4697 = vmatpush1.msra.mxu0 0.0
    %4698 = vmatprep.subr.mxu0 0.0
    %4699 = vmatpush1.msra.mxu0 0.0
    %4700 = vmatprep.subr.mxu0 0.0
    %4701 = vmatpush1.msra.mxu0 0.0
    %4702 = vmatprep.subr.mxu0 0.0
    %4703 = vmatpush1.msra.mxu0 0.0
    %4704 = vmatprep.subr.mxu0 0.0
    %4705 = vmatpush1.msra.mxu0 0.0
    %4706 = vmatprep.subr.mxu0 0.0
    %4707 = vmatpush1.msra.mxu0 0.0
    %4708 = vmatprep.subr.mxu0 0.0
    %4709 = vmatpush1.msra.mxu0 0.0
    %4710 = vmatprep.subr.mxu0 0.0
    %4711 = vmatpush1.msra.mxu0 0.0
    %4712 = vmatprep.subr.mxu0 0.0
    %4713 = vmatpush1.msra.mxu0 0.0
    %4714 = vmatprep.subr.mxu0 0.0
    %4715 = vmatpush1.msra.mxu0 0.0
    %4716 = vmatprep.subr.mxu0 0.0
    %4717 = vmatpush1.msra.mxu0 0.0
    %4718 = vmatprep.subr.mxu0 0.0
    %4719 = vmatpush1.msra.mxu0 0.0
    %4720 = vmatprep.subr.mxu0 0.0
    %4721 = vmatpush1.msra.mxu0 0.0
    %4722 = vmatprep.subr.mxu0 0.0
    %4723 = vmatpush1.msra.mxu0 0.0
    %4724 = vmatprep.subr.mxu0 0.0
    %4725 = vmatpush1.msra.mxu0 0.0
    %4726 = vmatprep.subr.mxu0 0.0
    %4727 = vmatpush1.msra.mxu0 0.0
    %4728 = vmatprep.subr.mxu0 0.0
    %4729 = vmatpush1.msra.mxu0 0.0
    %4730 = vmatprep.subr.mxu0 0.0
    %4731 = vmatpush1.msra.mxu0 0.0
    %4732 = vmatprep.subr.mxu0 0.0
    %4733 = vmatpush1.msra.mxu0 0.0
    %4734 = vmatprep.subr.mxu0 0.0
    %4735 = vmatpush1.msra.mxu0 0.0
    %4736 = vmatprep.subr.mxu0 0.0
    %4737 = vmatpush1.msra.mxu0 0.0
    %4738 = vmatprep.subr.mxu0 0.0
    %4739 = vmatpush1.msra.mxu0 0.0
    %4740 = vmatprep.subr.mxu0 0.0
    %4741 = vmatpush1.msra.mxu0 0.0
    %4742 = vmatprep.subr.mxu0 0.0
    %4743 = vmatpush1.msra.mxu0 0.0
    %4744 = vmatprep.subr.mxu0 0.0
    %4745 = vmatpush1.msra.mxu0 0.0
    %4746 = vmatprep.subr.mxu0 0.0
    %4747 = vmatpush1.msra.mxu0 0.0
    %4748 = vmatprep.subr.mxu0 0.0
    %4749 = vmatpush1.msra.mxu0 0.0
    %4750 = vmatprep.subr.mxu0 0.0
    %4751 = vmatpush1.msra.mxu0 0.0
    %4752 = vmatprep.subr.mxu0 0.0
    %4753 = vmatpush1.msra.mxu0 0.0
    %4754 = vmatprep.mubr.f32.mxu0 0.0
    %4755 = vmatmul.mubr.f32.gmra.mrb[0].mxu0 %v4688
    %v4756 = vpop.f32.mrb[0].mxu0
    %v4757 = vadd.f32 %v4685, %v4756
    %v4758 = vpop.f32.mrb[0].mxu0
    %4759 = vdwg.mxu0
    %v4760 = vmax.f32 %v4757, 0.0
    %v4761 = vld [vmem:[%s73] sm:$0xff]
    %v4762 = vld [vmem:[%s73 + $0x8] sm:$0xff]
    %v4763 = vld [vmem:[#allocation4] sm:$0x1]
    %v4765 = vlaneseq
    %v4766 = vshrl.u32 %v4765, 7
    %v4767 = vsub.s32 0, %v4766
    %v4768 = vrot.slane %v4763, %v4767
    %v4771 = vsel %vm4603, %v4760, 0
    %4773 = vmatprep.subr.mxu0 0.0
    %4774 = vmatpush1.msra.mxu0 %v4761
    %4775 = vmatprep.subr.mxu0 0.0
    %4776 = vmatpush1.msra.mxu0 %v4762
    %4777 = vmatprep.subr.mxu0 0.0
    %4778 = vmatpush1.msra.mxu0 0.0
    %4779 = vmatprep.subr.mxu0 0.0
    %4780 = vmatpush1.msra.mxu0 0.0
    %4781 = vmatprep.subr.mxu0 0.0
    %4782 = vmatpush1.msra.mxu0 0.0
    %4783 = vmatprep.subr.mxu0 0.0
    %4784 = vmatpush1.msra.mxu0 0.0
    %4785 = vmatprep.subr.mxu0 0.0
    %4786 = vmatpush1.msra.mxu0 0.0
    %4787 = vmatprep.subr.mxu0 0.0
    %4788 = vmatpush1.msra.mxu0 0.0
    %4789 = vmatprep.subr.mxu0 0.0
    %4790 = vmatpush1.msra.mxu0 0.0
    %4791 = vmatprep.subr.mxu0 0.0
    %4792 = vmatpush1.msra.mxu0 0.0
    %4793 = vmatprep.subr.mxu0 0.0
    %4794 = vmatpush1.msra.mxu0 0.0
    %4795 = vmatprep.subr.mxu0 0.0
    %4796 = vmatpush1.msra.mxu0 0.0
    %4797 = vmatprep.subr.mxu0 0.0
    %4798 = vmatpush1.msra.mxu0 0.0
    %4799 = vmatprep.subr.mxu0 0.0
    %4800 = vmatpush1.msra.mxu0 0.0
    %4801 = vmatprep.subr.mxu0 0.0
    %4802 = vmatpush1.msra.mxu0 0.0
    %4803 = vmatprep.subr.mxu0 0.0
    %4804 = vmatpush1.msra.mxu0 0.0
    %4805 = vmatprep.subr.mxu0 0.0
    %4806 = vmatpush1.msra.mxu0 0.0
    %4807 = vmatprep.subr.mxu0 0.0
    %4808 = vmatpush1.msra.mxu0 0.0
    %4809 = vmatprep.subr.mxu0 0.0
    %4810 = vmatpush1.msra.mxu0 0.0
    %4811 = vmatprep.subr.mxu0 0.0
    %4812 = vmatpush1.msra.mxu0 0.0
    %4813 = vmatprep.subr.mxu0 0.0
    %4814 = vmatpush1.msra.mxu0 0.0
    %4815 = vmatprep.subr.mxu0 0.0
    %4816 = vmatpush1.msra.mxu0 0.0
    %4817 = vmatprep.subr.mxu0 0.0
    %4818 = vmatpush1.msra.mxu0 0.0
    %4819 = vmatprep.subr.mxu0 0.0
    %4820 = vmatpush1.msra.mxu0 0.0
    %4821 = vmatprep.subr.mxu0 0.0
    %4822 = vmatpush1.msra.mxu0 0.0
    %4823 = vmatprep.subr.mxu0 0.0
    %4824 = vmatpush1.msra.mxu0 0.0
    %4825 = vmatprep.subr.mxu0 0.0
    %4826 = vmatpush1.msra.mxu0 0.0
    %4827 = vmatprep.subr.mxu0 0.0
    %4828 = vmatpush1.msra.mxu0 0.0
    %4829 = vmatprep.subr.mxu0 0.0
    %4830 = vmatpush1.msra.mxu0 0.0
    %4831 = vmatprep.subr.mxu0 0.0
    %4832 = vmatpush1.msra.mxu0 0.0
    %4833 = vmatprep.subr.mxu0 0.0
    %4834 = vmatpush1.msra.mxu0 0.0
    %4835 = vmatprep.subr.mxu0 0.0
    %4836 = vmatpush1.msra.mxu0 0.0
    %4837 = vmatprep.mubr.f32.mxu0 0.0
    %4838 = vmatmul.mubr.f32.gmra.mrb[0].mxu0 %v4771
    %v4839 = vpop.f32.mrb[0].mxu0
    %v4840 = vadd.f32 %v4768, %v4839
    %v4841 = vpop.f32.mrb[0].mxu0
    %4842 = vdwg.mxu0
    %v4843 = vmax.f32 %v4840, 0.0
    %v4844 = vld [vmem:[%s77] sm:$0xff]
    %v4845 = vld [vmem:[%s77 + $0x8] sm:$0xff]
    %v4846 = vld [vmem:[#allocation6] sm:$0x1]
    %v4848 = vlaneseq
    %v4849 = vshrl.u32 %v4848, 7
    %v4850 = vsub.s32 0, %v4849
    %v4851 = vrot.slane %v4846, %v4850
    %v4854 = vsel %vm4603, %v4843, 0
    %4856 = vmatprep.subr.mxu0 0.0
    %4857 = vmatpush1.msra.mxu0 %v4844
    %4858 = vmatprep.subr.mxu0 0.0
    %4859 = vmatpush1.msra.mxu0 %v4845
    %4860 = vmatprep.subr.mxu0 0.0
    %4861 = vmatpush1.msra.mxu0 0.0
    %4862 = vmatprep.subr.mxu0 0.0
    %4863 = vmatpush1.msra.mxu0 0.0
    %4864 = vmatprep.subr.mxu0 0.0
    %4865 = vmatpush1.msra.mxu0 0.0
    %4866 = vmatprep.subr.mxu0 0.0
    %4867 = vmatpush1.msra.mxu0 0.0
    %4868 = vmatprep.subr.mxu0 0.0
    %4869 = vmatpush1.msra.mxu0 0.0
    %4870 = vmatprep.subr.mxu0 0.0
    %4871 = vmatpush1.msra.mxu0 0.0
    %4872 = vmatprep.subr.mxu0 0.0
    %4873 = vmatpush1.msra.mxu0 0.0
    %4874 = vmatprep.subr.mxu0 0.0
    %4875 = vmatpush1.msra.mxu0 0.0
    %4876 = vmatprep.subr.mxu0 0.0
    %4877 = vmatpush1.msra.mxu0 0.0
    %4878 = vmatprep.subr.mxu0 0.0
    %4879 = vmatpush1.msra.mxu0 0.0
    %4880 = vmatprep.subr.mxu0 0.0
    %4881 = vmatpush1.msra.mxu0 0.0
    %4882 = vmatprep.subr.mxu0 0.0
    %4883 = vmatpush1.msra.mxu0 0.0
    %4884 = vmatprep.subr.mxu0 0.0
    %4885 = vmatpush1.msra.mxu0 0.0
    %4886 = vmatprep.subr.mxu0 0.0
    %4887 = vmatpush1.msra.mxu0 0.0
    %4888 = vmatprep.subr.mxu0 0.0
    %4889 = vmatpush1.msra.mxu0 0.0
    %4890 = vmatprep.subr.mxu0 0.0
    %4891 = vmatpush1.msra.mxu0 0.0
    %4892 = vmatprep.subr.mxu0 0.0
    %4893 = vmatpush1.msra.mxu0 0.0
    %4894 = vmatprep.subr.mxu0 0.0
    %4895 = vmatpush1.msra.mxu0 0.0
    %4896 = vmatprep.subr.mxu0 0.0
    %4897 = vmatpush1.msra.mxu0 0.0
    %4898 = vmatprep.subr.mxu0 0.0
    %4899 = vmatpush1.msra.mxu0 0.0
    %4900 = vmatprep.subr.mxu0 0.0
    %4901 = vmatpush1.msra.mxu0 0.0
    %4902 = vmatprep.subr.mxu0 0.0
    %4903 = vmatpush1.msra.mxu0 0.0
    %4904 = vmatprep.subr.mxu0 0.0
    %4905 = vmatpush1.msra.mxu0 0.0
    %4906 = vmatprep.subr.mxu0 0.0
    %4907 = vmatpush1.msra.mxu0 0.0
    %4908 = vmatprep.subr.mxu0 0.0
    %4909 = vmatpush1.msra.mxu0 0.0
    %4910 = vmatprep.subr.mxu0 0.0
    %4911 = vmatpush1.msra.mxu0 0.0
    %4912 = vmatprep.subr.mxu0 0.0
    %4913 = vmatpush1.msra.mxu0 0.0
    %4914 = vmatprep.subr.mxu0 0.0
    %4915 = vmatpush1.msra.mxu0 0.0
    %4916 = vmatprep.subr.mxu0 0.0
    %4917 = vmatpush1.msra.mxu0 0.0
    %4918 = vmatprep.subr.mxu0 0.0
    %4919 = vmatpush1.msra.mxu0 0.0
    %4920 = vmatprep.mubr.f32.mxu0 0.0
    %4921 = vmatmul.mubr.f32.gmra.mrb[0].mxu0 %v4854
    %v4922 = vpop.f32.mrb[0].mxu0
    %v4923 = vadd.f32 %v4851, %v4922
    %v4924 = vpop.f32.mrb[0].mxu0
    %4925 = vdwg.mxu0
    %v4926 = vsel %vm1071, %v4923, -inf
    %4927 = vmax.xlane.f32.xlu0 %v4926
    %v4928 = vpop.xlane.xlu0 %4927
    %v4929 = vsub.f32 %v4923, %v4928
    %v4930 = vmul.f32 %v4929, 1.442695
    %v4931 = vpow.pop %v4930
    %v4932 = vsel %vm1071, %v4931, 0.0
    %4933 = vadd.xlane.f32.xlu0 %v4932
    %v4934 = vpop.xlane.xlu0 %4933
    %v4935 = vlog2.pop %v4934
    %v4936 = vmul.f32 %v4935, 0.6931472
    %v4937 = vsub.f32 %v4929, %v4936
    %v4938 = vld [vmem:[%s57] sm:$0xff]
    %v4939 = vld [vmem:[%s57 + $0x8] sm:$0xff]
    %v4940 = vld [vmem:[%s57 + $0x10] sm:$0xff]
    %v4941 = vld [vmem:[%s57 + $0x18] sm:$0xff]
    %v4942 = vld [vmem:[%s59] sm:$0x1]
    %v4944 = vlaneseq
    %v4945 = vshrl.u32 %v4944, 7
    %v4946 = vsub.s32 0, %v4945
    %v4947 = vrot.slane %v4942, %v4946
    %4949 = vmatprep.subr.mxu0 0.0
    %4950 = vmatpush1.msra.mxu0 %v4938
    %4951 = vmatprep.subr.mxu0 0.0
    %4952 = vmatpush1.msra.mxu0 %v4939
    %4953 = vmatprep.subr.mxu0 0.0
    %4954 = vmatpush1.msra.mxu0 %v4940
    %4955 = vmatprep.subr.mxu0 0.0
    %4956 = vmatpush1.msra.mxu0 %v4941
    %4957 = vmatprep.subr.mxu0 0.0
    %4958 = vmatpush1.msra.mxu0 0.0
    %4959 = vmatprep.subr.mxu0 0.0
    %4960 = vmatpush1.msra.mxu0 0.0
    %4961 = vmatprep.subr.mxu0 0.0
    %4962 = vmatpush1.msra.mxu0 0.0
    %4963 = vmatprep.subr.mxu0 0.0
    %4964 = vmatpush1.msra.mxu0 0.0
    %4965 = vmatprep.subr.mxu0 0.0
    %4966 = vmatpush1.msra.mxu0 0.0
    %4967 = vmatprep.subr.mxu0 0.0
    %4968 = vmatpush1.msra.mxu0 0.0
    %4969 = vmatprep.subr.mxu0 0.0
    %4970 = vmatpush1.msra.mxu0 0.0
    %4971 = vmatprep.subr.mxu0 0.0
    %4972 = vmatpush1.msra.mxu0 0.0
    %4973 = vmatprep.subr.mxu0 0.0
    %4974 = vmatpush1.msra.mxu0 0.0
    %4975 = vmatprep.subr.mxu0 0.0
    %4976 = vmatpush1.msra.mxu0 0.0
    %4977 = vmatprep.subr.mxu0 0.0
    %4978 = vmatpush1.msra.mxu0 0.0
    %4979 = vmatprep.subr.mxu0 0.0
    %4980 = vmatpush1.msra.mxu0 0.0
    %4981 = vmatprep.subr.mxu0 0.0
    %4982 = vmatpush1.msra.mxu0 0.0
    %4983 = vmatprep.subr.mxu0 0.0
    %4984 = vmatpush1.msra.mxu0 0.0
    %4985 = vmatprep.subr.mxu0 0.0
    %4986 = vmatpush1.msra.mxu0 0.0
    %4987 = vmatprep.subr.mxu0 0.0
    %4988 = vmatpush1.msra.mxu0 0.0
    %4989 = vmatprep.subr.mxu0 0.0
    %4990 = vmatpush1.msra.mxu0 0.0
    %4991 = vmatprep.subr.mxu0 0.0
    %4992 = vmatpush1.msra.mxu0 0.0
    %4993 = vmatprep.subr.mxu0 0.0
    %4994 = vmatpush1.msra.mxu0 0.0
    %4995 = vmatprep.subr.mxu0 0.0
    %4996 = vmatpush1.msra.mxu0 0.0
    %4997 = vmatprep.subr.mxu0 0.0
    %4998 = vmatpush1.msra.mxu0 0.0
    %4999 = vmatprep.subr.mxu0 0.0
    %5000 = vmatpush1.msra.mxu0 0.0
    %5001 = vmatprep.subr.mxu0 0.0
    %5002 = vmatpush1.msra.mxu0 0.0
    %5003 = vmatprep.subr.mxu0 0.0
    %5004 = vmatpush1.msra.mxu0 0.0
    %5005 = vmatprep.subr.mxu0 0.0
    %5006 = vmatpush1.msra.mxu0 0.0
    %5007 = vmatprep.subr.mxu0 0.0
    %5008 = vmatpush1.msra.mxu0 0.0
    %5009 = vmatprep.subr.mxu0 0.0
    %5010 = vmatpush1.msra.mxu0 0.0
    %5011 = vmatprep.subr.mxu0 0.0
    %5012 = vmatpush1.msra.mxu0 0.0
    %5013 = vmatprep.mubr.f32.mxu0 0.0
    %5014 = vmatmul.mubr.f32.gmra.mrb[0].mxu0 %v4353
    %v5015 = vpop.f32.mrb[0].mxu0
    %v5016 = vadd.f32 %v4947, %v5015
    %v5017 = vpop.f32.mrb[0].mxu0
    %5018 = vdwg.mxu0
    %v5021 = vunpack.c.l.s4 1983009808
    %v5022 = vunpack.c.0.s8 %v5021
    %v5023 = vlaneseq
    %v5024 = vshrl.u32 %v5023, 7
    %v5025 = vsub.s32 %v5022, %v5024
    %v5026 = vrot.slane %v5016, %v5025
    %v5027 = vcombine.high %v5026, %v5026
    %v5030 = vrot.slane %v5026, 7
    %v5031 = vrot.slane %v5030, 2
    %v5032 = vrot.slane %v5027, 7
    %v5033 = vrot.slane %v5032, 2
    %v5036 = vadd.f32 %v5026, %v5031
    %v5037 = vadd.f32 %v5027, %v5033
    %v5038 = vmul.f32 %v5036, 0.5
    %v5039 = vmul.f32 %v5037, 0.5
    %v5040 = vmax.f32 %v5038, 0.0
    %v5041 = vmax.f32 %v5039, 0.0
    %v5044 = vlaneseq
    %v5045 = vshrl.u32 %v5044, 7
    %v5046 = vsub.s32 0, %v5045
    %v5047 = vrot.slane %v5040, %v5046
    %v5048 = vlaneseq
    %v5049 = vshrl.u32 %v5048, 7
    %v5050 = vsub.s32 0, %v5049
    %v5051 = vrot.slane %v5041, %v5050
    %v5052 = vsel %vm3109, %v5051, %v5047
    %5053 = vrot.lane.b32.xlu0 %v5052, 32
    %v5054 = vpop.permute.xlu0 %5053
    %5056 = vrot.lane.b32.xlu0 %v4843, 64
    %v5057 = vpop.permute.xlu0 %5056
    %v5059 = vsel %vm402, %v986, %v5054
    %v5060 = vsel %vm316, %v5059, %v5057
    %v5061 = vld [vmem:[%s81] sm:$0xff]
    %v5062 = vld [vmem:[%s81 + $0x8] sm:$0xff]
    %v5063 = vld [vmem:[%s81 + $0x10] sm:$0xff]
    %v5064 = vld [vmem:[%s81 + $0x18] sm:$0xff]
    %v5065 = vld [vmem:[%s81 + $0x20] sm:$0xff]
    %v5066 = vld [vmem:[%s81 + $0x28] sm:$0xff]
    %v5067 = vld [vmem:[%s81 + $0x30] sm:$0xff]
    %v5068 = vld [vmem:[%s81 + $0x38] sm:$0xff]
    %v5069 = vld [vmem:[%s81 + $0x40] sm:$0xff]
    %v5070 = vld [vmem:[%s81 + $0x48] sm:$0xff]
    %v5071 = vld [vmem:[#allocation7] sm:$0x1]
    %v5073 = vlaneseq
    %v5074 = vshrl.u32 %v5073, 7
    %v5075 = vsub.s32 0, %v5074
    %v5076 = vrot.slane %v5071, %v5075
    %vm5078 = vcmask 654336
    %v5080 = vsel %vm5078, %v5060, 0
    %5082 = vmatprep.subr.mxu0 0.0
    %5083 = vmatpush1.msra.mxu0 %v5061
    %5084 = vmatprep.subr.mxu0 0.0
    %5085 = vmatpush1.msra.mxu0 %v5062
    %5086 = vmatprep.subr.mxu0 0.0
    %5087 = vmatpush1.msra.mxu0 %v5063
    %5088 = vmatprep.subr.mxu0 0.0
    %5089 = vmatpush1.msra.mxu0 %v5064
    %5090 = vmatprep.subr.mxu0 0.0
    %5091 = vmatpush1.msra.mxu0 %v5065
    %5092 = vmatprep.subr.mxu0 0.0
    %5093 = vmatpush1.msra.mxu0 %v5066
    %5094 = vmatprep.subr.mxu0 0.0
    %5095 = vmatpush1.msra.mxu0 %v5067
    %5096 = vmatprep.subr.mxu0 0.0
    %5097 = vmatpush1.msra.mxu0 %v5068
    %5098 = vmatprep.subr.mxu0 0.0
    %5099 = vmatpush1.msra.mxu0 %v5069
    %5100 = vmatprep.subr.mxu0 0.0
    %5101 = vmatpush1.msra.mxu0 %v5070
    %5102 = vmatprep.subr.mxu0 0.0
    %5103 = vmatpush1.msra.mxu0 0.0
    %5104 = vmatprep.subr.mxu0 0.0
    %5105 = vmatpush1.msra.mxu0 0.0
    %5106 = vmatprep.subr.mxu0 0.0
    %5107 = vmatpush1.msra.mxu0 0.0
    %5108 = vmatprep.subr.mxu0 0.0
    %5109 = vmatpush1.msra.mxu0 0.0
    %5110 = vmatprep.subr.mxu0 0.0
    %5111 = vmatpush1.msra.mxu0 0.0
    %5112 = vmatprep.subr.mxu0 0.0
    %5113 = vmatpush1.msra.mxu0 0.0
    %5114 = vmatprep.subr.mxu0 0.0
    %5115 = vmatpush1.msra.mxu0 0.0
    %5116 = vmatprep.subr.mxu0 0.0
    %5117 = vmatpush1.msra.mxu0 0.0
    %5118 = vmatprep.subr.mxu0 0.0
    %5119 = vmatpush1.msra.mxu0 0.0
    %5120 = vmatprep.subr.mxu0 0.0
    %5121 = vmatpush1.msra.mxu0 0.0
    %5122 = vmatprep.subr.mxu0 0.0
    %5123 = vmatpush1.msra.mxu0 0.0
    %5124 = vmatprep.subr.mxu0 0.0
    %5125 = vmatpush1.msra.mxu0 0.0
    %5126 = vmatprep.subr.mxu0 0.0
    %5127 = vmatpush1.msra.mxu0 0.0
    %5128 = vmatprep.subr.mxu0 0.0
    %5129 = vmatpush1.msra.mxu0 0.0
    %5130 = vmatprep.subr.mxu0 0.0
    %5131 = vmatpush1.msra.mxu0 0.0
    %5132 = vmatprep.subr.mxu0 0.0
    %5133 = vmatpush1.msra.mxu0 0.0
    %5134 = vmatprep.subr.mxu0 0.0
    %5135 = vmatpush1.msra.mxu0 0.0
    %5136 = vmatprep.subr.mxu0 0.0
    %5137 = vmatpush1.msra.mxu0 0.0
    %5138 = vmatprep.subr.mxu0 0.0
    %5139 = vmatpush1.msra.mxu0 0.0
    %5140 = vmatprep.subr.mxu0 0.0
    %5141 = vmatpush1.msra.mxu0 0.0
    %5142 = vmatprep.subr.mxu0 0.0
    %5143 = vmatpush1.msra.mxu0 0.0
    %5144 = vmatprep.subr.mxu0 0.0
    %5145 = vmatpush1.msra.mxu0 0.0
    %5146 = vmatprep.mubr.f32.mxu0 0.0
    %5147 = vmatmul.mubr.f32.gmra.mrb[0].mxu0 %v5080
    %v5148 = vpop.f32.mrb[0].mxu0
    %v5149 = vadd.f32 %v5076, %v5148
    %v5150 = vpop.f32.mrb[0].mxu0
    %5151 = vdwg.mxu0
    %v5152 = vmax.f32 %v5149, 0.0
    %v5153 = vld [vmem:[%s85] sm:$0xff]
    %v5154 = vld [vmem:[%s85 + $0x8] sm:$0xff]
    %v5155 = vld [vmem:[#allocation9] sm:$0x1]
    %v5157 = vlaneseq
    %v5158 = vshrl.u32 %v5157, 7
    %v5159 = vsub.s32 0, %v5158
    %v5160 = vrot.slane %v5155, %v5159
    %v5163 = vsel %vm4603, %v5152, 0
    %5165 = vmatprep.subr.mxu0 0.0
    %5166 = vmatpush1.msra.mxu0 %v5153
    %5167 = vmatprep.subr.mxu0 0.0
    %5168 = vmatpush1.msra.mxu0 %v5154
    %5169 = vmatprep.subr.mxu0 0.0
    %5170 = vmatpush1.msra.mxu0 0.0
    %5171 = vmatprep.subr.mxu0 0.0
    %5172 = vmatpush1.msra.mxu0 0.0
    %5173 = vmatprep.subr.mxu0 0.0
    %5174 = vmatpush1.msra.mxu0 0.0
    %5175 = vmatprep.subr.mxu0 0.0
    %5176 = vmatpush1.msra.mxu0 0.0
    %5177 = vmatprep.subr.mxu0 0.0
    %5178 = vmatpush1.msra.mxu0 0.0
    %5179 = vmatprep.subr.mxu0 0.0
    %5180 = vmatpush1.msra.mxu0 0.0
    %5181 = vmatprep.subr.mxu0 0.0
    %5182 = vmatpush1.msra.mxu0 0.0
    %5183 = vmatprep.subr.mxu0 0.0
    %5184 = vmatpush1.msra.mxu0 0.0
    %5185 = vmatprep.subr.mxu0 0.0
    %5186 = vmatpush1.msra.mxu0 0.0
    %5187 = vmatprep.subr.mxu0 0.0
    %5188 = vmatpush1.msra.mxu0 0.0
    %5189 = vmatprep.subr.mxu0 0.0
    %5190 = vmatpush1.msra.mxu0 0.0
    %5191 = vmatprep.subr.mxu0 0.0
    %5192 = vmatpush1.msra.mxu0 0.0
    %5193 = vmatprep.subr.mxu0 0.0
    %5194 = vmatpush1.msra.mxu0 0.0
    %5195 = vmatprep.subr.mxu0 0.0
    %5196 = vmatpush1.msra.mxu0 0.0
    %5197 = vmatprep.subr.mxu0 0.0
    %5198 = vmatpush1.msra.mxu0 0.0
    %5199 = vmatprep.subr.mxu0 0.0
    %5200 = vmatpush1.msra.mxu0 0.0
    %5201 = vmatprep.subr.mxu0 0.0
    %5202 = vmatpush1.msra.mxu0 0.0
    %5203 = vmatprep.subr.mxu0 0.0
    %5204 = vmatpush1.msra.mxu0 0.0
    %5205 = vmatprep.subr.mxu0 0.0
    %5206 = vmatpush1.msra.mxu0 0.0
    %5207 = vmatprep.subr.mxu0 0.0
    %5208 = vmatpush1.msra.mxu0 0.0
    %5209 = vmatprep.subr.mxu0 0.0
    %5210 = vmatpush1.msra.mxu0 0.0
    %5211 = vmatprep.subr.mxu0 0.0
    %5212 = vmatpush1.msra.mxu0 0.0
    %5213 = vmatprep.subr.mxu0 0.0
    %5214 = vmatpush1.msra.mxu0 0.0
    %5215 = vmatprep.subr.mxu0 0.0
    %5216 = vmatpush1.msra.mxu0 0.0
    %5217 = vmatprep.subr.mxu0 0.0
    %5218 = vmatpush1.msra.mxu0 0.0
    %5219 = vmatprep.subr.mxu0 0.0
    %5220 = vmatpush1.msra.mxu0 0.0
    %5221 = vmatprep.subr.mxu0 0.0
    %5222 = vmatpush1.msra.mxu0 0.0
    %5223 = vmatprep.subr.mxu0 0.0
    %5224 = vmatpush1.msra.mxu0 0.0
    %5225 = vmatprep.subr.mxu0 0.0
    %5226 = vmatpush1.msra.mxu0 0.0
    %5227 = vmatprep.subr.mxu0 0.0
    %5228 = vmatpush1.msra.mxu0 0.0
    %5229 = vmatprep.mubr.f32.mxu0 0.0
    %5230 = vmatmul.mubr.f32.gmra.mrb[0].mxu0 %v5163
    %v5231 = vpop.f32.mrb[0].mxu0
    %v5232 = vadd.f32 %v5160, %v5231
    %v5233 = vpop.f32.mrb[0].mxu0
    %5234 = vdwg.mxu0
    %v5235 = vmax.f32 %v5232, 0.0
    %v5236 = vld [vmem:[%s89] sm:$0xff]
    %v5237 = vld [vmem:[%s89 + $0x8] sm:$0xff]
    %v5238 = vld [vmem:[#allocation10] sm:$0x1]
    %v5240 = vlaneseq
    %v5241 = vshrl.u32 %v5240, 7
    %v5242 = vsub.s32 0, %v5241
    %v5243 = vrot.slane %v5238, %v5242
    %v5246 = vsel %vm4603, %v5235, 0
    %5248 = vmatprep.subr.mxu0 0.0
    %5249 = vmatpush1.msra.mxu0 %v5236
    %5250 = vmatprep.subr.mxu0 0.0
    %5251 = vmatpush1.msra.mxu0 %v5237
    %5252 = vmatprep.subr.mxu0 0.0
    %5253 = vmatpush1.msra.mxu0 0.0
    %5254 = vmatprep.subr.mxu0 0.0
    %5255 = vmatpush1.msra.mxu0 0.0
    %5256 = vmatprep.subr.mxu0 0.0
    %5257 = vmatpush1.msra.mxu0 0.0
    %5258 = vmatprep.subr.mxu0 0.0
    %5259 = vmatpush1.msra.mxu0 0.0
    %5260 = vmatprep.subr.mxu0 0.0
    %5261 = vmatpush1.msra.mxu0 0.0
    %5262 = vmatprep.subr.mxu0 0.0
    %5263 = vmatpush1.msra.mxu0 0.0
    %5264 = vmatprep.subr.mxu0 0.0
    %5265 = vmatpush1.msra.mxu0 0.0
    %5266 = vmatprep.subr.mxu0 0.0
    %5267 = vmatpush1.msra.mxu0 0.0
    %5268 = vmatprep.subr.mxu0 0.0
    %5269 = vmatpush1.msra.mxu0 0.0
    %5270 = vmatprep.subr.mxu0 0.0
    %5271 = vmatpush1.msra.mxu0 0.0
    %5272 = vmatprep.subr.mxu0 0.0
    %5273 = vmatpush1.msra.mxu0 0.0
    %5274 = vmatprep.subr.mxu0 0.0
    %5275 = vmatpush1.msra.mxu0 0.0
    %5276 = vmatprep.subr.mxu0 0.0
    %5277 = vmatpush1.msra.mxu0 0.0
    %5278 = vmatprep.subr.mxu0 0.0
    %5279 = vmatpush1.msra.mxu0 0.0
    %5280 = vmatprep.subr.mxu0 0.0
    %5281 = vmatpush1.msra.mxu0 0.0
    %5282 = vmatprep.subr.mxu0 0.0
    %5283 = vmatpush1.msra.mxu0 0.0
    %5284 = vmatprep.subr.mxu0 0.0
    %5285 = vmatpush1.msra.mxu0 0.0
    %5286 = vmatprep.subr.mxu0 0.0
    %5287 = vmatpush1.msra.mxu0 0.0
    %5288 = vmatprep.subr.mxu0 0.0
    %5289 = vmatpush1.msra.mxu0 0.0
    %5290 = vmatprep.subr.mxu0 0.0
    %5291 = vmatpush1.msra.mxu0 0.0
    %5292 = vmatprep.subr.mxu0 0.0
    %5293 = vmatpush1.msra.mxu0 0.0
    %5294 = vmatprep.subr.mxu0 0.0
    %5295 = vmatpush1.msra.mxu0 0.0
    %5296 = vmatprep.subr.mxu0 0.0
    %5297 = vmatpush1.msra.mxu0 0.0
    %5298 = vmatprep.subr.mxu0 0.0
    %5299 = vmatpush1.msra.mxu0 0.0
    %5300 = vmatprep.subr.mxu0 0.0
    %5301 = vmatpush1.msra.mxu0 0.0
    %5302 = vmatprep.subr.mxu0 0.0
    %5303 = vmatpush1.msra.mxu0 0.0
    %5304 = vmatprep.subr.mxu0 0.0
    %5305 = vmatpush1.msra.mxu0 0.0
    %5306 = vmatprep.subr.mxu0 0.0
    %5307 = vmatpush1.msra.mxu0 0.0
    %5308 = vmatprep.subr.mxu0 0.0
    %5309 = vmatpush1.msra.mxu0 0.0
    %5310 = vmatprep.subr.mxu0 0.0
    %5311 = vmatpush1.msra.mxu0 0.0
    %5312 = vmatprep.mubr.f32.mxu0 0.0
    %5313 = vmatmul.mubr.f32.gmra.mrb[0].mxu0 %v5246
    %v5314 = vpop.f32.mrb[0].mxu0
    %v5315 = vadd.f32 %v5243, %v5314
    %v5316 = vpop.f32.mrb[0].mxu0
    %5317 = vdwg.mxu0
    %v5318 = vmax.f32 %v5315, 0.0
    %v5319 = vld [vmem:[%s93] sm:$0xff]
    %v5320 = vld [vmem:[%s93 + $0x8] sm:$0xff]
    %v5321 = vld [vmem:[#allocation12] sm:$0x1]
    %v5323 = vlaneseq
    %v5324 = vshrl.u32 %v5323, 7
    %v5325 = vsub.s32 0, %v5324
    %v5326 = vrot.slane %v5321, %v5325
    %v5329 = vsel %vm4603, %v5318, 0
    %5331 = vmatprep.subr.mxu0 0.0
    %5332 = vmatpush1.msra.mxu0 %v5319
    %5333 = vmatprep.subr.mxu0 0.0
    %5334 = vmatpush1.msra.mxu0 %v5320
    %5335 = vmatprep.subr.mxu0 0.0
    %5336 = vmatpush1.msra.mxu0 0.0
    %5337 = vmatprep.subr.mxu0 0.0
    %5338 = vmatpush1.msra.mxu0 0.0
    %5339 = vmatprep.subr.mxu0 0.0
    %5340 = vmatpush1.msra.mxu0 0.0
    %5341 = vmatprep.subr.mxu0 0.0
    %5342 = vmatpush1.msra.mxu0 0.0
    %5343 = vmatprep.subr.mxu0 0.0
    %5344 = vmatpush1.msra.mxu0 0.0
    %5345 = vmatprep.subr.mxu0 0.0
    %5346 = vmatpush1.msra.mxu0 0.0
    %5347 = vmatprep.subr.mxu0 0.0
    %5348 = vmatpush1.msra.mxu0 0.0
    %5349 = vmatprep.subr.mxu0 0.0
    %5350 = vmatpush1.msra.mxu0 0.0
    %5351 = vmatprep.subr.mxu0 0.0
    %5352 = vmatpush1.msra.mxu0 0.0
    %5353 = vmatprep.subr.mxu0 0.0
    %5354 = vmatpush1.msra.mxu0 0.0
    %5355 = vmatprep.subr.mxu0 0.0
    %5356 = vmatpush1.msra.mxu0 0.0
    %5357 = vmatprep.subr.mxu0 0.0
    %5358 = vmatpush1.msra.mxu0 0.0
    %5359 = vmatprep.subr.mxu0 0.0
    %5360 = vmatpush1.msra.mxu0 0.0
    %5361 = vmatprep.subr.mxu0 0.0
    %5362 = vmatpush1.msra.mxu0 0.0
    %5363 = vmatprep.subr.mxu0 0.0
    %5364 = vmatpush1.msra.mxu0 0.0
    %5365 = vmatprep.subr.mxu0 0.0
    %5366 = vmatpush1.msra.mxu0 0.0
    %5367 = vmatprep.subr.mxu0 0.0
    %5368 = vmatpush1.msra.mxu0 0.0
    %5369 = vmatprep.subr.mxu0 0.0
    %5370 = vmatpush1.msra.mxu0 0.0
    %5371 = vmatprep.subr.mxu0 0.0
    %5372 = vmatpush1.msra.mxu0 0.0
    %5373 = vmatprep.subr.mxu0 0.0
    %5374 = vmatpush1.msra.mxu0 0.0
    %5375 = vmatprep.subr.mxu0 0.0
    %5376 = vmatpush1.msra.mxu0 0.0
    %5377 = vmatprep.subr.mxu0 0.0
    %5378 = vmatpush1.msra.mxu0 0.0
    %5379 = vmatprep.subr.mxu0 0.0
    %5380 = vmatpush1.msra.mxu0 0.0
    %5381 = vmatprep.subr.mxu0 0.0
    %5382 = vmatpush1.msra.mxu0 0.0
    %5383 = vmatprep.subr.mxu0 0.0
    %5384 = vmatpush1.msra.mxu0 0.0
    %5385 = vmatprep.subr.mxu0 0.0
    %5386 = vmatpush1.msra.mxu0 0.0
    %5387 = vmatprep.subr.mxu0 0.0
    %5388 = vmatpush1.msra.mxu0 0.0
    %5389 = vmatprep.subr.mxu0 0.0
    %5390 = vmatpush1.msra.mxu0 0.0
    %5391 = vmatprep.subr.mxu0 0.0
    %5392 = vmatpush1.msra.mxu0 0.0
    %5393 = vmatprep.subr.mxu0 0.0
    %5394 = vmatpush1.msra.mxu0 0.0
    %5395 = vmatprep.mubr.f32.mxu0 0.0
    %5396 = vmatmul.mubr.f32.gmra.mrb[0].mxu0 %v5329
    %v5397 = vpop.f32.mrb[0].mxu0
    %v5398 = vadd.f32 %v5326, %v5397
    %v5399 = vpop.f32.mrb[0].mxu0
    %5400 = vdwg.mxu0
    %v5401 = vmax.f32 %v5398, 0.0
    %v5402 = vld [vmem:[%s97] sm:$0xff]
    %v5403 = vld [vmem:[%s97 + $0x8] sm:$0xff]
    %v5404 = vld [vmem:[#allocation13] sm:$0x1]
    %v5406 = vlaneseq
    %v5407 = vshrl.u32 %v5406, 7
    %v5408 = vsub.s32 0, %v5407
    %v5409 = vrot.slane %v5404, %v5408
    %v5412 = vsel %vm4603, %v5401, 0
    %5414 = vmatprep.subr.mxu0 0.0
    %5415 = vmatpush1.msra.mxu0 %v5402
    %5416 = vmatprep.subr.mxu0 0.0
    %5417 = vmatpush1.msra.mxu0 %v5403
    %5418 = vmatprep.subr.mxu0 0.0
    %5419 = vmatpush1.msra.mxu0 0.0
    %5420 = vmatprep.subr.mxu0 0.0
    %5421 = vmatpush1.msra.mxu0 0.0
    %5422 = vmatprep.subr.mxu0 0.0
    %5423 = vmatpush1.msra.mxu0 0.0
    %5424 = vmatprep.subr.mxu0 0.0
    %5425 = vmatpush1.msra.mxu0 0.0
    %5426 = vmatprep.subr.mxu0 0.0
    %5427 = vmatpush1.msra.mxu0 0.0
    %5428 = vmatprep.subr.mxu0 0.0
    %5429 = vmatpush1.msra.mxu0 0.0
    %5430 = vmatprep.subr.mxu0 0.0
    %5431 = vmatpush1.msra.mxu0 0.0
    %5432 = vmatprep.subr.mxu0 0.0
    %5433 = vmatpush1.msra.mxu0 0.0
    %5434 = vmatprep.subr.mxu0 0.0
    %5435 = vmatpush1.msra.mxu0 0.0
    %5436 = vmatprep.subr.mxu0 0.0
    %5437 = vmatpush1.msra.mxu0 0.0
    %5438 = vmatprep.subr.mxu0 0.0
    %5439 = vmatpush1.msra.mxu0 0.0
    %5440 = vmatprep.subr.mxu0 0.0
    %5441 = vmatpush1.msra.mxu0 0.0
    %5442 = vmatprep.subr.mxu0 0.0
    %5443 = vmatpush1.msra.mxu0 0.0
    %5444 = vmatprep.subr.mxu0 0.0
    %5445 = vmatpush1.msra.mxu0 0.0
    %5446 = vmatprep.subr.mxu0 0.0
    %5447 = vmatpush1.msra.mxu0 0.0
    %5448 = vmatprep.subr.mxu0 0.0
    %5449 = vmatpush1.msra.mxu0 0.0
    %5450 = vmatprep.subr.mxu0 0.0
    %5451 = vmatpush1.msra.mxu0 0.0
    %5452 = vmatprep.subr.mxu0 0.0
    %5453 = vmatpush1.msra.mxu0 0.0
    %5454 = vmatprep.subr.mxu0 0.0
    %5455 = vmatpush1.msra.mxu0 0.0
    %5456 = vmatprep.subr.mxu0 0.0
    %5457 = vmatpush1.msra.mxu0 0.0
    %5458 = vmatprep.subr.mxu0 0.0
    %5459 = vmatpush1.msra.mxu0 0.0
    %5460 = vmatprep.subr.mxu0 0.0
    %5461 = vmatpush1.msra.mxu0 0.0
    %5462 = vmatprep.subr.mxu0 0.0
    %5463 = vmatpush1.msra.mxu0 0.0
    %5464 = vmatprep.subr.mxu0 0.0
    %5465 = vmatpush1.msra.mxu0 0.0
    %5466 = vmatprep.subr.mxu0 0.0
    %5467 = vmatpush1.msra.mxu0 0.0
    %5468 = vmatprep.subr.mxu0 0.0
    %5469 = vmatpush1.msra.mxu0 0.0
    %5470 = vmatprep.subr.mxu0 0.0
    %5471 = vmatpush1.msra.mxu0 0.0
    %5472 = vmatprep.subr.mxu0 0.0
    %5473 = vmatpush1.msra.mxu0 0.0
    %5474 = vmatprep.subr.mxu0 0.0
    %5475 = vmatpush1.msra.mxu0 0.0
    %5476 = vmatprep.subr.mxu0 0.0
    %5477 = vmatpush1.msra.mxu0 0.0
    %5478 = vmatprep.mubr.f32.mxu0 0.0
    %5479 = vmatmul.mubr.f32.gmra.mrb[0].mxu0 %v5412
    %v5480 = vpop.f32.mrb[0].mxu0
    %v5481 = vadd.f32 %v5409, %v5480
    %v5482 = vpop.f32.mrb[0].mxu0
    %5483 = vdwg.mxu0
    %v5484 = vsel %vm1071, %v5481, -inf
    %5485 = vmax.xlane.f32.xlu0 %v5484
    %v5486 = vpop.xlane.xlu0 %5485
    %v5487 = vsub.f32 %v5481, %v5486
    %v5488 = vmul.f32 %v5487, 1.442695
    %v5489 = vpow.pop %v5488
    %v5490 = vsel %vm1071, %v5489, 0.0
    %5491 = vadd.xlane.f32.xlu0 %v5490
    %v5492 = vpop.xlane.xlu0 %5491
    %v5493 = vlog2.pop %v5492
    %v5494 = vmul.f32 %v5493, 0.6931472
    %v5495 = vsub.f32 %v5487, %v5494
    %v5498 = vlaneseq
    %v5499 = vshrl.u32 %v5498, 7
    %v5500 = vsub.s32 0, %v5499
    %v5501 = vrot.slane %v4506, %v5500
    %v5502 = vlaneseq
    %v5503 = vshrl.u32 %v5502, 7
    %v5504 = vsub.s32 0, %v5503
    %v5505 = vrot.slane %v4507, %v5504
    %v5506 = vsel %vm3109, %v5505, %v5501
    %vm5508 = vcmask 285696
    %v5509 = vsel %vm5508, %v1083, 0.0
    %v5510 = vsel %vm5508, %v5506, 0.0
    %v5511 = vsel %vm5508, %v4937, 0.0
    %v5512 = vsel %vm5508, %v5495, 0.0
    %v5517 = vcombine.low %v5509, %v5510
    %v5518 = vcombine.low %v5511, %v5512
    %v5520 = vunpack.c.l.s4 1983009808
    %v5521 = vunpack.c.0.s8 %v5520
    %v5522 = vlaneseq
    %v5523 = vshrl.u32 %v5522, 7
    %v5524 = vsub.s32 %v5521, %v5523
    %v5525 = vrot.slane %v5517, %v5524
    %v5527 = vunpack.c.l.s4 1983009808
    %v5528 = vunpack.c.0.s8 %v5527
    %v5529 = vlaneseq
    %v5530 = vshrl.u32 %v5529, 7
    %v5531 = vsub.s32 %v5528, %v5530
    %v5532 = vrot.slane %v5518, %v5531
    %v5533 = vcombine.low %v5525, %v5532
    %5535 = vst [vmem:[%s101] sm:$0xff] %v5533
    // Predicated region
    $region234: #{model_forward.1} parent=1 // pred_check
      _
    $region235: #{model_forward.1} parent=1 // pred_check_branch
      %5537 = sbr.rel (0) target = $region237
    $region236: #{model_forward.1} parent=1 // pred_region
      _
    $region237: #{model_forward.1} parent=1 // pred_fallthru
      _
    // Predicated region
    $region238: #{model_forward.1} parent=1 // pred_check
      _
    $region239: #{model_forward.1} parent=1 // pred_check_branch
      %5539 = sbr.rel (0) target = $region241
    $region240: #{model_forward.1} parent=1 // pred_region
      _
    $region241: #{model_forward.1} parent=1 // pred_fallthru
      _
    %5540 = vsyncpa [#allocation3], 1
    %5541 = vsyncpa [#allocation5], 1
    %5542 = vsyncpa [#allocation8], 1
    %5543 = vsyncpa [#allocation11], 1
    %5544 = vsyncpa [#allocation14], 1

</llo_original>
